<compile_context>
chip_gen: v5e
topology: v5e:2x2
jax: 0.10.0
libtpu: 0.0.40
codegen_flags: <defaults>
</compile_context>

<pallas_src>
import functools

import jax
import jax.numpy as jnp
from jax.experimental import pallas as pl
from jax.experimental.pallas import tpu as pltpu


# ------------------------------ fused kernel ---------------------------------

def fused_neck_kernel(x_ref, w_ref, shift_ref, fcw_ref, fcb_ref, o_ref, pad_ref,
                      *, num_blocks, H, W, C):
    """Whole InductiveNeck forward for one batch element.

    x_ref:     (1, H, W, C) bf16         input activation (NHWC)
    w_ref:     (num_blocks, 9*C, C) bf16 conv weights with BN scale folded in,
                                         rows ordered (dy, dx, cin)
    shift_ref: (num_blocks, 1, C) f32    beta - running_mean * scale
    fcw_ref:   (C, Dp) f32               SimpleNeck linear weight (lane-padded)
    fcb_ref:   (1, Dp) f32               SimpleNeck linear bias   (lane-padded)
    o_ref:     (1, 1, Dp) f32            output (lane-dense)
    pad_ref:   (H+2, W+2, C) VMEM bf16   zero-padded activation scratch
    """
    # Zero only the 4 border strips (interior is fully overwritten each block).
    # Re-done every grid step: the grid is megacore-sharded on v7x, so a
    # program_id==0 guard would leave core 1's scratch uninitialized.
    zrow = jnp.zeros((1, W + 2, C), pad_ref.dtype)
    zcol = jnp.zeros((H + 2, 1, C), pad_ref.dtype)
    pad_ref[0:1, :, :] = zrow
    pad_ref[H + 1:H + 2, :, :] = zrow
    pad_ref[:, 0:1, :] = zcol
    pad_ref[:, W + 1:W + 2, :] = zcol

    # Initial activation = input (already bf16); single interior write, no cast.
    pad_ref[1:H + 1, 1:W + 1, :] = x_ref[0]

    taps = [(dy, dx) for dy in range(3) for dx in range(3)]

    @pl.loop(0, num_blocks)
    def _(b):
        # 3x3 conv as 9 accumulated bf16 x bf16 -> f32 MXU matmuls.
        acc = jnp.zeros((H * W, C), jnp.float32)
        for k, (dy, dx) in enumerate(taps):
            view = pad_ref[dy:dy + H, dx:dx + W, :].reshape(H * W, C)   # bf16
            w_tap = w_ref[b, pl.ds(k * C, C), :]                        # (C, C) bf16
            acc = acc + jnp.dot(view, w_tap, preferred_element_type=jnp.float32)
        # Folded-BN shift + ReLU epilogue in f32 (scale already in the weights).
        act = jnp.maximum(acc + shift_ref[b], 0.0)
        # Single bf16 cast per block when writing back into the padded scratch.
        pad_ref[1:H + 1, 1:W + 1, :] = act.reshape(H, W, C).astype(pad_ref.dtype)

    # AdaptiveAvgPool2d((1,1)) + Flatten + Linear (SimpleNeck, projection="linear").
    final = pad_ref[1:H + 1, 1:W + 1, :].reshape(H * W, C).astype(jnp.float32)
    pooled = jnp.mean(final, axis=0, keepdims=True)                     # (1, C)
    out = jnp.dot(pooled, fcw_ref[...], preferred_element_type=jnp.float32)
    o_ref[0] = (out + fcb_ref[...]).astype(o_ref.dtype)


# -------------------------------- wrapper -------------------------------------

@jax.jit
def inductive_neck_forward(x_nchw, params):
    n, c, h, w = x_nchw.shape
    x = jnp.transpose(x_nchw, (0, 2, 3, 1)).astype(jnp.bfloat16)   # NCHW -> NHWC, bf16
    # Fold BN scale into the conv weights in f32, then ship bf16 to the kernel.
    w_folded = (params["w_all"] * params["scale_all"]).astype(jnp.bfloat16)  # (nb,9c,c)
    shift_all = params["shift_all"]                                  # (nb, 1, c) f32
    fc_w = params["fc_w"]                                            # (c, d)
    fc_b = params["fc_b"]                                            # (1, d)
    nb = w_folded.shape[0]
    d = fc_w.shape[1]
    # Lane-dense FC / output: pad D up to a multiple of 128, slice afterwards.
    d_pad = ((d + 127) // 128) * 128
    fc_w_p = jnp.zeros((c, d_pad), jnp.float32).at[:, :d].set(fc_w)
    fc_b_p = jnp.zeros((1, d_pad), jnp.float32).at[:, :d].set(fc_b)

    kernel = functools.partial(fused_neck_kernel, num_blocks=nb, H=h, W=w, C=c)
    out3 = pl.pallas_call(
        kernel,
        out_shape=jax.ShapeDtypeStruct((n, 1, d_pad), jnp.float32),
        grid=(n,),
        in_specs=[
            pl.BlockSpec((1, h, w, c), lambda b: (b, 0, 0, 0)),
            pl.BlockSpec((nb, 9 * c, c), lambda b: (0, 0, 0)),
            pl.BlockSpec((nb, 1, c), lambda b: (0, 0, 0)),
            pl.BlockSpec((c, d_pad), lambda b: (0, 0)),
            pl.BlockSpec((1, d_pad), lambda b: (0, 0)),
        ],
        out_specs=pl.BlockSpec((1, 1, d_pad), lambda b: (b, 0, 0)),
        scratch_shapes=[pltpu.VMEM((h + 2, w + 2, c), jnp.bfloat16)],
        compiler_params=pltpu.CompilerParams(
            dimension_semantics=("parallel",),
            vmem_limit_bytes=32 * 1024 * 1024),   # safe on v5e/v6e/v7x; working set is tiny
    )(x, w_folded, shift_all, fc_w_p, fc_b_p)
    return out3[:, 0, :d]


# ---------------------------- parameter setup ---------------------------------

def init_params(key, input_dim, output_dim, num_blocks, eps=1e-5):
    ch = input_dim
    ws, scales, shifts = [], [], []
    for _ in range(num_blocks):
        key, kw, kg, kb, km, kv = jax.random.split(key, 6)
        # torch Conv2d weight layout (Cout, Cin, 3, 3), bias=False.
        wgt = 0.1 * jax.random.normal(kw, (ch, ch, 3, 3), jnp.float32)
        # fold to tap-matmul layout (9*Cin, Cout); row = (dy*3+dx)*Cin + cin.
        w_mat = jnp.transpose(wgt, (2, 3, 1, 0)).reshape(9 * ch, ch)
        gamma = 0.5 + jax.random.uniform(kg, (ch,), jnp.float32)
        beta = 0.1 * jax.random.normal(kb, (ch,), jnp.float32)
        r_mean = 0.1 * jax.random.normal(km, (ch,), jnp.float32)
        r_var = 0.5 + jax.random.uniform(kv, (ch,), jnp.float32)
        scale = gamma / jnp.sqrt(r_var + eps)
        shift = beta - r_mean * scale
        ws.append(w_mat)
        scales.append(scale.reshape(1, ch))
        shifts.append(shift.reshape(1, ch))
    key, kfw, kfb = jax.random.split(key, 3)
    return {
        "w_all": jnp.stack(ws),                      # (nb, 9*ch, ch) f32
        "scale_all": jnp.stack(scales),              # (nb, 1, ch)    f32
        "shift_all": jnp.stack(shifts),              # (nb, 1, ch)    f32
        "fc_w": 0.1 * jax.random.normal(kfw, (ch, output_dim), jnp.float32),
        "fc_b": 0.1 * jax.random.normal(kfb, (1, output_dim), jnp.float32),
    }


# -------------------------- pure-JAX reference (f32) ---------------------------

def reference_forward(x_nchw, params):
    x = jnp.transpose(x_nchw, (0, 2, 3, 1))
    n, h, w, c = x.shape
    for b in range(params["w_all"].shape[0]):
        xp = jnp.pad(x, ((0, 0), (1, 1), (1, 1), (0, 0)))
        cols = [xp[:, dy:dy + h, dx:dx + w, :] for dy in range(3) for dx in range(3)]
        patches = jnp.concatenate(cols, axis=-1).reshape(n * h * w, 9 * c)
        y = patches @ params["w_all"][b]
        y = y * params["scale_all"][b] + params["shift_all"][b]
        x = jnp.maximum(y, 0.0).reshape(n, h, w, c)
    pooled = jnp.mean(x, axis=(1, 2))                          # (n, c)
    return pooled @ params["fc_w"] + params["fc_b"]


# ---------------------------------- main ---------------------------------------

if __name__ == "__main__":
    N, C_IN, H, W = 2, 4, 16, 16
    INPUT_DIM, OUTPUT_DIM, NUM_BLOCKS = C_IN, 32, 2

    key = jax.random.PRNGKey(0)
    key, kx = jax.random.split(key)
    x = jax.random.normal(kx, (N, C_IN, H, W), jnp.float32)    # NCHW like torch

    params = init_params(key, INPUT_DIM, OUTPUT_DIM, NUM_BLOCKS)

    out = jax.block_until_ready(inductive_neck_forward(x, params))
    assert out.shape == (N, OUTPUT_DIM), out.shape
    assert bool(jnp.all(jnp.isfinite(out)))

    ref = reference_forward(x, params)
    max_err = float(jnp.max(jnp.abs(out - ref)))
    # bf16 MXU path + bf16 inter-block activations -> loose tolerance vs f32 reference.
    assert jnp.allclose(out, ref, rtol=3e-2, atol=3e-2), f"max|err|={max_err}"

    print("KERNEL_OK")
</pallas_src>

<mosaic_0001>
module attributes {stable_mosaic.version = 11 : i64} {
  func.func @fused_neck_kernel(%arg0: i32, %arg1: memref<1x16x16x4xbf16, #tpu.memory_space<vmem>>, %arg2: memref<2x36x4xbf16, #tpu.memory_space<vmem>>, %arg3: memref<2x1x4xf32, #tpu.memory_space<vmem>>, %arg4: memref<4x128xf32, #tpu.memory_space<vmem>>, %arg5: memref<1x128xf32, #tpu.memory_space<vmem>>, %arg6: memref<1x1x128xf32, #tpu.memory_space<vmem>>, %arg7: memref<18x18x4xbf16, #tpu.memory_space<vmem>>) attributes {dimension_semantics = [#tpu.dimension_semantics<parallel>], iteration_bounds = array<i64: 2>, scalar_prefetch = 0 : i64, scratch_operands = 1 : i64, tpu.core_type = #tpu.core_type<tc>, window_params = [{transform_indices = @transform_0, window_bounds = array<i64: 1, 16, 16, 4>}, {pipeline_mode = #tpu.pipeline_mode<synchronous>, transform_indices = @transform_1, window_bounds = array<i64: 2, 36, 4>}, {pipeline_mode = #tpu.pipeline_mode<synchronous>, transform_indices = @transform_2, window_bounds = array<i64: 2, 1, 4>}, {pipeline_mode = #tpu.pipeline_mode<synchronous>, transform_indices = @transform_3, window_bounds = array<i64: 4, 128>}, {pipeline_mode = #tpu.pipeline_mode<synchronous>, transform_indices = @transform_4, window_bounds = array<i64: 1, 128>}, {transform_indices = @transform_5, window_bounds = array<i64: 1, 1, 128>}]} {
    %cst = arith.constant 0.000000e+00 : bf16
    %0 = vector.broadcast %cst : bf16 to vector<1x18x4xbf16>
    %cst_0 = arith.constant 0.000000e+00 : bf16
    %1 = vector.broadcast %cst_0 : bf16 to vector<18x1x4xbf16>
    %c0 = arith.constant 0 : index
    %c0_1 = arith.constant 0 : index
    %c0_2 = arith.constant 0 : index
    %2 = vector.load %arg7[%c0, %c0_1, %c0_2] : memref<18x18x4xbf16, #tpu.memory_space<vmem>>, vector<1x18x4xbf16>
    tpu.vector_store %arg7[%c0, %c0_1, %c0_2], %0 {strides = array<i32>} : memref<18x18x4xbf16, #tpu.memory_space<vmem>>, vector<1x18x4xbf16>,
    %c17 = arith.constant 17 : index
    %c0_3 = arith.constant 0 : index
    %c0_4 = arith.constant 0 : index
    %3 = vector.load %arg7[%c17, %c0_3, %c0_4] : memref<18x18x4xbf16, #tpu.memory_space<vmem>>, vector<1x18x4xbf16>
    tpu.vector_store %arg7[%c17, %c0_3, %c0_4], %0 {strides = array<i32>} : memref<18x18x4xbf16, #tpu.memory_space<vmem>>, vector<1x18x4xbf16>,
    %c0_5 = arith.constant 0 : index
    %c0_6 = arith.constant 0 : index
    %c0_7 = arith.constant 0 : index
    %4 = vector.load %arg7[%c0_5, %c0_6, %c0_7] : memref<18x18x4xbf16, #tpu.memory_space<vmem>>, vector<18x1x4xbf16>
    tpu.vector_store %arg7[%c0_5, %c0_6, %c0_7], %1 {strides = array<i32>} : memref<18x18x4xbf16, #tpu.memory_space<vmem>>, vector<18x1x4xbf16>,
    %c0_8 = arith.constant 0 : index
    %c17_9 = arith.constant 17 : index
    %c0_10 = arith.constant 0 : index
    %5 = vector.load %arg7[%c0_8, %c17_9, %c0_10] : memref<18x18x4xbf16, #tpu.memory_space<vmem>>, vector<18x1x4xbf16>
    tpu.vector_store %arg7[%c0_8, %c17_9, %c0_10], %1 {strides = array<i32>} : memref<18x18x4xbf16, #tpu.memory_space<vmem>>, vector<18x1x4xbf16>,
    %c0_11 = arith.constant 0 : index
    %c0_12 = arith.constant 0 : index
    %c0_13 = arith.constant 0 : index
    %c0_14 = arith.constant 0 : index
    %6 = vector.load %arg1[%c0_11, %c0_12, %c0_13, %c0_14] : memref<1x16x16x4xbf16, #tpu.memory_space<vmem>>, vector<1x16x16x4xbf16>
    %7 = vector.shape_cast %6 : vector<1x16x16x4xbf16> to vector<16x16x4xbf16>
    %c1 = arith.constant 1 : index
    %c1_15 = arith.constant 1 : index
    %c0_16 = arith.constant 0 : index
    %8 = vector.load %arg7[%c1, %c1_15, %c0_16] : memref<18x18x4xbf16, #tpu.memory_space<vmem>>, vector<16x16x4xbf16>
    tpu.vector_store %arg7[%c1, %c1_15, %c0_16], %7 {strides = array<i32>} : memref<18x18x4xbf16, #tpu.memory_space<vmem>>, vector<16x16x4xbf16>,
    %c0_i32 = arith.constant 0 : i32
    %c2_i32 = arith.constant 2 : i32
    %9 = arith.addi %c0_i32, %c2_i32 : i32
    %c1_i32 = arith.constant 1 : i32
    scf.for %arg8 = %c0_i32 to %9 step %c1_i32  : i32 {
      %c1_i32_31 = arith.constant 1 : i32
      %24 = arith.muli %arg8, %c1_i32_31 : i32
      %c0_i32_32 = arith.constant 0 : i32
      %25 = arith.addi %c0_i32_32, %24 : i32
      %cst_33 = arith.constant 0.000000e+00 : f32
      %26 = vector.broadcast %cst_33 : f32 to vector<256x4xf32>
      %c0_34 = arith.constant 0 : index
      %c0_35 = arith.constant 0 : index
      %c0_36 = arith.constant 0 : index
      %27 = vector.load %arg7[%c0_34, %c0_35, %c0_36] : memref<18x18x4xbf16, #tpu.memory_space<vmem>>, vector<16x16x4xbf16>
      %28 = vector.shape_cast %27 : vector<16x16x4xbf16> to vector<256x4xbf16>
      %29 = arith.index_cast %25 : i32 to index
      %c0_37 = arith.constant 0 : index
      %c0_38 = arith.constant 0 : index
      %30 = vector.load %arg2[%29, %c0_37, %c0_38] : memref<2x36x4xbf16, #tpu.memory_space<vmem>>, vector<1x4x4xbf16>
      %31 = vector.shape_cast %30 : vector<1x4x4xbf16> to vector<4x4xbf16>
      %cst_39 = arith.constant dense<0.000000e+00> : vector<256x4xf32>
      %32 = tpu.matmul %28, %31, %cst_39 {dimension_numbers = #tpu.dot_dimension_numbers<[1], [0], [0], [1], [0, 0, 1, 1], [], []>} : vector<256x4xbf16>, vector<4x4xbf16>, vector<256x4xf32> -> vector<256x4xf32>
      %33 = arith.addf %26, %32 : vector<256x4xf32>
      %c0_40 = arith.constant 0 : index
      %c1_41 = arith.constant 1 : index
      %c0_42 = arith.constant 0 : index
      %34 = vector.load %arg7[%c0_40, %c1_41, %c0_42] : memref<18x18x4xbf16, #tpu.memory_space<vmem>>, vector<16x16x4xbf16>
      %35 = vector.shape_cast %34 : vector<16x16x4xbf16> to vector<256x4xbf16>
      %36 = arith.index_cast %25 : i32 to index
      %c4 = arith.constant 4 : index
      %c0_43 = arith.constant 0 : index
      %37 = vector.load %arg2[%36, %c4, %c0_43] : memref<2x36x4xbf16, #tpu.memory_space<vmem>>, vector<1x4x4xbf16>
      %38 = vector.shape_cast %37 : vector<1x4x4xbf16> to vector<4x4xbf16>
      %cst_44 = arith.constant dense<0.000000e+00> : vector<256x4xf32>
      %39 = tpu.matmul %35, %38, %cst_44 {dimension_numbers = #tpu.dot_dimension_numbers<[1], [0], [0], [1], [0, 0, 1, 1], [], []>} : vector<256x4xbf16>, vector<4x4xbf16>, vector<256x4xf32> -> vector<256x4xf32>
      %40 = arith.addf %33, %39 : vector<256x4xf32>
      %c0_45 = arith.constant 0 : index
      %c2 = arith.constant 2 : index
      %c0_46 = arith.constant 0 : index
      %41 = vector.load %arg7[%c0_45, %c2, %c0_46] : memref<18x18x4xbf16, #tpu.memory_space<vmem>>, vector<16x16x4xbf16>
      %42 = vector.shape_cast %41 : vector<16x16x4xbf16> to vector<256x4xbf16>
      %43 = arith.index_cast %25 : i32 to index
      %c8 = arith.constant 8 : index
      %c0_47 = arith.constant 0 : index
      %44 = vector.load %arg2[%43, %c8, %c0_47] : memref<2x36x4xbf16, #tpu.memory_space<vmem>>, vector<1x4x4xbf16>
      %45 = vector.shape_cast %44 : vector<1x4x4xbf16> to vector<4x4xbf16>
      %cst_48 = arith.constant dense<0.000000e+00> : vector<256x4xf32>
      %46 = tpu.matmul %42, %45, %cst_48 {dimension_numbers = #tpu.dot_dimension_numbers<[1], [0], [0], [1], [0, 0, 1, 1], [], []>} : vector<256x4xbf16>, vector<4x4xbf16>, vector<256x4xf32> -> vector<256x4xf32>
      %47 = arith.addf %40, %46 : vector<256x4xf32>
      %c1_49 = arith.constant 1 : index
      %c0_50 = arith.constant 0 : index
      %c0_51 = arith.constant 0 : index
      %48 = vector.load %arg7[%c1_49, %c0_50, %c0_51] : memref<18x18x4xbf16, #tpu.memory_space<vmem>>, vector<16x16x4xbf16>
      %49 = vector.shape_cast %48 : vector<16x16x4xbf16> to vector<256x4xbf16>
      %50 = arith.index_cast %25 : i32 to index
      %c12 = arith.constant 12 : index
      %c0_52 = arith.constant 0 : index
      %51 = vector.load %arg2[%50, %c12, %c0_52] : memref<2x36x4xbf16, #tpu.memory_space<vmem>>, vector<1x4x4xbf16>
      %52 = vector.shape_cast %51 : vector<1x4x4xbf16> to vector<4x4xbf16>
      %cst_53 = arith.constant dense<0.000000e+00> : vector<256x4xf32>
      %53 = tpu.matmul %49, %52, %cst_53 {dimension_numbers = #tpu.dot_dimension_numbers<[1], [0], [0], [1], [0, 0, 1, 1], [], []>} : vector<256x4xbf16>, vector<4x4xbf16>, vector<256x4xf32> -> vector<256x4xf32>
      %54 = arith.addf %47, %53 : vector<256x4xf32>
      %c1_54 = arith.constant 1 : index
      %c1_55 = arith.constant 1 : index
      %c0_56 = arith.constant 0 : index
      %55 = vector.load %arg7[%c1_54, %c1_55, %c0_56] : memref<18x18x4xbf16, #tpu.memory_space<vmem>>, vector<16x16x4xbf16>
      %56 = vector.shape_cast %55 : vector<16x16x4xbf16> to vector<256x4xbf16>
      %57 = arith.index_cast %25 : i32 to index
      %c16 = arith.constant 16 : index
      %c0_57 = arith.constant 0 : index
      %58 = vector.load %arg2[%57, %c16, %c0_57] : memref<2x36x4xbf16, #tpu.memory_space<vmem>>, vector<1x4x4xbf16>
      %59 = vector.shape_cast %58 : vector<1x4x4xbf16> to vector<4x4xbf16>
      %cst_58 = arith.constant dense<0.000000e+00> : vector<256x4xf32>
      %60 = tpu.matmul %56, %59, %cst_58 {dimension_numbers = #tpu.dot_dimension_numbers<[1], [0], [0], [1], [0, 0, 1, 1], [], []>} : vector<256x4xbf16>, vector<4x4xbf16>, vector<256x4xf32> -> vector<256x4xf32>
      %61 = arith.addf %54, %60 : vector<256x4xf32>
      %c1_59 = arith.constant 1 : index
      %c2_60 = arith.constant 2 : index
      %c0_61 = arith.constant 0 : index
      %62 = vector.load %arg7[%c1_59, %c2_60, %c0_61] : memref<18x18x4xbf16, #tpu.memory_space<vmem>>, vector<16x16x4xbf16>
      %63 = vector.shape_cast %62 : vector<16x16x4xbf16> to vector<256x4xbf16>
      %64 = arith.index_cast %25 : i32 to index
      %c20 = arith.constant 20 : index
      %c0_62 = arith.constant 0 : index
      %65 = vector.load %arg2[%64, %c20, %c0_62] : memref<2x36x4xbf16, #tpu.memory_space<vmem>>, vector<1x4x4xbf16>
      %66 = vector.shape_cast %65 : vector<1x4x4xbf16> to vector<4x4xbf16>
      %cst_63 = arith.constant dense<0.000000e+00> : vector<256x4xf32>
      %67 = tpu.matmul %63, %66, %cst_63 {dimension_numbers = #tpu.dot_dimension_numbers<[1], [0], [0], [1], [0, 0, 1, 1], [], []>} : vector<256x4xbf16>, vector<4x4xbf16>, vector<256x4xf32> -> vector<256x4xf32>
      %68 = arith.addf %61, %67 : vector<256x4xf32>
      %c2_64 = arith.constant 2 : index
      %c0_65 = arith.constant 0 : index
      %c0_66 = arith.constant 0 : index
      %69 = vector.load %arg7[%c2_64, %c0_65, %c0_66] : memref<18x18x4xbf16, #tpu.memory_space<vmem>>, vector<16x16x4xbf16>
      %70 = vector.shape_cast %69 : vector<16x16x4xbf16> to vector<256x4xbf16>
      %71 = arith.index_cast %25 : i32 to index
      %c24 = arith.constant 24 : index
      %c0_67 = arith.constant 0 : index
      %72 = vector.load %arg2[%71, %c24, %c0_67] : memref<2x36x4xbf16, #tpu.memory_space<vmem>>, vector<1x4x4xbf16>
      %73 = vector.shape_cast %72 : vector<1x4x4xbf16> to vector<4x4xbf16>
      %cst_68 = arith.constant dense<0.000000e+00> : vector<256x4xf32>
      %74 = tpu.matmul %70, %73, %cst_68 {dimension_numbers = #tpu.dot_dimension_numbers<[1], [0], [0], [1], [0, 0, 1, 1], [], []>} : vector<256x4xbf16>, vector<4x4xbf16>, vector<256x4xf32> -> vector<256x4xf32>
      %75 = arith.addf %68, %74 : vector<256x4xf32>
      %c2_69 = arith.constant 2 : index
      %c1_70 = arith.constant 1 : index
      %c0_71 = arith.constant 0 : index
      %76 = vector.load %arg7[%c2_69, %c1_70, %c0_71] : memref<18x18x4xbf16, #tpu.memory_space<vmem>>, vector<16x16x4xbf16>
      %77 = vector.shape_cast %76 : vector<16x16x4xbf16> to vector<256x4xbf16>
      %78 = arith.index_cast %25 : i32 to index
      %c28 = arith.constant 28 : index
      %c0_72 = arith.constant 0 : index
      %79 = vector.load %arg2[%78, %c28, %c0_72] : memref<2x36x4xbf16, #tpu.memory_space<vmem>>, vector<1x4x4xbf16>
      %80 = vector.shape_cast %79 : vector<1x4x4xbf16> to vector<4x4xbf16>
      %cst_73 = arith.constant dense<0.000000e+00> : vector<256x4xf32>
      %81 = tpu.matmul %77, %80, %cst_73 {dimension_numbers = #tpu.dot_dimension_numbers<[1], [0], [0], [1], [0, 0, 1, 1], [], []>} : vector<256x4xbf16>, vector<4x4xbf16>, vector<256x4xf32> -> vector<256x4xf32>
      %82 = arith.addf %75, %81 : vector<256x4xf32>
      %c2_74 = arith.constant 2 : index
      %c2_75 = arith.constant 2 : index
      %c0_76 = arith.constant 0 : index
      %83 = vector.load %arg7[%c2_74, %c2_75, %c0_76] : memref<18x18x4xbf16, #tpu.memory_space<vmem>>, vector<16x16x4xbf16>
      %84 = vector.shape_cast %83 : vector<16x16x4xbf16> to vector<256x4xbf16>
      %85 = arith.index_cast %25 : i32 to index
      %c32 = arith.constant 32 : index
      %c0_77 = arith.constant 0 : index
      %86 = vector.load %arg2[%85, %c32, %c0_77] : memref<2x36x4xbf16, #tpu.memory_space<vmem>>, vector<1x4x4xbf16>
      %87 = vector.shape_cast %86 : vector<1x4x4xbf16> to vector<4x4xbf16>
      %cst_78 = arith.constant dense<0.000000e+00> : vector<256x4xf32>
      %88 = tpu.matmul %84, %87, %cst_78 {dimension_numbers = #tpu.dot_dimension_numbers<[1], [0], [0], [1], [0, 0, 1, 1], [], []>} : vector<256x4xbf16>, vector<4x4xbf16>, vector<256x4xf32> -> vector<256x4xf32>
      %89 = arith.addf %82, %88 : vector<256x4xf32>
      %90 = arith.index_cast %25 : i32 to index
      %c0_79 = arith.constant 0 : index
      %c0_80 = arith.constant 0 : index
      %91 = vector.load %arg3[%90, %c0_79, %c0_80] : memref<2x1x4xf32, #tpu.memory_space<vmem>>, vector<1x1x4xf32>
      %92 = vector.shape_cast %91 : vector<1x1x4xf32> to vector<1x4xf32>
      %93 = vector.broadcast %92 : vector<1x4xf32> to vector<256x4xf32>
      %94 = arith.addf %89, %93 : vector<256x4xf32>
      %cst_81 = arith.constant 0.000000e+00 : f32
      %95 = vector.broadcast %cst_81 : f32 to vector<256x4xf32>
      %96 = arith.maximumf %94, %95 : vector<256x4xf32>
      %97 = vector.shape_cast %96 : vector<256x4xf32> to vector<16x16x4xf32>
      %98 = arith.truncf %97 : vector<16x16x4xf32> to vector<16x16x4xbf16>
      %c1_82 = arith.constant 1 : index
      %c1_83 = arith.constant 1 : index
      %c0_84 = arith.constant 0 : index
      %99 = vector.load %arg7[%c1_82, %c1_83, %c0_84] : memref<18x18x4xbf16, #tpu.memory_space<vmem>>, vector<16x16x4xbf16>
      tpu.vector_store %arg7[%c1_82, %c1_83, %c0_84], %98 {strides = array<i32>} : memref<18x18x4xbf16, #tpu.memory_space<vmem>>, vector<16x16x4xbf16>,
    }
    %c2_i32_17 = arith.constant 2 : i32
    %c1_18 = arith.constant 1 : index
    %c1_19 = arith.constant 1 : index
    %c0_20 = arith.constant 0 : index
    %10 = vector.load %arg7[%c1_18, %c1_19, %c0_20] : memref<18x18x4xbf16, #tpu.memory_space<vmem>>, vector<16x16x4xbf16>
    %11 = vector.shape_cast %10 : vector<16x16x4xbf16> to vector<256x4xbf16>
    %12 = arith.extf %11 : vector<256x4xbf16> to vector<256x4xf32>
    %cst_21 = arith.constant dense<0.000000e+00> : vector<4xf32>
    %13 = vector.multi_reduction <add>, %12, %cst_21 [0] : vector<256x4xf32> to vector<4xf32>
    %14 = vector.shape_cast %13 : vector<4xf32> to vector<1x4xf32>
    %cst_22 = arith.constant 2.560000e+02 : f32
    %15 = vector.broadcast %cst_22 : f32 to vector<1x4xf32>
    %16 = arith.divf %14, %15 : vector<1x4xf32>
    %c0_23 = arith.constant 0 : index
    %c0_24 = arith.constant 0 : index
    %17 = vector.load %arg4[%c0_23, %c0_24] : memref<4x128xf32, #tpu.memory_space<vmem>>, vector<4x128xf32>
    %cst_25 = arith.constant dense<0.000000e+00> : vector<1x128xf32>
    %18 = tpu.matmul %16, %17, %cst_25 {dimension_numbers = #tpu.dot_dimension_numbers<[1], [0], [0], [1], [0, 0, 1, 1], [], []>} : vector<1x4xf32>, vector<4x128xf32>, vector<1x128xf32> -> vector<1x128xf32>
    %c0_26 = arith.constant 0 : index
    %c0_27 = arith.constant 0 : index
    %19 = vector.load %arg5[%c0_26, %c0_27] : memref<1x128xf32, #tpu.memory_space<vmem>>, vector<1x128xf32>
    %20 = arith.addf %18, %19 : vector<1x128xf32>
    %c0_28 = arith.constant 0 : index
    %c0_29 = arith.constant 0 : index
    %c0_30 = arith.constant 0 : index
    %21 = vector.load %arg6[%c0_28, %c0_29, %c0_30] : memref<1x1x128xf32, #tpu.memory_space<vmem>>, vector<1x1x128xf32>
    %22 = vector.shape_cast %21 : vector<1x1x128xf32> to vector<1x128xf32>
    %23 = vector.shape_cast %20 : vector<1x128xf32> to vector<1x1x128xf32>
    tpu.vector_store %arg6[%c0_28, %c0_29, %c0_30], %23 {strides = array<i32>} : memref<1x1x128xf32, #tpu.memory_space<vmem>>, vector<1x1x128xf32>,
    return
  }
  func.func @transform_0(%arg0: i32) -> (i32, i32, i32, i32) {
    %c0_i32 = arith.constant 0 : i32
    %c0_i32_0 = arith.constant 0 : i32
    %c0_i32_1 = arith.constant 0 : i32
    %c0_i32_2 = arith.constant 0 : i32
    return %arg0, %c0_i32, %c0_i32_0, %c0_i32_1 : i32, i32, i32, i32
  }
  func.func @transform_1(%arg0: i32) -> (i32, i32, i32) {
    %c0_i32 = arith.constant 0 : i32
    %c0_i32_0 = arith.constant 0 : i32
    %c0_i32_1 = arith.constant 0 : i32
    %c0_i32_2 = arith.constant 0 : i32
    return %c0_i32, %c0_i32_0, %c0_i32_1 : i32, i32, i32
  }
  func.func @transform_2(%arg0: i32) -> (i32, i32, i32) {
    %c0_i32 = arith.constant 0 : i32
    %c0_i32_0 = arith.constant 0 : i32
    %c0_i32_1 = arith.constant 0 : i32
    %c0_i32_2 = arith.constant 0 : i32
    return %c0_i32, %c0_i32_0, %c0_i32_1 : i32, i32, i32
  }
  func.func @transform_3(%arg0: i32) -> (i32, i32) {
    %c0_i32 = arith.constant 0 : i32
    %c0_i32_0 = arith.constant 0 : i32
    %c0_i32_1 = arith.constant 0 : i32
    return %c0_i32, %c0_i32_0 : i32, i32
  }
  func.func @transform_4(%arg0: i32) -> (i32, i32) {
    %c0_i32 = arith.constant 0 : i32
    %c0_i32_0 = arith.constant 0 : i32
    %c0_i32_1 = arith.constant 0 : i32
    return %c0_i32, %c0_i32_0 : i32, i32
  }
  func.func @transform_5(%arg0: i32) -> (i32, i32, i32) {
    %c0_i32 = arith.constant 0 : i32
    %c0_i32_0 = arith.constant 0 : i32
    %c0_i32_1 = arith.constant 0 : i32
    return %arg0, %c0_i32, %c0_i32_0 : i32, i32, i32
  }
}

</mosaic_0001>

<llo_original>
// kernel: inductive_neck_forward.1
$region0: #{inductive_neck_forward.1}
  #allocation0 [shape = 'u32[]', space=smem, size = 0x4, offset = 0x4, fixed_abs, tag = 'smem constant byte address 0x4 - core index']
  #allocation1 [shape = 'u32[72,128]{1,0:T(1,128)}', space=vmem, size = 0x9000, scoped, tag = 'internal scratch']
  #allocation2 [shape = 'bf16[18,18,4]{2,1,0:T(8,128)(2,1)}', space=vmem, size = 0x1b000, scoped, tag = 'scratch operand']
  %s0 = inlined_call_operand.vmem [shape: bf16[2,16,16,4], index: 0, kind: input, shape index: {}]
  %s1 = inlined_call_operand.vmem [shape: bf16[2,36,4], index: 1, kind: input, shape index: {}]
  %s2 = inlined_call_operand.vmem [shape: f32[2,1,4], index: 2, kind: input, shape index: {}]
  %s3 = inlined_call_operand.vmem [shape: f32[4,128], index: 3, kind: input, shape index: {}]
  %s4 = inlined_call_operand.vmem [shape: f32[1,128], index: 4, kind: input, shape index: {}]
  %s5 = inlined_call_operand.hbm [shape: f32[2,1,128], index: 5, kind: output, shape index: {}]
  %s6 = sld [smem:[#allocation0]]
  $region60: #{inductive_neck_forward.1} parent=0
    _
  %s8 = ssub.s32 1, %s6
  %s9 = scalar_select 0, %s8, %s6
  $region1: #{inductive_neck_forward.1} parent=0
    #allocation3 [shape = 'u8[1024]{0}', space=vmem, size = 0x400, scoped, tag = 'output window, operand 0']
    #allocation4 [shape = 's32[2]{0}', space=sflag, size = 0x8, scoped, tag = 'scoped memory for inductive_neck_forward.1']
    %10 = vsyncpa [#allocation4], 0
    %s11 = scalar_lea.sflag [#allocation4], 1
    %12 = vsyncpa %s11, 0
    loop: start=0, step=1, limit=4
    $region2: #{inductive_neck_forward.1} parent=1 // loop_pre_header
      _
    $region3: #{inductive_neck_forward.1} parent=1 // loop_header
      %s14 = sphi 0, %s18
      %p15 = scmp.ge.s32.totalorder %s14, 4
      %s24 = sphi 0, %s26
      %s27 = sphi 0, %s24
      %s28 = sphi 0, %s27
      %s44 = sphi 0, %s28
      %s48 = sphi 0, %s48
      %s50 = sphi 0, %s48
      %s51 = sphi 0, %s50
      %s65 = sphi 0, %s51
      %s69 = sphi 0, %s69
      %s71 = sphi 0, %s69
      %s72 = sphi 0, %s71
      %s86 = sphi 0, %s72
      %s90 = sphi 0, %s90
      %s92 = sphi 0, %s90
      %s93 = sphi 0, %s92
      %s107 = sphi 0, %s93
      %s111 = sphi 0, %s111
      %s113 = sphi 0, %s111
      %s114 = sphi 0, %s113
      %s128 = sphi 0, %s114
      %s134 = sphi 0, %s136
      %s137 = sphi 0, %s134
      %s138 = sphi 0, %s137
      %s154 = sphi 0, %s138
    $region4: #{inductive_neck_forward.1} parent=1 // loop_header_branch
      %17 = sbr.rel (%p15) target = $region8
    $region5: #{inductive_neck_forward.1} parent=1 // loop_body
      %s19 = ssub.s32 %s14, 1
      %s20 = ssub.s32 %s14, 2
      %s21 = sadd.s32 %s14, 1
      %s22 = ssub.s32 %s14, %s21
      %p23 = scmp.eq.s32.totalorder %s22, 0
      %s25 = sadd.s32 %s24, 1
      %s26 = scalar_select %p23, %s24, %s25
      %p29 = pneg %p23
      %p30 = scmp.eq.s32.totalorder %s14, 1
      %p31 = por %p29, %p30
      %p32 = scmp.ne.s32.totalorder %s24, %s27
      %p33 = scmp.eq.s32.totalorder %s14, 0
      %p34 = por %p32, %p33
      %p35 = scmp.ne.s32.totalorder %s24, %s27
      %p36 = scmp.eq.s32.totalorder %s19, 1
      %p37 = por %p35, %p36
      %p38 = scmp.ne.s32.totalorder %s27, %s28
      %p39 = scmp.eq.s32.totalorder %s19, 0
      %p40 = por %p38, %p39
      %p41 = scmp.ne.s32.totalorder %s27, %s28
      %p42 = scmp.eq.s32.totalorder %s20, 1
      %p43 = por %p41, %p42
      %p45 = scmp.ne.s32.totalorder %s28, %s44
      %p46 = scmp.eq.s32.totalorder %s20, 0
      %p47 = por %p45, %p46
      %s49 = sadd.s32 %s48, 1
      %p52 = scmp.eq.s32.totalorder %s14, 1
      %p53 = scmp.ne.s32.totalorder %s48, %s50
      %p54 = scmp.eq.s32.totalorder %s14, 0
      %p55 = por %p53, %p54
      %p56 = scmp.ne.s32.totalorder %s48, %s50
      %p57 = scmp.eq.s32.totalorder %s19, 1
      %p58 = por %p56, %p57
      %p59 = scmp.ne.s32.totalorder %s50, %s51
      %p60 = scmp.eq.s32.totalorder %s19, 0
      %p61 = por %p59, %p60
      %p62 = scmp.ne.s32.totalorder %s50, %s51
      %p63 = scmp.eq.s32.totalorder %s20, 1
      %p64 = por %p62, %p63
      %p66 = scmp.ne.s32.totalorder %s51, %s65
      %p67 = scmp.eq.s32.totalorder %s20, 0
      %p68 = por %p66, %p67
      %s70 = sadd.s32 %s69, 1
      %p73 = scmp.eq.s32.totalorder %s14, 1
      %p74 = scmp.ne.s32.totalorder %s69, %s71
      %p75 = scmp.eq.s32.totalorder %s14, 0
      %p76 = por %p74, %p75
      %p77 = scmp.ne.s32.totalorder %s69, %s71
      %p78 = scmp.eq.s32.totalorder %s19, 1
      %p79 = por %p77, %p78
      %p80 = scmp.ne.s32.totalorder %s71, %s72
      %p81 = scmp.eq.s32.totalorder %s19, 0
      %p82 = por %p80, %p81
      %p83 = scmp.ne.s32.totalorder %s71, %s72
      %p84 = scmp.eq.s32.totalorder %s20, 1
      %p85 = por %p83, %p84
      %p87 = scmp.ne.s32.totalorder %s72, %s86
      %p88 = scmp.eq.s32.totalorder %s20, 0
      %p89 = por %p87, %p88
      %s91 = sadd.s32 %s90, 1
      %p94 = scmp.eq.s32.totalorder %s14, 1
      %p95 = scmp.ne.s32.totalorder %s90, %s92
      %p96 = scmp.eq.s32.totalorder %s14, 0
      %p97 = por %p95, %p96
      %p98 = scmp.ne.s32.totalorder %s90, %s92
      %p99 = scmp.eq.s32.totalorder %s19, 1
      %p100 = por %p98, %p99
      %p101 = scmp.ne.s32.totalorder %s92, %s93
      %p102 = scmp.eq.s32.totalorder %s19, 0
      %p103 = por %p101, %p102
      %p104 = scmp.ne.s32.totalorder %s92, %s93
      %p105 = scmp.eq.s32.totalorder %s20, 1
      %p106 = por %p104, %p105
      %p108 = scmp.ne.s32.totalorder %s93, %s107
      %p109 = scmp.eq.s32.totalorder %s20, 0
      %p110 = por %p108, %p109
      %s112 = sadd.s32 %s111, 1
      %p115 = scmp.eq.s32.totalorder %s14, 1
      %p116 = scmp.ne.s32.totalorder %s111, %s113
      %p117 = scmp.eq.s32.totalorder %s14, 0
      %p118 = por %p116, %p117
      %p119 = scmp.ne.s32.totalorder %s111, %s113
      %p120 = scmp.eq.s32.totalorder %s19, 1
      %p121 = por %p119, %p120
      %p122 = scmp.ne.s32.totalorder %s113, %s114
      %p123 = scmp.eq.s32.totalorder %s19, 0
      %p124 = por %p122, %p123
      %p125 = scmp.ne.s32.totalorder %s113, %s114
      %p126 = scmp.eq.s32.totalorder %s20, 1
      %p127 = por %p125, %p126
      %p129 = scmp.ne.s32.totalorder %s114, %s128
      %p130 = scmp.eq.s32.totalorder %s20, 0
      %p131 = por %p129, %p130
      %s132 = ssub.s32 %s14, %s21
      %p133 = scmp.eq.s32.totalorder %s132, 0
      %s135 = sadd.s32 %s134, 1
      %s136 = scalar_select %p133, %s134, %s135
      %p139 = pneg %p133
      %p140 = scmp.eq.s32.totalorder %s14, 1
      %p141 = por %p139, %p140
      %p142 = scmp.ne.s32.totalorder %s134, %s137
      %p143 = scmp.eq.s32.totalorder %s14, 0
      %p144 = por %p142, %p143
      %p145 = scmp.ne.s32.totalorder %s134, %s137
      %p146 = scmp.eq.s32.totalorder %s19, 1
      %p147 = por %p145, %p146
      %p148 = scmp.ne.s32.totalorder %s137, %s138
      %p149 = scmp.eq.s32.totalorder %s19, 0
      %p150 = por %p148, %p149
      %p151 = scmp.ne.s32.totalorder %s137, %s138
      %p152 = scmp.eq.s32.totalorder %s20, 1
      %p153 = por %p151, %p152
      %p155 = scmp.ne.s32.totalorder %s138, %s154
      %p156 = scmp.eq.s32.totalorder %s20, 0
      %p157 = por %p155, %p156
      %p158 = scmp.le.s32.totalorder 1, %s14
      %p159 = scmp.lt.s32.totalorder %s14, 3
      %p160 = pnand %p158, %p159
      %p161 = pneg %p160
      // Predicated region
      $region9: #{inductive_neck_forward.1} parent=5 // pred_check
        _
      $region10: #{inductive_neck_forward.1} parent=5 // pred_check_branch
        %163 = sbr.rel (%p160) target = $region12
      $region11: #{inductive_neck_forward.1} parent=5 // pred_region
        %s164 = ssub.s32 %s14, 1
        // Predicated region
        $region13: #{inductive_neck_forward.1} parent=11 // pred_check
          %p165 = pneg %p61
        $region14: #{inductive_neck_forward.1} parent=11 // pred_check_branch
          %167 = sbr.rel (%p165) target = $region16
        $region15: #{inductive_neck_forward.1} parent=11 // pred_region
          _
        $region16: #{inductive_neck_forward.1} parent=11 // pred_fallthru
          _
        // Predicated region
        $region17: #{inductive_neck_forward.1} parent=11 // pred_check
          %p168 = pneg %p82
        $region18: #{inductive_neck_forward.1} parent=11 // pred_check_branch
          %170 = sbr.rel (%p168) target = $region20
        $region19: #{inductive_neck_forward.1} parent=11 // pred_region
          _
        $region20: #{inductive_neck_forward.1} parent=11 // pred_fallthru
          _
        // Predicated region
        $region21: #{inductive_neck_forward.1} parent=11 // pred_check
          %p171 = pneg %p103
        $region22: #{inductive_neck_forward.1} parent=11 // pred_check_branch
          %173 = sbr.rel (%p171) target = $region24
        $region23: #{inductive_neck_forward.1} parent=11 // pred_region
          _
        $region24: #{inductive_neck_forward.1} parent=11 // pred_fallthru
          _
        // Predicated region
        $region25: #{inductive_neck_forward.1} parent=11 // pred_check
          %p174 = pneg %p124
        $region26: #{inductive_neck_forward.1} parent=11 // pred_check_branch
          %176 = sbr.rel (%p174) target = $region28
        $region27: #{inductive_neck_forward.1} parent=11 // pred_region
          _
        $region28: #{inductive_neck_forward.1} parent=11 // pred_fallthru
          _
      $region12: #{inductive_neck_forward.1} parent=5 // pred_fallthru
        _
      %p177 = scmp.lt.s32.totalorder %s14, 2
      // Predicated region
      $region29: #{inductive_neck_forward.1} parent=5 // pred_check
        %p178 = pneg %p177
      $region30: #{inductive_neck_forward.1} parent=5 // pred_check_branch
        %180 = sbr.rel (%p178) target = $region32
      $region31: #{inductive_neck_forward.1} parent=5 // pred_region
        // Predicated region
        $region33: #{inductive_neck_forward.1} parent=31 // pred_check
          %p181 = pneg %p34
        $region34: #{inductive_neck_forward.1} parent=31 // pred_check_branch
          %183 = sbr.rel (%p181) target = $region36
        $region35: #{inductive_neck_forward.1} parent=31 // pred_region
          %p184 = scmp.lt.s32.totalorder %s14, 1
          %s185 = scalar_select %p184, %s14, 1
          %s186 = smul.addr %s185, 32
          %s187 = smul.addr %s186, 4
          %s188 = scalar_lea.vmem %s0, %s187
        $region36: #{inductive_neck_forward.1} parent=31 // pred_fallthru
          _
      $region32: #{inductive_neck_forward.1} parent=5 // pred_fallthru
        _
      %p189 = scmp.le.s32.totalorder 1, %s14
      %p190 = scmp.lt.s32.totalorder %s14, 3
      %p191 = pnand %p189, %p190
      %p192 = pneg %p191
      // Predicated region
      $region37: #{inductive_neck_forward.1} parent=5 // pred_check
        _
      $region38: #{inductive_neck_forward.1} parent=5 // pred_check_branch
        %194 = sbr.rel (%p191) target = $region40
      $region39: #{inductive_neck_forward.1} parent=5 // pred_region
        %s195 = ssub.s32 %s14, 1
        %p196 = scmp.lt.s32.totalorder %s19, 1
        %s197 = scalar_select %p196, %s19, 1
        %s198 = smul.addr %s197, 32
        %s199 = smul.addr %s198, 4
        %s200 = scalar_lea.vmem %s0, %s199
        %p201 = pneg %p40
        %p202 = pneg %p37
        %p203 = pneg %p61
        %p204 = pneg %p58
        %p205 = pneg %p82
        %p206 = pneg %p79
        %p207 = pneg %p103
        %p208 = pneg %p100
        %p209 = pneg %p124
        %p210 = pneg %p121
        %p211 = pneg %p150
        %p212 = pneg %p147
        %s213 = sand.u32 %s137, 1
        %s214 = scalar_lea.sflag [#allocation4], %s213
        %s215 = sand.u32 %s137, 1
        %s216 = scalar_lea.vmem [#allocation3], %s215
        %p217 = scmp.lt.s32.totalorder %s19, 1
        %s218 = scalar_select %p217, %s19, 1
        %s219 = smul.addr %s218, 32
        %s220 = smul.addr %s219, 4
        %s221 = scalar_lea.vmem %s0, %s220
        %vm223 = vcmask 27648
        %224 = vst.msk [vmem:[#allocation2] sm:$0xf] %vm223, 0
        %225 = vst.msk [vmem:[#allocation2 + $0x4] sm:$0xf] %vm223, 0
        %vm226 = vcmask 24576
        %227 = vst.msk [vmem:[#allocation2 + $0x8] sm:$0x1] %vm226, 0
        %s228 = scalar_lea.vmem [#allocation2], 204
        %229 = vst.msk [vmem:[%s228] sm:$0xf] %vm223, 0
        %230 = vst.msk [vmem:[%s228 + $0x4] sm:$0xf] %vm223, 0
        %231 = vst.msk [vmem:[%s228 + $0x8] sm:$0x1] %vm226, 0
        %vm232 = vcmask 24576
        %vm233 = vsmask.f32 256
        %vm234 = vmand %vm232, %vm233
        %v235 = vld [vmem:[#allocation2] sm:$0x1]
        %v236 = vsel %vm234, 0, %v235
        %237 = vst [vmem:[#allocation2] sm:$0x1] %v236
        %v238 = vld [vmem:[#allocation2 + $0xc] sm:$0x1]
        %v239 = vsel %vm234, 0, %v238
        %240 = vst [vmem:[#allocation2 + $0xc] sm:$0x1] %v239
        %v241 = vld [vmem:[#allocation2 + $0x18] sm:$0x1]
        %v242 = vsel %vm234, 0, %v241
        %243 = vst [vmem:[#allocation2 + $0x18] sm:$0x1] %v242
        %v244 = vld [vmem:[#allocation2 + $0x24] sm:$0x1]
        %v245 = vsel %vm234, 0, %v244
        %246 = vst [vmem:[#allocation2 + $0x24] sm:$0x1] %v245
        %v247 = vld [vmem:[#allocation2 + $0x30] sm:$0x1]
        %v248 = vsel %vm234, 0, %v247
        %249 = vst [vmem:[#allocation2 + $0x30] sm:$0x1] %v248
        %v250 = vld [vmem:[#allocation2 + $0x3c] sm:$0x1]
        %v251 = vsel %vm234, 0, %v250
        %252 = vst [vmem:[#allocation2 + $0x3c] sm:$0x1] %v251
        %v253 = vld [vmem:[#allocation2 + $0x48] sm:$0x1]
        %v254 = vsel %vm234, 0, %v253
        %255 = vst [vmem:[#allocation2 + $0x48] sm:$0x1] %v254
        %v256 = vld [vmem:[#allocation2 + $0x54] sm:$0x1]
        %v257 = vsel %vm234, 0, %v256
        %258 = vst [vmem:[#allocation2 + $0x54] sm:$0x1] %v257
        %v259 = vld [vmem:[#allocation2 + $0x60] sm:$0x1]
        %v260 = vsel %vm234, 0, %v259
        %261 = vst [vmem:[#allocation2 + $0x60] sm:$0x1] %v260
        %v262 = vld [vmem:[#allocation2 + $0x6c] sm:$0x1]
        %v263 = vsel %vm234, 0, %v262
        %264 = vst [vmem:[#allocation2 + $0x6c] sm:$0x1] %v263
        %v265 = vld [vmem:[#allocation2 + $0x78] sm:$0x1]
        %v266 = vsel %vm234, 0, %v265
        %267 = vst [vmem:[#allocation2 + $0x78] sm:$0x1] %v266
        %v268 = vld [vmem:[#allocation2 + $0x84] sm:$0x1]
        %v269 = vsel %vm234, 0, %v268
        %270 = vst [vmem:[#allocation2 + $0x84] sm:$0x1] %v269
        %v271 = vld [vmem:[#allocation2 + $0x90] sm:$0x1]
        %v272 = vsel %vm234, 0, %v271
        %273 = vst [vmem:[#allocation2 + $0x90] sm:$0x1] %v272
        %v274 = vld [vmem:[#allocation2 + $0x9c] sm:$0x1]
        %v275 = vsel %vm234, 0, %v274
        %276 = vst [vmem:[#allocation2 + $0x9c] sm:$0x1] %v275
        %v277 = vld [vmem:[#allocation2 + $0xa8] sm:$0x1]
        %v278 = vsel %vm234, 0, %v277
        %279 = vst [vmem:[#allocation2 + $0xa8] sm:$0x1] %v278
        %v280 = vld [vmem:[#allocation2 + $0xb4] sm:$0x1]
        %v281 = vsel %vm234, 0, %v280
        %282 = vst [vmem:[#allocation2 + $0xb4] sm:$0x1] %v281
        %v283 = vld [vmem:[#allocation2 + $0xc0] sm:$0x1]
        %v284 = vsel %vm234, 0, %v283
        %285 = vst [vmem:[#allocation2 + $0xc0] sm:$0x1] %v284
        %v286 = vld [vmem:[#allocation2 + $0xcc] sm:$0x1]
        %v287 = vsel %vm234, 0, %v286
        %288 = vst [vmem:[#allocation2 + $0xcc] sm:$0x1] %v287
        %vm289 = vsmask.f32 7938
        %vm290 = vmand %vm232, %vm289
        %v291 = vld [vmem:[#allocation2 + $0x8] sm:$0x1]
        %v292 = vsel %vm290, 0, %v291
        %293 = vst [vmem:[#allocation2 + $0x8] sm:$0x1] %v292
        %v294 = vld [vmem:[#allocation2 + $0x14] sm:$0x1]
        %v295 = vsel %vm290, 0, %v294
        %296 = vst [vmem:[#allocation2 + $0x14] sm:$0x1] %v295
        %v297 = vld [vmem:[#allocation2 + $0x20] sm:$0x1]
        %v298 = vsel %vm290, 0, %v297
        %299 = vst [vmem:[#allocation2 + $0x20] sm:$0x1] %v298
        %v300 = vld [vmem:[#allocation2 + $0x2c] sm:$0x1]
        %v301 = vsel %vm290, 0, %v300
        %302 = vst [vmem:[#allocation2 + $0x2c] sm:$0x1] %v301
        %v303 = vld [vmem:[#allocation2 + $0x38] sm:$0x1]
        %v304 = vsel %vm290, 0, %v303
        %305 = vst [vmem:[#allocation2 + $0x38] sm:$0x1] %v304
        %v306 = vld [vmem:[#allocation2 + $0x44] sm:$0x1]
        %v307 = vsel %vm290, 0, %v306
        %308 = vst [vmem:[#allocation2 + $0x44] sm:$0x1] %v307
        %v309 = vld [vmem:[#allocation2 + $0x50] sm:$0x1]
        %v310 = vsel %vm290, 0, %v309
        %311 = vst [vmem:[#allocation2 + $0x50] sm:$0x1] %v310
        %v312 = vld [vmem:[#allocation2 + $0x5c] sm:$0x1]
        %v313 = vsel %vm290, 0, %v312
        %314 = vst [vmem:[#allocation2 + $0x5c] sm:$0x1] %v313
        %v315 = vld [vmem:[#allocation2 + $0x68] sm:$0x1]
        %v316 = vsel %vm290, 0, %v315
        %317 = vst [vmem:[#allocation2 + $0x68] sm:$0x1] %v316
        %v318 = vld [vmem:[#allocation2 + $0x74] sm:$0x1]
        %v319 = vsel %vm290, 0, %v318
        %320 = vst [vmem:[#allocation2 + $0x74] sm:$0x1] %v319
        %v321 = vld [vmem:[#allocation2 + $0x80] sm:$0x1]
        %v322 = vsel %vm290, 0, %v321
        %323 = vst [vmem:[#allocation2 + $0x80] sm:$0x1] %v322
        %v324 = vld [vmem:[#allocation2 + $0x8c] sm:$0x1]
        %v325 = vsel %vm290, 0, %v324
        %326 = vst [vmem:[#allocation2 + $0x8c] sm:$0x1] %v325
        %v327 = vld [vmem:[#allocation2 + $0x98] sm:$0x1]
        %v328 = vsel %vm290, 0, %v327
        %329 = vst [vmem:[#allocation2 + $0x98] sm:$0x1] %v328
        %v330 = vld [vmem:[#allocation2 + $0xa4] sm:$0x1]
        %v331 = vsel %vm290, 0, %v330
        %332 = vst [vmem:[#allocation2 + $0xa4] sm:$0x1] %v331
        %v333 = vld [vmem:[#allocation2 + $0xb0] sm:$0x1]
        %v334 = vsel %vm290, 0, %v333
        %335 = vst [vmem:[#allocation2 + $0xb0] sm:$0x1] %v334
        %v336 = vld [vmem:[#allocation2 + $0xbc] sm:$0x1]
        %v337 = vsel %vm290, 0, %v336
        %338 = vst [vmem:[#allocation2 + $0xbc] sm:$0x1] %v337
        %v339 = vld [vmem:[#allocation2 + $0xc8] sm:$0x1]
        %v340 = vsel %vm290, 0, %v339
        %341 = vst [vmem:[#allocation2 + $0xc8] sm:$0x1] %v340
        %v342 = vld [vmem:[#allocation2 + $0xd4] sm:$0x1]
        %v343 = vsel %vm290, 0, %v342
        %344 = vst [vmem:[#allocation2 + $0xd4] sm:$0x1] %v343
        %v345 = vld [vmem:[%s221] sm:$0xf]
        %v346 = vld [vmem:[%s221 + $0x4] sm:$0xf]
        %v347 = vld [vmem:[%s221 + $0x8] sm:$0xf]
        %v348 = vld [vmem:[%s221 + $0xc] sm:$0xf]
        %v349 = vld [vmem:[%s221 + $0x10] sm:$0xf]
        %v350 = vld [vmem:[%s221 + $0x14] sm:$0xf]
        %v351 = vld [vmem:[%s221 + $0x18] sm:$0xf]
        %v352 = vld [vmem:[%s221 + $0x1c] sm:$0xf]
        %v353 = vld [vmem:[%s221 + $0x20] sm:$0xf]
        %v354 = vld [vmem:[%s221 + $0x24] sm:$0xf]
        %v355 = vld [vmem:[%s221 + $0x28] sm:$0xf]
        %v356 = vld [vmem:[%s221 + $0x2c] sm:$0xf]
        %v357 = vld [vmem:[%s221 + $0x30] sm:$0xf]
        %v358 = vld [vmem:[%s221 + $0x34] sm:$0xf]
        %v359 = vld [vmem:[%s221 + $0x38] sm:$0xf]
        %v360 = vld [vmem:[%s221 + $0x3c] sm:$0xf]
        %v361 = vld [vmem:[%s221 + $0x40] sm:$0xf]
        %v362 = vld [vmem:[%s221 + $0x44] sm:$0xf]
        %v363 = vld [vmem:[%s221 + $0x48] sm:$0xf]
        %v364 = vld [vmem:[%s221 + $0x4c] sm:$0xf]
        %v365 = vld [vmem:[%s221 + $0x50] sm:$0xf]
        %v366 = vld [vmem:[%s221 + $0x54] sm:$0xf]
        %v367 = vld [vmem:[%s221 + $0x58] sm:$0xf]
        %v368 = vld [vmem:[%s221 + $0x5c] sm:$0xf]
        %v369 = vld [vmem:[%s221 + $0x60] sm:$0xf]
        %v370 = vld [vmem:[%s221 + $0x64] sm:$0xf]
        %v371 = vld [vmem:[%s221 + $0x68] sm:$0xf]
        %v372 = vld [vmem:[%s221 + $0x6c] sm:$0xf]
        %v373 = vld [vmem:[%s221 + $0x70] sm:$0xf]
        %v374 = vld [vmem:[%s221 + $0x74] sm:$0xf]
        %v375 = vld [vmem:[%s221 + $0x78] sm:$0xf]
        %v376 = vld [vmem:[%s221 + $0x7c] sm:$0xf]
        %vm377 = vsmask.f32 4368
        %vm378 = vmor %vm233, %vm377
        %v380 = vshrl.u32 %v345, 16
        %v382 = vrot.slane %v380, 7
        %v383 = vshll.u32 %v345, 16
        %v385 = vor.u32 %v382, %v383
        %v386 = vrot.slane %v382, 4
        %v388 = vshrl.u32 %v346, 16
        %v390 = vrot.slane %v388, 7
        %v391 = vshll.u32 %v346, 16
        %v393 = vor.u32 %v390, %v391
        %v394 = vsel %vm378, %v386, %v393
        %v395 = vrot.slane %v390, 4
        %v397 = vshrl.u32 %v347, 16
        %v399 = vrot.slane %v397, 7
        %v400 = vshll.u32 %v347, 16
        %v402 = vor.u32 %v399, %v400
        %v403 = vrot.slane %v399, 4
        %v405 = vshrl.u32 %v348, 16
        %v407 = vrot.slane %v405, 7
        %v408 = vshll.u32 %v348, 16
        %v410 = vor.u32 %v407, %v408
        %v411 = vsel %vm378, %v403, %v410
        %v412 = vrot.slane %v407, 4
        %v414 = vshrl.u32 %v349, 16
        %v416 = vrot.slane %v414, 7
        %v417 = vshll.u32 %v349, 16
        %v419 = vor.u32 %v416, %v417
        %v420 = vrot.slane %v416, 4
        %v422 = vshrl.u32 %v350, 16
        %v424 = vrot.slane %v422, 7
        %v425 = vshll.u32 %v350, 16
        %v427 = vor.u32 %v424, %v425
        %v428 = vsel %vm378, %v420, %v427
        %v429 = vrot.slane %v424, 4
        %v431 = vshrl.u32 %v351, 16
        %v433 = vrot.slane %v431, 7
        %v434 = vshll.u32 %v351, 16
        %v436 = vor.u32 %v433, %v434
        %v437 = vrot.slane %v433, 4
        %v439 = vshrl.u32 %v352, 16
        %v441 = vrot.slane %v439, 7
        %v442 = vshll.u32 %v352, 16
        %v444 = vor.u32 %v441, %v442
        %v445 = vsel %vm378, %v437, %v444
        %v446 = vrot.slane %v441, 4
        %v448 = vshrl.u32 %v353, 16
        %v450 = vrot.slane %v448, 7
        %v451 = vshll.u32 %v353, 16
        %v453 = vor.u32 %v450, %v451
        %v454 = vrot.slane %v450, 4
        %v456 = vshrl.u32 %v354, 16
        %v458 = vrot.slane %v456, 7
        %v459 = vshll.u32 %v354, 16
        %v461 = vor.u32 %v458, %v459
        %v462 = vsel %vm378, %v454, %v461
        %v463 = vrot.slane %v458, 4
        %v465 = vshrl.u32 %v355, 16
        %v467 = vrot.slane %v465, 7
        %v468 = vshll.u32 %v355, 16
        %v470 = vor.u32 %v467, %v468
        %v471 = vrot.slane %v467, 4
        %v473 = vshrl.u32 %v356, 16
        %v475 = vrot.slane %v473, 7
        %v476 = vshll.u32 %v356, 16
        %v478 = vor.u32 %v475, %v476
        %v479 = vsel %vm378, %v471, %v478
        %v480 = vrot.slane %v475, 4
        %v482 = vshrl.u32 %v357, 16
        %v484 = vrot.slane %v482, 7
        %v485 = vshll.u32 %v357, 16
        %v487 = vor.u32 %v484, %v485
        %v488 = vrot.slane %v484, 4
        %v490 = vshrl.u32 %v358, 16
        %v492 = vrot.slane %v490, 7
        %v493 = vshll.u32 %v358, 16
        %v495 = vor.u32 %v492, %v493
        %v496 = vsel %vm378, %v488, %v495
        %v497 = vrot.slane %v492, 4
        %v499 = vshrl.u32 %v359, 16
        %v501 = vrot.slane %v499, 7
        %v502 = vshll.u32 %v359, 16
        %v504 = vor.u32 %v501, %v502
        %v505 = vrot.slane %v501, 4
        %v507 = vshrl.u32 %v360, 16
        %v509 = vrot.slane %v507, 7
        %v510 = vshll.u32 %v360, 16
        %v512 = vor.u32 %v509, %v510
        %v513 = vsel %vm378, %v505, %v512
        %v514 = vrot.slane %v509, 4
        %v516 = vshrl.u32 %v361, 16
        %v518 = vrot.slane %v516, 7
        %v519 = vshll.u32 %v361, 16
        %v521 = vor.u32 %v518, %v519
        %v522 = vrot.slane %v518, 4
        %v524 = vshrl.u32 %v362, 16
        %v526 = vrot.slane %v524, 7
        %v527 = vshll.u32 %v362, 16
        %v529 = vor.u32 %v526, %v527
        %v530 = vsel %vm378, %v522, %v529
        %v531 = vrot.slane %v526, 4
        %v533 = vshrl.u32 %v363, 16
        %v535 = vrot.slane %v533, 7
        %v536 = vshll.u32 %v363, 16
        %v538 = vor.u32 %v535, %v536
        %v539 = vrot.slane %v535, 4
        %v541 = vshrl.u32 %v364, 16
        %v543 = vrot.slane %v541, 7
        %v544 = vshll.u32 %v364, 16
        %v546 = vor.u32 %v543, %v544
        %v547 = vsel %vm378, %v539, %v546
        %v548 = vrot.slane %v543, 4
        %v550 = vshrl.u32 %v365, 16
        %v552 = vrot.slane %v550, 7
        %v553 = vshll.u32 %v365, 16
        %v555 = vor.u32 %v552, %v553
        %v556 = vrot.slane %v552, 4
        %v558 = vshrl.u32 %v366, 16
        %v560 = vrot.slane %v558, 7
        %v561 = vshll.u32 %v366, 16
        %v563 = vor.u32 %v560, %v561
        %v564 = vsel %vm378, %v556, %v563
        %v565 = vrot.slane %v560, 4
        %v567 = vshrl.u32 %v367, 16
        %v569 = vrot.slane %v567, 7
        %v570 = vshll.u32 %v367, 16
        %v572 = vor.u32 %v569, %v570
        %v573 = vrot.slane %v569, 4
        %v575 = vshrl.u32 %v368, 16
        %v577 = vrot.slane %v575, 7
        %v578 = vshll.u32 %v368, 16
        %v580 = vor.u32 %v577, %v578
        %v581 = vsel %vm378, %v573, %v580
        %v582 = vrot.slane %v577, 4
        %v584 = vshrl.u32 %v369, 16
        %v586 = vrot.slane %v584, 7
        %v587 = vshll.u32 %v369, 16
        %v589 = vor.u32 %v586, %v587
        %v590 = vrot.slane %v586, 4
        %v592 = vshrl.u32 %v370, 16
        %v594 = vrot.slane %v592, 7
        %v595 = vshll.u32 %v370, 16
        %v597 = vor.u32 %v594, %v595
        %v598 = vsel %vm378, %v590, %v597
        %v599 = vrot.slane %v594, 4
        %v601 = vshrl.u32 %v371, 16
        %v603 = vrot.slane %v601, 7
        %v604 = vshll.u32 %v371, 16
        %v606 = vor.u32 %v603, %v604
        %v607 = vrot.slane %v603, 4
        %v609 = vshrl.u32 %v372, 16
        %v611 = vrot.slane %v609, 7
        %v612 = vshll.u32 %v372, 16
        %v614 = vor.u32 %v611, %v612
        %v615 = vsel %vm378, %v607, %v614
        %v616 = vrot.slane %v611, 4
        %v618 = vshrl.u32 %v373, 16
        %v620 = vrot.slane %v618, 7
        %v621 = vshll.u32 %v373, 16
        %v623 = vor.u32 %v620, %v621
        %v624 = vrot.slane %v620, 4
        %v626 = vshrl.u32 %v374, 16
        %v628 = vrot.slane %v626, 7
        %v629 = vshll.u32 %v374, 16
        %v631 = vor.u32 %v628, %v629
        %v632 = vsel %vm378, %v624, %v631
        %v633 = vrot.slane %v628, 4
        %v635 = vshrl.u32 %v375, 16
        %v637 = vrot.slane %v635, 7
        %v638 = vshll.u32 %v375, 16
        %v640 = vor.u32 %v637, %v638
        %v641 = vrot.slane %v637, 4
        %v643 = vshrl.u32 %v376, 16
        %v645 = vrot.slane %v643, 7
        %v646 = vshll.u32 %v376, 16
        %v648 = vor.u32 %v645, %v646
        %v649 = vsel %vm378, %v641, %v648
        %v650 = vrot.slane %v645, 4
        %s699 = scalar_lea.vmem [#allocation2], 12
        %vm700 = vcmask 27648
        %vm701 = vmand %vm700, %vm289
        %v702 = vld [vmem:[%s699] sm:$0xf]
        %v703 = vsel %vm701, %v385, %v702
        %704 = vst [vmem:[%s699] sm:$0xf] %v703
        %705 = vst.msk [vmem:[%s699 + $0x4] sm:$0xf] %vm223, %v394
        %v706 = vld [vmem:[%s699 + $0x8] sm:$0x1]
        %v707 = vsel %vm234, %v395, %v706
        %708 = vst [vmem:[%s699 + $0x8] sm:$0x1] %v707
        %v709 = vld [vmem:[%s699 + $0xc] sm:$0xf]
        %v710 = vsel %vm701, %v402, %v709
        %711 = vst [vmem:[%s699 + $0xc] sm:$0xf] %v710
        %712 = vst.msk [vmem:[%s699 + $0x10] sm:$0xf] %vm223, %v411
        %v713 = vld [vmem:[%s699 + $0x14] sm:$0x1]
        %v714 = vsel %vm234, %v412, %v713
        %715 = vst [vmem:[%s699 + $0x14] sm:$0x1] %v714
        %v716 = vld [vmem:[%s699 + $0x18] sm:$0xf]
        %v717 = vsel %vm701, %v419, %v716
        %718 = vst [vmem:[%s699 + $0x18] sm:$0xf] %v717
        %719 = vst.msk [vmem:[%s699 + $0x1c] sm:$0xf] %vm223, %v428
        %v720 = vld [vmem:[%s699 + $0x20] sm:$0x1]
        %v721 = vsel %vm234, %v429, %v720
        %722 = vst [vmem:[%s699 + $0x20] sm:$0x1] %v721
        %v723 = vld [vmem:[%s699 + $0x24] sm:$0xf]
        %v724 = vsel %vm701, %v436, %v723
        %725 = vst [vmem:[%s699 + $0x24] sm:$0xf] %v724
        %726 = vst.msk [vmem:[%s699 + $0x28] sm:$0xf] %vm223, %v445
        %v727 = vld [vmem:[%s699 + $0x2c] sm:$0x1]
        %v728 = vsel %vm234, %v446, %v727
        %729 = vst [vmem:[%s699 + $0x2c] sm:$0x1] %v728
        %v730 = vld [vmem:[%s699 + $0x30] sm:$0xf]
        %v731 = vsel %vm701, %v453, %v730
        %732 = vst [vmem:[%s699 + $0x30] sm:$0xf] %v731
        %733 = vst.msk [vmem:[%s699 + $0x34] sm:$0xf] %vm223, %v462
        %v734 = vld [vmem:[%s699 + $0x38] sm:$0x1]
        %v735 = vsel %vm234, %v463, %v734
        %736 = vst [vmem:[%s699 + $0x38] sm:$0x1] %v735
        %v737 = vld [vmem:[%s699 + $0x3c] sm:$0xf]
        %v738 = vsel %vm701, %v470, %v737
        %739 = vst [vmem:[%s699 + $0x3c] sm:$0xf] %v738
        %740 = vst.msk [vmem:[%s699 + $0x40] sm:$0xf] %vm223, %v479
        %v741 = vld [vmem:[%s699 + $0x44] sm:$0x1]
        %v742 = vsel %vm234, %v480, %v741
        %743 = vst [vmem:[%s699 + $0x44] sm:$0x1] %v742
        %v744 = vld [vmem:[%s699 + $0x48] sm:$0xf]
        %v745 = vsel %vm701, %v487, %v744
        %746 = vst [vmem:[%s699 + $0x48] sm:$0xf] %v745
        %747 = vst.msk [vmem:[%s699 + $0x4c] sm:$0xf] %vm223, %v496
        %v748 = vld [vmem:[%s699 + $0x50] sm:$0x1]
        %v749 = vsel %vm234, %v497, %v748
        %750 = vst [vmem:[%s699 + $0x50] sm:$0x1] %v749
        %v751 = vld [vmem:[%s699 + $0x54] sm:$0xf]
        %v752 = vsel %vm701, %v504, %v751
        %753 = vst [vmem:[%s699 + $0x54] sm:$0xf] %v752
        %754 = vst.msk [vmem:[%s699 + $0x58] sm:$0xf] %vm223, %v513
        %v755 = vld [vmem:[%s699 + $0x5c] sm:$0x1]
        %v756 = vsel %vm234, %v514, %v755
        %757 = vst [vmem:[%s699 + $0x5c] sm:$0x1] %v756
        %v758 = vld [vmem:[%s699 + $0x60] sm:$0xf]
        %v759 = vsel %vm701, %v521, %v758
        %760 = vst [vmem:[%s699 + $0x60] sm:$0xf] %v759
        %761 = vst.msk [vmem:[%s699 + $0x64] sm:$0xf] %vm223, %v530
        %v762 = vld [vmem:[%s699 + $0x68] sm:$0x1]
        %v763 = vsel %vm234, %v531, %v762
        %764 = vst [vmem:[%s699 + $0x68] sm:$0x1] %v763
        %v765 = vld [vmem:[%s699 + $0x6c] sm:$0xf]
        %v766 = vsel %vm701, %v538, %v765
        %767 = vst [vmem:[%s699 + $0x6c] sm:$0xf] %v766
        %768 = vst.msk [vmem:[%s699 + $0x70] sm:$0xf] %vm223, %v547
        %v769 = vld [vmem:[%s699 + $0x74] sm:$0x1]
        %v770 = vsel %vm234, %v548, %v769
        %771 = vst [vmem:[%s699 + $0x74] sm:$0x1] %v770
        %v772 = vld [vmem:[%s699 + $0x78] sm:$0xf]
        %v773 = vsel %vm701, %v555, %v772
        %774 = vst [vmem:[%s699 + $0x78] sm:$0xf] %v773
        %775 = vst.msk [vmem:[%s699 + $0x7c] sm:$0xf] %vm223, %v564
        %v776 = vld [vmem:[%s699 + $0x80] sm:$0x1]
        %v777 = vsel %vm234, %v565, %v776
        %778 = vst [vmem:[%s699 + $0x80] sm:$0x1] %v777
        %v779 = vld [vmem:[%s699 + $0x84] sm:$0xf]
        %v780 = vsel %vm701, %v572, %v779
        %781 = vst [vmem:[%s699 + $0x84] sm:$0xf] %v780
        %782 = vst.msk [vmem:[%s699 + $0x88] sm:$0xf] %vm223, %v581
        %v783 = vld [vmem:[%s699 + $0x8c] sm:$0x1]
        %v784 = vsel %vm234, %v582, %v783
        %785 = vst [vmem:[%s699 + $0x8c] sm:$0x1] %v784
        %v786 = vld [vmem:[%s699 + $0x90] sm:$0xf]
        %v787 = vsel %vm701, %v589, %v786
        %788 = vst [vmem:[%s699 + $0x90] sm:$0xf] %v787
        %789 = vst.msk [vmem:[%s699 + $0x94] sm:$0xf] %vm223, %v598
        %v790 = vld [vmem:[%s699 + $0x98] sm:$0x1]
        %v791 = vsel %vm234, %v599, %v790
        %792 = vst [vmem:[%s699 + $0x98] sm:$0x1] %v791
        %v793 = vld [vmem:[%s699 + $0x9c] sm:$0xf]
        %v794 = vsel %vm701, %v606, %v793
        %795 = vst [vmem:[%s699 + $0x9c] sm:$0xf] %v794
        %796 = vst.msk [vmem:[%s699 + $0xa0] sm:$0xf] %vm223, %v615
        %v797 = vld [vmem:[%s699 + $0xa4] sm:$0x1]
        %v798 = vsel %vm234, %v616, %v797
        %799 = vst [vmem:[%s699 + $0xa4] sm:$0x1] %v798
        %v800 = vld [vmem:[%s699 + $0xa8] sm:$0xf]
        %v801 = vsel %vm701, %v623, %v800
        %802 = vst [vmem:[%s699 + $0xa8] sm:$0xf] %v801
        %803 = vst.msk [vmem:[%s699 + $0xac] sm:$0xf] %vm223, %v632
        %v804 = vld [vmem:[%s699 + $0xb0] sm:$0x1]
        %v805 = vsel %vm234, %v633, %v804
        %806 = vst [vmem:[%s699 + $0xb0] sm:$0x1] %v805
        %v807 = vld [vmem:[%s699 + $0xb4] sm:$0xf]
        %v808 = vsel %vm701, %v640, %v807
        %809 = vst [vmem:[%s699 + $0xb4] sm:$0xf] %v808
        %810 = vst.msk [vmem:[%s699 + $0xb8] sm:$0xf] %vm223, %v649
        %v811 = vld [vmem:[%s699 + $0xbc] sm:$0x1]
        %v812 = vsel %vm234, %v650, %v811
        %813 = vst [vmem:[%s699 + $0xbc] sm:$0x1] %v812
        loop: start=0, step=1, limit=2
        $region41: #{inductive_neck_forward.1} parent=39 // loop_pre_header
          _
        $region42: #{inductive_neck_forward.1} parent=39 // loop_header
          %s815 = sphi 0, %s819
          %p816 = scmp.ge.s32.totalorder %s815, 2
        $region43: #{inductive_neck_forward.1} parent=39 // loop_header_branch
          %818 = sbr.rel (%p816) target = $region47
        $region44: #{inductive_neck_forward.1} parent=39 // loop_body
          %v820 = vld [vmem:[#allocation2] sm:$0xf]
          %v821 = vld [vmem:[#allocation2 + $0x4] sm:$0xf]
          %v822 = vld [vmem:[#allocation2 + $0xc] sm:$0xf]
          %v823 = vld [vmem:[#allocation2 + $0x10] sm:$0xf]
          %v824 = vld [vmem:[#allocation2 + $0x18] sm:$0xf]
          %v825 = vld [vmem:[#allocation2 + $0x1c] sm:$0xf]
          %v826 = vld [vmem:[#allocation2 + $0x24] sm:$0xf]
          %v827 = vld [vmem:[#allocation2 + $0x28] sm:$0xf]
          %v828 = vld [vmem:[#allocation2 + $0x30] sm:$0xf]
          %v829 = vld [vmem:[#allocation2 + $0x34] sm:$0xf]
          %v830 = vld [vmem:[#allocation2 + $0x3c] sm:$0xf]
          %v831 = vld [vmem:[#allocation2 + $0x40] sm:$0xf]
          %v832 = vld [vmem:[#allocation2 + $0x48] sm:$0xf]
          %v833 = vld [vmem:[#allocation2 + $0x4c] sm:$0xf]
          %v834 = vld [vmem:[#allocation2 + $0x54] sm:$0xf]
          %v835 = vld [vmem:[#allocation2 + $0x58] sm:$0xf]
          %v836 = vld [vmem:[#allocation2 + $0x60] sm:$0xf]
          %v837 = vld [vmem:[#allocation2 + $0x64] sm:$0xf]
          %v838 = vld [vmem:[#allocation2 + $0x6c] sm:$0xf]
          %v839 = vld [vmem:[#allocation2 + $0x70] sm:$0xf]
          %v840 = vld [vmem:[#allocation2 + $0x78] sm:$0xf]
          %v841 = vld [vmem:[#allocation2 + $0x7c] sm:$0xf]
          %v842 = vld [vmem:[#allocation2 + $0x84] sm:$0xf]
          %v843 = vld [vmem:[#allocation2 + $0x88] sm:$0xf]
          %v844 = vld [vmem:[#allocation2 + $0x90] sm:$0xf]
          %v845 = vld [vmem:[#allocation2 + $0x94] sm:$0xf]
          %v846 = vld [vmem:[#allocation2 + $0x9c] sm:$0xf]
          %v847 = vld [vmem:[#allocation2 + $0xa0] sm:$0xf]
          %v848 = vld [vmem:[#allocation2 + $0xa8] sm:$0xf]
          %v849 = vld [vmem:[#allocation2 + $0xac] sm:$0xf]
          %v850 = vld [vmem:[#allocation2 + $0xb4] sm:$0xf]
          %v851 = vld [vmem:[#allocation2 + $0xb8] sm:$0xf]
          %s852 = smul.u32 %s815, 5
          %s853 = smul.addr %s852, 4
          %s854 = scalar_lea.vmem %s1, %s853
          %v855 = vld [vmem:[%s854] sm:$0x3]
          %v856 = vld [vmem:[#allocation2 + $0x8] sm:$0x1]
          %v857 = vld [vmem:[#allocation2 + $0x14] sm:$0x1]
          %v858 = vld [vmem:[#allocation2 + $0x20] sm:$0x1]
          %v859 = vld [vmem:[#allocation2 + $0x2c] sm:$0x1]
          %v860 = vld [vmem:[#allocation2 + $0x38] sm:$0x1]
          %v861 = vld [vmem:[#allocation2 + $0x44] sm:$0x1]
          %v862 = vld [vmem:[#allocation2 + $0x50] sm:$0x1]
          %v863 = vld [vmem:[#allocation2 + $0x5c] sm:$0x1]
          %v864 = vld [vmem:[#allocation2 + $0x68] sm:$0x1]
          %v865 = vld [vmem:[#allocation2 + $0x74] sm:$0x1]
          %v866 = vld [vmem:[#allocation2 + $0x80] sm:$0x1]
          %v867 = vld [vmem:[#allocation2 + $0x8c] sm:$0x1]
          %v868 = vld [vmem:[#allocation2 + $0x98] sm:$0x1]
          %v869 = vld [vmem:[#allocation2 + $0xa4] sm:$0x1]
          %v870 = vld [vmem:[#allocation2 + $0xb0] sm:$0x1]
          %v871 = vld [vmem:[#allocation2 + $0xbc] sm:$0x1]
          %vm872 = vsmask.f32 3328
          %vm873 = vsmask.f32 7440
          %vm874 = vmor %vm872, %vm873
          %v876 = vshrl.u32 %v820, 16
          %v878 = vrot.slane %v876, 4
          %v879 = vshll.u32 %v820, 16
          %v881 = vrot.slane %v879, 5
          %v882 = vor.u32 %v878, %v881
          %v883 = vrot.slane %v882, 4
          %v885 = vshll.u32 %v821, 16
          %v887 = vrot.slane %v885, 5
          %v888 = vsel %vm874, %v883, %v887
          %v889 = vshrl.u32 %v821, 16
          %v891 = vrot.slane %v889, 4
          %v892 = vor.u32 %v891, %v887
          %v893 = vrot.slane %v892, 4
          %v895 = vshll.u32 %v856, 16
          %v897 = vrot.slane %v895, 5
          %v898 = vsel %vm874, %v893, %v897
          %v900 = vshrl.u32 %v822, 16
          %v902 = vrot.slane %v900, 4
          %v903 = vshll.u32 %v822, 16
          %v905 = vrot.slane %v903, 5
          %v906 = vor.u32 %v902, %v905
          %v907 = vrot.slane %v906, 4
          %v909 = vshll.u32 %v823, 16
          %v911 = vrot.slane %v909, 5
          %v912 = vsel %vm874, %v907, %v911
          %v913 = vshrl.u32 %v823, 16
          %v915 = vrot.slane %v913, 4
          %v916 = vor.u32 %v915, %v911
          %v917 = vrot.slane %v916, 4
          %v919 = vshll.u32 %v857, 16
          %v921 = vrot.slane %v919, 5
          %v922 = vsel %vm874, %v917, %v921
          %v924 = vshrl.u32 %v824, 16
          %v926 = vrot.slane %v924, 4
          %v927 = vshll.u32 %v824, 16
          %v929 = vrot.slane %v927, 5
          %v930 = vor.u32 %v926, %v929
          %v931 = vrot.slane %v930, 4
          %v933 = vshll.u32 %v825, 16
          %v935 = vrot.slane %v933, 5
          %v936 = vsel %vm874, %v931, %v935
          %v937 = vshrl.u32 %v825, 16
          %v939 = vrot.slane %v937, 4
          %v940 = vor.u32 %v939, %v935
          %v941 = vrot.slane %v940, 4
          %v943 = vshll.u32 %v858, 16
          %v945 = vrot.slane %v943, 5
          %v946 = vsel %vm874, %v941, %v945
          %v948 = vshrl.u32 %v826, 16
          %v950 = vrot.slane %v948, 4
          %v951 = vshll.u32 %v826, 16
          %v953 = vrot.slane %v951, 5
          %v954 = vor.u32 %v950, %v953
          %v955 = vrot.slane %v954, 4
          %v957 = vshll.u32 %v827, 16
          %v959 = vrot.slane %v957, 5
          %v960 = vsel %vm874, %v955, %v959
          %v961 = vshrl.u32 %v827, 16
          %v963 = vrot.slane %v961, 4
          %v964 = vor.u32 %v963, %v959
          %v965 = vrot.slane %v964, 4
          %v967 = vshll.u32 %v859, 16
          %v969 = vrot.slane %v967, 5
          %v970 = vsel %vm874, %v965, %v969
          %v972 = vshrl.u32 %v828, 16
          %v974 = vrot.slane %v972, 4
          %v975 = vshll.u32 %v828, 16
          %v977 = vrot.slane %v975, 5
          %v978 = vor.u32 %v974, %v977
          %v979 = vrot.slane %v978, 4
          %v981 = vshll.u32 %v829, 16
          %v983 = vrot.slane %v981, 5
          %v984 = vsel %vm874, %v979, %v983
          %v985 = vshrl.u32 %v829, 16
          %v987 = vrot.slane %v985, 4
          %v988 = vor.u32 %v987, %v983
          %v989 = vrot.slane %v988, 4
          %v991 = vshll.u32 %v860, 16
          %v993 = vrot.slane %v991, 5
          %v994 = vsel %vm874, %v989, %v993
          %v996 = vshrl.u32 %v830, 16
          %v998 = vrot.slane %v996, 4
          %v999 = vshll.u32 %v830, 16
          %v1001 = vrot.slane %v999, 5
          %v1002 = vor.u32 %v998, %v1001
          %v1003 = vrot.slane %v1002, 4
          %v1005 = vshll.u32 %v831, 16
          %v1007 = vrot.slane %v1005, 5
          %v1008 = vsel %vm874, %v1003, %v1007
          %v1009 = vshrl.u32 %v831, 16
          %v1011 = vrot.slane %v1009, 4
          %v1012 = vor.u32 %v1011, %v1007
          %v1013 = vrot.slane %v1012, 4
          %v1015 = vshll.u32 %v861, 16
          %v1017 = vrot.slane %v1015, 5
          %v1018 = vsel %vm874, %v1013, %v1017
          %v1020 = vshrl.u32 %v832, 16
          %v1022 = vrot.slane %v1020, 4
          %v1023 = vshll.u32 %v832, 16
          %v1025 = vrot.slane %v1023, 5
          %v1026 = vor.u32 %v1022, %v1025
          %v1027 = vrot.slane %v1026, 4
          %v1029 = vshll.u32 %v833, 16
          %v1031 = vrot.slane %v1029, 5
          %v1032 = vsel %vm874, %v1027, %v1031
          %v1033 = vshrl.u32 %v833, 16
          %v1035 = vrot.slane %v1033, 4
          %v1036 = vor.u32 %v1035, %v1031
          %v1037 = vrot.slane %v1036, 4
          %v1039 = vshll.u32 %v862, 16
          %v1041 = vrot.slane %v1039, 5
          %v1042 = vsel %vm874, %v1037, %v1041
          %v1044 = vshrl.u32 %v834, 16
          %v1046 = vrot.slane %v1044, 4
          %v1047 = vshll.u32 %v834, 16
          %v1049 = vrot.slane %v1047, 5
          %v1050 = vor.u32 %v1046, %v1049
          %v1051 = vrot.slane %v1050, 4
          %v1053 = vshll.u32 %v835, 16
          %v1055 = vrot.slane %v1053, 5
          %v1056 = vsel %vm874, %v1051, %v1055
          %v1057 = vshrl.u32 %v835, 16
          %v1059 = vrot.slane %v1057, 4
          %v1060 = vor.u32 %v1059, %v1055
          %v1061 = vrot.slane %v1060, 4
          %v1063 = vshll.u32 %v863, 16
          %v1065 = vrot.slane %v1063, 5
          %v1066 = vsel %vm874, %v1061, %v1065
          %v1068 = vshrl.u32 %v836, 16
          %v1070 = vrot.slane %v1068, 4
          %v1071 = vshll.u32 %v836, 16
          %v1073 = vrot.slane %v1071, 5
          %v1074 = vor.u32 %v1070, %v1073
          %v1075 = vrot.slane %v1074, 4
          %v1077 = vshll.u32 %v837, 16
          %v1079 = vrot.slane %v1077, 5
          %v1080 = vsel %vm874, %v1075, %v1079
          %v1081 = vshrl.u32 %v837, 16
          %v1083 = vrot.slane %v1081, 4
          %v1084 = vor.u32 %v1083, %v1079
          %v1085 = vrot.slane %v1084, 4
          %v1087 = vshll.u32 %v864, 16
          %v1089 = vrot.slane %v1087, 5
          %v1090 = vsel %vm874, %v1085, %v1089
          %v1092 = vshrl.u32 %v838, 16
          %v1094 = vrot.slane %v1092, 4
          %v1095 = vshll.u32 %v838, 16
          %v1097 = vrot.slane %v1095, 5
          %v1098 = vor.u32 %v1094, %v1097
          %v1099 = vrot.slane %v1098, 4
          %v1101 = vshll.u32 %v839, 16
          %v1103 = vrot.slane %v1101, 5
          %v1104 = vsel %vm874, %v1099, %v1103
          %v1105 = vshrl.u32 %v839, 16
          %v1107 = vrot.slane %v1105, 4
          %v1108 = vor.u32 %v1107, %v1103
          %v1109 = vrot.slane %v1108, 4
          %v1111 = vshll.u32 %v865, 16
          %v1113 = vrot.slane %v1111, 5
          %v1114 = vsel %vm874, %v1109, %v1113
          %v1116 = vshrl.u32 %v840, 16
          %v1118 = vrot.slane %v1116, 4
          %v1119 = vshll.u32 %v840, 16
          %v1121 = vrot.slane %v1119, 5
          %v1122 = vor.u32 %v1118, %v1121
          %v1123 = vrot.slane %v1122, 4
          %v1125 = vshll.u32 %v841, 16
          %v1127 = vrot.slane %v1125, 5
          %v1128 = vsel %vm874, %v1123, %v1127
          %v1129 = vshrl.u32 %v841, 16
          %v1131 = vrot.slane %v1129, 4
          %v1132 = vor.u32 %v1131, %v1127
          %v1133 = vrot.slane %v1132, 4
          %v1135 = vshll.u32 %v866, 16
          %v1137 = vrot.slane %v1135, 5
          %v1138 = vsel %vm874, %v1133, %v1137
          %v1140 = vshrl.u32 %v842, 16
          %v1142 = vrot.slane %v1140, 4
          %v1143 = vshll.u32 %v842, 16
          %v1145 = vrot.slane %v1143, 5
          %v1146 = vor.u32 %v1142, %v1145
          %v1147 = vrot.slane %v1146, 4
          %v1149 = vshll.u32 %v843, 16
          %v1151 = vrot.slane %v1149, 5
          %v1152 = vsel %vm874, %v1147, %v1151
          %v1153 = vshrl.u32 %v843, 16
          %v1155 = vrot.slane %v1153, 4
          %v1156 = vor.u32 %v1155, %v1151
          %v1157 = vrot.slane %v1156, 4
          %v1159 = vshll.u32 %v867, 16
          %v1161 = vrot.slane %v1159, 5
          %v1162 = vsel %vm874, %v1157, %v1161
          %v1164 = vshrl.u32 %v844, 16
          %v1166 = vrot.slane %v1164, 4
          %v1167 = vshll.u32 %v844, 16
          %v1169 = vrot.slane %v1167, 5
          %v1170 = vor.u32 %v1166, %v1169
          %v1171 = vrot.slane %v1170, 4
          %v1173 = vshll.u32 %v845, 16
          %v1175 = vrot.slane %v1173, 5
          %v1176 = vsel %vm874, %v1171, %v1175
          %v1177 = vshrl.u32 %v845, 16
          %v1179 = vrot.slane %v1177, 4
          %v1180 = vor.u32 %v1179, %v1175
          %v1181 = vrot.slane %v1180, 4
          %v1183 = vshll.u32 %v868, 16
          %v1185 = vrot.slane %v1183, 5
          %v1186 = vsel %vm874, %v1181, %v1185
          %v1188 = vshrl.u32 %v846, 16
          %v1190 = vrot.slane %v1188, 4
          %v1191 = vshll.u32 %v846, 16
          %v1193 = vrot.slane %v1191, 5
          %v1194 = vor.u32 %v1190, %v1193
          %v1195 = vrot.slane %v1194, 4
          %v1197 = vshll.u32 %v847, 16
          %v1199 = vrot.slane %v1197, 5
          %v1200 = vsel %vm874, %v1195, %v1199
          %v1201 = vshrl.u32 %v847, 16
          %v1203 = vrot.slane %v1201, 4
          %v1204 = vor.u32 %v1203, %v1199
          %v1205 = vrot.slane %v1204, 4
          %v1207 = vshll.u32 %v869, 16
          %v1209 = vrot.slane %v1207, 5
          %v1210 = vsel %vm874, %v1205, %v1209
          %v1212 = vshrl.u32 %v848, 16
          %v1214 = vrot.slane %v1212, 4
          %v1215 = vshll.u32 %v848, 16
          %v1217 = vrot.slane %v1215, 5
          %v1218 = vor.u32 %v1214, %v1217
          %v1219 = vrot.slane %v1218, 4
          %v1221 = vshll.u32 %v849, 16
          %v1223 = vrot.slane %v1221, 5
          %v1224 = vsel %vm874, %v1219, %v1223
          %v1225 = vshrl.u32 %v849, 16
          %v1227 = vrot.slane %v1225, 4
          %v1228 = vor.u32 %v1227, %v1223
          %v1229 = vrot.slane %v1228, 4
          %v1231 = vshll.u32 %v870, 16
          %v1233 = vrot.slane %v1231, 5
          %v1234 = vsel %vm874, %v1229, %v1233
          %v1236 = vshrl.u32 %v850, 16
          %v1238 = vrot.slane %v1236, 4
          %v1239 = vshll.u32 %v850, 16
          %v1241 = vrot.slane %v1239, 5
          %v1242 = vor.u32 %v1238, %v1241
          %v1243 = vrot.slane %v1242, 4
          %v1245 = vshll.u32 %v851, 16
          %v1247 = vrot.slane %v1245, 5
          %v1248 = vsel %vm874, %v1243, %v1247
          %v1249 = vshrl.u32 %v851, 16
          %v1251 = vrot.slane %v1249, 4
          %v1252 = vor.u32 %v1251, %v1247
          %v1253 = vrot.slane %v1252, 4
          %v1255 = vshll.u32 %v871, 16
          %v1257 = vrot.slane %v1255, 5
          %v1258 = vsel %vm874, %v1253, %v1257
          %v1259 = vld [vmem:[%s854] sm:$0xc]
          %v1260 = vunpack.c.l.b16 %v888
          %v1261 = vunpack.c.l.b16 %v898
          %v1262 = vunpack.c.l.b16 %v912
          %v1263 = vunpack.c.l.b16 %v922
          %v1264 = vunpack.c.l.b16 %v936
          %v1265 = vunpack.c.l.b16 %v946
          %v1266 = vunpack.c.l.b16 %v960
          %v1267 = vunpack.c.l.b16 %v970
          %v1268 = vunpack.c.l.b16 %v984
          %v1269 = vunpack.c.l.b16 %v994
          %v1270 = vunpack.c.l.b16 %v1008
          %v1271 = vunpack.c.l.b16 %v1018
          %v1272 = vunpack.c.l.b16 %v1032
          %v1273 = vunpack.c.l.b16 %v1042
          %v1274 = vunpack.c.l.b16 %v1056
          %v1275 = vunpack.c.l.b16 %v1066
          %v1276 = vunpack.c.l.b16 %v1080
          %v1277 = vunpack.c.l.b16 %v1090
          %v1278 = vunpack.c.l.b16 %v1104
          %v1279 = vunpack.c.l.b16 %v1114
          %v1280 = vunpack.c.l.b16 %v1128
          %v1281 = vunpack.c.l.b16 %v1138
          %v1282 = vunpack.c.l.b16 %v1152
          %v1283 = vunpack.c.l.b16 %v1162
          %v1284 = vunpack.c.l.b16 %v1176
          %v1285 = vunpack.c.l.b16 %v1186
          %v1286 = vunpack.c.l.b16 %v1200
          %v1287 = vunpack.c.l.b16 %v1210
          %v1288 = vunpack.c.l.b16 %v1224
          %v1289 = vunpack.c.l.b16 %v1234
          %v1290 = vunpack.c.l.b16 %v1248
          %v1291 = vunpack.c.l.b16 %v1258
          %v1292 = vpack.c.b16 %v1261, %v1260
          %v1293 = vpack.c.b16 %v1263, %v1262
          %v1294 = vpack.c.b16 %v1265, %v1264
          %v1295 = vpack.c.b16 %v1267, %v1266
          %v1296 = vpack.c.b16 %v1269, %v1268
          %v1297 = vpack.c.b16 %v1271, %v1270
          %v1298 = vpack.c.b16 %v1273, %v1272
          %v1299 = vpack.c.b16 %v1275, %v1274
          %v1300 = vpack.c.b16 %v1277, %v1276
          %v1301 = vpack.c.b16 %v1279, %v1278
          %v1302 = vpack.c.b16 %v1281, %v1280
          %v1303 = vpack.c.b16 %v1283, %v1282
          %v1304 = vpack.c.b16 %v1285, %v1284
          %v1305 = vpack.c.b16 %v1287, %v1286
          %v1306 = vpack.c.b16 %v1289, %v1288
          %v1307 = vpack.c.b16 %v1291, %v1290
          %v1309 = vunpack.c.l.b16 %v1259
          %v1310 = vpack.c.b16 %v1309, %v1309
          %v1311 = vrot.slane %v1310, 2
          %vm1312 = vcmask 31744
          %v1314 = vsel %vm1312, %v1292, 0
          %v1317 = vsel %vm1312, %v1293, 0
          %v1320 = vsel %vm1312, %v1294, 0
          %v1323 = vsel %vm1312, %v1295, 0
          %v1326 = vsel %vm1312, %v1296, 0
          %v1329 = vsel %vm1312, %v1297, 0
          %v1332 = vsel %vm1312, %v1298, 0
          %v1335 = vsel %vm1312, %v1299, 0
          %v1338 = vsel %vm1312, %v1300, 0
          %v1341 = vsel %vm1312, %v1301, 0
          %v1344 = vsel %vm1312, %v1302, 0
          %v1347 = vsel %vm1312, %v1303, 0
          %v1350 = vsel %vm1312, %v1304, 0
          %v1353 = vsel %vm1312, %v1305, 0
          %v1356 = vsel %vm1312, %v1306, 0
          %v1359 = vsel %vm1312, %v1307, 0
          %vm1361 = vcmask 1041408
          %v1363 = vsel %vm1361, %v1311, 0
          %1365 = vmatpush.bf16.msra.mxu0 0
          %1366 = vmatpush.bf16.msra.mxu0 0
          %1367 = vmatpush.bf16.msra.mxu0 0
          %1368 = vmatpush.bf16.msra.mxu0 0
          %1369 = vmatpush.bf16.msra.mxu0 0
          %1370 = vmatpush.bf16.msra.mxu0 0
          %1371 = vmatpush.bf16.msra.mxu0 0
          %1372 = vmatpush.bf16.msra.mxu0 %v1363
          %1373 = vmatmul.bf16.gmra.mxu0 %v1314
          %v1374 = vpop.f32.mrf.mxu0
          %v1375 = vadd.f32 0.0, %v1374
          %v1376 = vpop.f32.mrf.mxu0
          %v1377 = vadd.f32 0.0, %v1376
          %1378 = vmatmul.bf16.gmra.mxu0 %v1317
          %v1379 = vpop.f32.mrf.mxu0
          %v1380 = vadd.f32 0.0, %v1379
          %v1381 = vpop.f32.mrf.mxu0
          %v1382 = vadd.f32 0.0, %v1381
          %1383 = vmatmul.bf16.gmra.mxu0 %v1320
          %v1384 = vpop.f32.mrf.mxu0
          %v1385 = vadd.f32 0.0, %v1384
          %v1386 = vpop.f32.mrf.mxu0
          %v1387 = vadd.f32 0.0, %v1386
          %1388 = vmatmul.bf16.gmra.mxu0 %v1323
          %v1389 = vpop.f32.mrf.mxu0
          %v1390 = vadd.f32 0.0, %v1389
          %v1391 = vpop.f32.mrf.mxu0
          %v1392 = vadd.f32 0.0, %v1391
          %1393 = vmatmul.bf16.gmra.mxu0 %v1326
          %v1394 = vpop.f32.mrf.mxu0
          %v1395 = vadd.f32 0.0, %v1394
          %v1396 = vpop.f32.mrf.mxu0
          %v1397 = vadd.f32 0.0, %v1396
          %1398 = vmatmul.bf16.gmra.mxu0 %v1329
          %v1399 = vpop.f32.mrf.mxu0
          %v1400 = vadd.f32 0.0, %v1399
          %v1401 = vpop.f32.mrf.mxu0
          %v1402 = vadd.f32 0.0, %v1401
          %1403 = vmatmul.bf16.gmra.mxu0 %v1332
          %v1404 = vpop.f32.mrf.mxu0
          %v1405 = vadd.f32 0.0, %v1404
          %v1406 = vpop.f32.mrf.mxu0
          %v1407 = vadd.f32 0.0, %v1406
          %1408 = vmatmul.bf16.gmra.mxu0 %v1335
          %v1409 = vpop.f32.mrf.mxu0
          %v1410 = vadd.f32 0.0, %v1409
          %v1411 = vpop.f32.mrf.mxu0
          %v1412 = vadd.f32 0.0, %v1411
          %1413 = vmatmul.bf16.gmra.mxu0 %v1338
          %v1414 = vpop.f32.mrf.mxu0
          %v1415 = vadd.f32 0.0, %v1414
          %v1416 = vpop.f32.mrf.mxu0
          %v1417 = vadd.f32 0.0, %v1416
          %1418 = vmatmul.bf16.gmra.mxu0 %v1341
          %v1419 = vpop.f32.mrf.mxu0
          %v1420 = vadd.f32 0.0, %v1419
          %v1421 = vpop.f32.mrf.mxu0
          %v1422 = vadd.f32 0.0, %v1421
          %1423 = vmatmul.bf16.gmra.mxu0 %v1344
          %v1424 = vpop.f32.mrf.mxu0
          %v1425 = vadd.f32 0.0, %v1424
          %v1426 = vpop.f32.mrf.mxu0
          %v1427 = vadd.f32 0.0, %v1426
          %1428 = vmatmul.bf16.gmra.mxu0 %v1347
          %v1429 = vpop.f32.mrf.mxu0
          %v1430 = vadd.f32 0.0, %v1429
          %v1431 = vpop.f32.mrf.mxu0
          %v1432 = vadd.f32 0.0, %v1431
          %1433 = vmatmul.bf16.gmra.mxu0 %v1350
          %v1434 = vpop.f32.mrf.mxu0
          %v1435 = vadd.f32 0.0, %v1434
          %v1436 = vpop.f32.mrf.mxu0
          %v1437 = vadd.f32 0.0, %v1436
          %1438 = vmatmul.bf16.gmra.mxu0 %v1353
          %v1439 = vpop.f32.mrf.mxu0
          %v1440 = vadd.f32 0.0, %v1439
          %v1441 = vpop.f32.mrf.mxu0
          %v1442 = vadd.f32 0.0, %v1441
          %1443 = vmatmul.bf16.gmra.mxu0 %v1356
          %v1444 = vpop.f32.mrf.mxu0
          %v1445 = vadd.f32 0.0, %v1444
          %v1446 = vpop.f32.mrf.mxu0
          %v1447 = vadd.f32 0.0, %v1446
          %1448 = vmatmul.bf16.gmra.mxu0 %v1359
          %v1449 = vpop.f32.mrf.mxu0
          %v1450 = vadd.f32 0.0, %v1449
          %v1451 = vpop.f32.mrf.mxu0
          %v1452 = vadd.f32 0.0, %v1451
          %1453 = vdwg.mxu0
          %v1486 = vunpack.c.l.b16 %v820
          %v1487 = vunpack.c.l.b16 %v821
          %v1488 = vunpack.c.l.b16 %v822
          %v1489 = vunpack.c.l.b16 %v823
          %v1490 = vunpack.c.l.b16 %v824
          %v1491 = vunpack.c.l.b16 %v825
          %v1492 = vunpack.c.l.b16 %v826
          %v1493 = vunpack.c.l.b16 %v827
          %v1494 = vunpack.c.l.b16 %v828
          %v1495 = vunpack.c.l.b16 %v829
          %v1496 = vunpack.c.l.b16 %v830
          %v1497 = vunpack.c.l.b16 %v831
          %v1498 = vunpack.c.l.b16 %v832
          %v1499 = vunpack.c.l.b16 %v833
          %v1500 = vunpack.c.l.b16 %v834
          %v1501 = vunpack.c.l.b16 %v835
          %v1502 = vunpack.c.l.b16 %v836
          %v1503 = vunpack.c.l.b16 %v837
          %v1504 = vunpack.c.l.b16 %v838
          %v1505 = vunpack.c.l.b16 %v839
          %v1506 = vunpack.c.l.b16 %v840
          %v1507 = vunpack.c.l.b16 %v841
          %v1508 = vunpack.c.l.b16 %v842
          %v1509 = vunpack.c.l.b16 %v843
          %v1510 = vunpack.c.l.b16 %v844
          %v1511 = vunpack.c.l.b16 %v845
          %v1512 = vunpack.c.l.b16 %v846
          %v1513 = vunpack.c.l.b16 %v847
          %v1514 = vunpack.c.l.b16 %v848
          %v1515 = vunpack.c.l.b16 %v849
          %v1516 = vunpack.c.l.b16 %v850
          %v1517 = vunpack.c.l.b16 %v851
          %v1518 = vpack.c.b16 %v1487, %v1486
          %v1519 = vpack.c.b16 %v1489, %v1488
          %v1520 = vpack.c.b16 %v1491, %v1490
          %v1521 = vpack.c.b16 %v1493, %v1492
          %v1522 = vpack.c.b16 %v1495, %v1494
          %v1523 = vpack.c.b16 %v1497, %v1496
          %v1524 = vpack.c.b16 %v1499, %v1498
          %v1525 = vpack.c.b16 %v1501, %v1500
          %v1526 = vpack.c.b16 %v1503, %v1502
          %v1527 = vpack.c.b16 %v1505, %v1504
          %v1528 = vpack.c.b16 %v1507, %v1506
          %v1529 = vpack.c.b16 %v1509, %v1508
          %v1530 = vpack.c.b16 %v1511, %v1510
          %v1531 = vpack.c.b16 %v1513, %v1512
          %v1532 = vpack.c.b16 %v1515, %v1514
          %v1533 = vpack.c.b16 %v1517, %v1516
          %v1535 = vsel %vm1312, %v1518, 0
          %v1538 = vsel %vm1312, %v1519, 0
          %v1541 = vsel %vm1312, %v1520, 0
          %v1544 = vsel %vm1312, %v1521, 0
          %v1547 = vsel %vm1312, %v1522, 0
          %v1550 = vsel %vm1312, %v1523, 0
          %v1553 = vsel %vm1312, %v1524, 0
          %v1556 = vsel %vm1312, %v1525, 0
          %v1559 = vsel %vm1312, %v1526, 0
          %v1562 = vsel %vm1312, %v1527, 0
          %v1565 = vsel %vm1312, %v1528, 0
          %v1568 = vsel %vm1312, %v1529, 0
          %v1571 = vsel %vm1312, %v1530, 0
          %v1574 = vsel %vm1312, %v1531, 0
          %v1577 = vsel %vm1312, %v1532, 0
          %v1580 = vsel %vm1312, %v1533, 0
          %v1583 = vsel %vm1361, %v855, 0
          %1585 = vmatpush.bf16.msra.mxu0 0
          %1586 = vmatpush.bf16.msra.mxu0 0
          %1587 = vmatpush.bf16.msra.mxu0 0
          %1588 = vmatpush.bf16.msra.mxu0 0
          %1589 = vmatpush.bf16.msra.mxu0 0
          %1590 = vmatpush.bf16.msra.mxu0 0
          %1591 = vmatpush.bf16.msra.mxu0 0
          %1592 = vmatpush.bf16.msra.mxu0 %v1583
          %1593 = vmatmul.bf16.gmra.mxu0 %v1535
          %v1594 = vpop.f32.mrf.mxu0
          %v1595 = vadd.f32 %v1375, %v1594
          %v1596 = vpop.f32.mrf.mxu0
          %v1597 = vadd.f32 %v1377, %v1596
          %1598 = vmatmul.bf16.gmra.mxu0 %v1538
          %v1599 = vpop.f32.mrf.mxu0
          %v1600 = vadd.f32 %v1380, %v1599
          %v1601 = vpop.f32.mrf.mxu0
          %v1602 = vadd.f32 %v1382, %v1601
          %1603 = vmatmul.bf16.gmra.mxu0 %v1541
          %v1604 = vpop.f32.mrf.mxu0
          %v1605 = vadd.f32 %v1385, %v1604
          %v1606 = vpop.f32.mrf.mxu0
          %v1607 = vadd.f32 %v1387, %v1606
          %1608 = vmatmul.bf16.gmra.mxu0 %v1544
          %v1609 = vpop.f32.mrf.mxu0
          %v1610 = vadd.f32 %v1390, %v1609
          %v1611 = vpop.f32.mrf.mxu0
          %v1612 = vadd.f32 %v1392, %v1611
          %1613 = vmatmul.bf16.gmra.mxu0 %v1547
          %v1614 = vpop.f32.mrf.mxu0
          %v1615 = vadd.f32 %v1395, %v1614
          %v1616 = vpop.f32.mrf.mxu0
          %v1617 = vadd.f32 %v1397, %v1616
          %1618 = vmatmul.bf16.gmra.mxu0 %v1550
          %v1619 = vpop.f32.mrf.mxu0
          %v1620 = vadd.f32 %v1400, %v1619
          %v1621 = vpop.f32.mrf.mxu0
          %v1622 = vadd.f32 %v1402, %v1621
          %1623 = vmatmul.bf16.gmra.mxu0 %v1553
          %v1624 = vpop.f32.mrf.mxu0
          %v1625 = vadd.f32 %v1405, %v1624
          %v1626 = vpop.f32.mrf.mxu0
          %v1627 = vadd.f32 %v1407, %v1626
          %1628 = vmatmul.bf16.gmra.mxu0 %v1556
          %v1629 = vpop.f32.mrf.mxu0
          %v1630 = vadd.f32 %v1410, %v1629
          %v1631 = vpop.f32.mrf.mxu0
          %v1632 = vadd.f32 %v1412, %v1631
          %1633 = vmatmul.bf16.gmra.mxu0 %v1559
          %v1634 = vpop.f32.mrf.mxu0
          %v1635 = vadd.f32 %v1415, %v1634
          %v1636 = vpop.f32.mrf.mxu0
          %v1637 = vadd.f32 %v1417, %v1636
          %1638 = vmatmul.bf16.gmra.mxu0 %v1562
          %v1639 = vpop.f32.mrf.mxu0
          %v1640 = vadd.f32 %v1420, %v1639
          %v1641 = vpop.f32.mrf.mxu0
          %v1642 = vadd.f32 %v1422, %v1641
          %1643 = vmatmul.bf16.gmra.mxu0 %v1565
          %v1644 = vpop.f32.mrf.mxu0
          %v1645 = vadd.f32 %v1425, %v1644
          %v1646 = vpop.f32.mrf.mxu0
          %v1647 = vadd.f32 %v1427, %v1646
          %1648 = vmatmul.bf16.gmra.mxu0 %v1568
          %v1649 = vpop.f32.mrf.mxu0
          %v1650 = vadd.f32 %v1430, %v1649
          %v1651 = vpop.f32.mrf.mxu0
          %v1652 = vadd.f32 %v1432, %v1651
          %1653 = vmatmul.bf16.gmra.mxu0 %v1571
          %v1654 = vpop.f32.mrf.mxu0
          %v1655 = vadd.f32 %v1435, %v1654
          %v1656 = vpop.f32.mrf.mxu0
          %v1657 = vadd.f32 %v1437, %v1656
          %1658 = vmatmul.bf16.gmra.mxu0 %v1574
          %v1659 = vpop.f32.mrf.mxu0
          %v1660 = vadd.f32 %v1440, %v1659
          %v1661 = vpop.f32.mrf.mxu0
          %v1662 = vadd.f32 %v1442, %v1661
          %1663 = vmatmul.bf16.gmra.mxu0 %v1577
          %v1664 = vpop.f32.mrf.mxu0
          %v1665 = vadd.f32 %v1445, %v1664
          %v1666 = vpop.f32.mrf.mxu0
          %v1667 = vadd.f32 %v1447, %v1666
          %1668 = vmatmul.bf16.gmra.mxu0 %v1580
          %v1669 = vpop.f32.mrf.mxu0
          %v1670 = vadd.f32 %v1450, %v1669
          %v1671 = vpop.f32.mrf.mxu0
          %v1672 = vadd.f32 %v1452, %v1671
          %1673 = vdwg.mxu0
          %v1674 = vld [vmem:[#allocation2] sm:$0xe]
          %v1675 = vld [vmem:[#allocation2 + $0xc] sm:$0xe]
          %v1676 = vld [vmem:[#allocation2 + $0x18] sm:$0xe]
          %v1677 = vld [vmem:[#allocation2 + $0x24] sm:$0xe]
          %v1678 = vld [vmem:[#allocation2 + $0x30] sm:$0xe]
          %v1679 = vld [vmem:[#allocation2 + $0x3c] sm:$0xe]
          %v1680 = vld [vmem:[#allocation2 + $0x48] sm:$0xe]
          %v1681 = vld [vmem:[#allocation2 + $0x54] sm:$0xe]
          %v1682 = vld [vmem:[#allocation2 + $0x60] sm:$0xe]
          %v1683 = vld [vmem:[#allocation2 + $0x6c] sm:$0xe]
          %v1684 = vld [vmem:[#allocation2 + $0x78] sm:$0xe]
          %v1685 = vld [vmem:[#allocation2 + $0x84] sm:$0xe]
          %v1686 = vld [vmem:[#allocation2 + $0x90] sm:$0xe]
          %v1687 = vld [vmem:[#allocation2 + $0x9c] sm:$0xe]
          %v1688 = vld [vmem:[#allocation2 + $0xa8] sm:$0xe]
          %v1689 = vld [vmem:[#allocation2 + $0xb4] sm:$0xe]
          %vm1722 = vcmask 1042432
          %vm1723 = vcmask 1046532
          %vm1724 = vmor %vm1722, %vm1723
          %v1725 = vrot.slane %v1674, 5
          %v1726 = vrot.slane %v1725, 4
          %v1727 = vrot.slane %v821, 5
          %v1728 = vsel %vm1724, %v1726, %v1727
          %v1729 = vrot.slane %v1727, 4
          %v1730 = vrot.slane %v856, 5
          %v1731 = vsel %vm1724, %v1729, %v1730
          %v1732 = vrot.slane %v1675, 5
          %v1733 = vrot.slane %v1732, 4
          %v1734 = vrot.slane %v823, 5
          %v1735 = vsel %vm1724, %v1733, %v1734
          %v1736 = vrot.slane %v1734, 4
          %v1737 = vrot.slane %v857, 5
          %v1738 = vsel %vm1724, %v1736, %v1737
          %v1739 = vrot.slane %v1676, 5
          %v1740 = vrot.slane %v1739, 4
          %v1741 = vrot.slane %v825, 5
          %v1742 = vsel %vm1724, %v1740, %v1741
          %v1743 = vrot.slane %v1741, 4
          %v1744 = vrot.slane %v858, 5
          %v1745 = vsel %vm1724, %v1743, %v1744
          %v1746 = vrot.slane %v1677, 5
          %v1747 = vrot.slane %v1746, 4
          %v1748 = vrot.slane %v827, 5
          %v1749 = vsel %vm1724, %v1747, %v1748
          %v1750 = vrot.slane %v1748, 4
          %v1751 = vrot.slane %v859, 5
          %v1752 = vsel %vm1724, %v1750, %v1751
          %v1753 = vrot.slane %v1678, 5
          %v1754 = vrot.slane %v1753, 4
          %v1755 = vrot.slane %v829, 5
          %v1756 = vsel %vm1724, %v1754, %v1755
          %v1757 = vrot.slane %v1755, 4
          %v1758 = vrot.slane %v860, 5
          %v1759 = vsel %vm1724, %v1757, %v1758
          %v1760 = vrot.slane %v1679, 5
          %v1761 = vrot.slane %v1760, 4
          %v1762 = vrot.slane %v831, 5
          %v1763 = vsel %vm1724, %v1761, %v1762
          %v1764 = vrot.slane %v1762, 4
          %v1765 = vrot.slane %v861, 5
          %v1766 = vsel %vm1724, %v1764, %v1765
          %v1767 = vrot.slane %v1680, 5
          %v1768 = vrot.slane %v1767, 4
          %v1769 = vrot.slane %v833, 5
          %v1770 = vsel %vm1724, %v1768, %v1769
          %v1771 = vrot.slane %v1769, 4
          %v1772 = vrot.slane %v862, 5
          %v1773 = vsel %vm1724, %v1771, %v1772
          %v1774 = vrot.slane %v1681, 5
          %v1775 = vrot.slane %v1774, 4
          %v1776 = vrot.slane %v835, 5
          %v1777 = vsel %vm1724, %v1775, %v1776
          %v1778 = vrot.slane %v1776, 4
          %v1779 = vrot.slane %v863, 5
          %v1780 = vsel %vm1724, %v1778, %v1779
          %v1781 = vrot.slane %v1682, 5
          %v1782 = vrot.slane %v1781, 4
          %v1783 = vrot.slane %v837, 5
          %v1784 = vsel %vm1724, %v1782, %v1783
          %v1785 = vrot.slane %v1783, 4
          %v1786 = vrot.slane %v864, 5
          %v1787 = vsel %vm1724, %v1785, %v1786
          %v1788 = vrot.slane %v1683, 5
          %v1789 = vrot.slane %v1788, 4
          %v1790 = vrot.slane %v839, 5
          %v1791 = vsel %vm1724, %v1789, %v1790
          %v1792 = vrot.slane %v1790, 4
          %v1793 = vrot.slane %v865, 5
          %v1794 = vsel %vm1724, %v1792, %v1793
          %v1795 = vrot.slane %v1684, 5
          %v1796 = vrot.slane %v1795, 4
          %v1797 = vrot.slane %v841, 5
          %v1798 = vsel %vm1724, %v1796, %v1797
          %v1799 = vrot.slane %v1797, 4
          %v1800 = vrot.slane %v866, 5
          %v1801 = vsel %vm1724, %v1799, %v1800
          %v1802 = vrot.slane %v1685, 5
          %v1803 = vrot.slane %v1802, 4
          %v1804 = vrot.slane %v843, 5
          %v1805 = vsel %vm1724, %v1803, %v1804
          %v1806 = vrot.slane %v1804, 4
          %v1807 = vrot.slane %v867, 5
          %v1808 = vsel %vm1724, %v1806, %v1807
          %v1809 = vrot.slane %v1686, 5
          %v1810 = vrot.slane %v1809, 4
          %v1811 = vrot.slane %v845, 5
          %v1812 = vsel %vm1724, %v1810, %v1811
          %v1813 = vrot.slane %v1811, 4
          %v1814 = vrot.slane %v868, 5
          %v1815 = vsel %vm1724, %v1813, %v1814
          %v1816 = vrot.slane %v1687, 5
          %v1817 = vrot.slane %v1816, 4
          %v1818 = vrot.slane %v847, 5
          %v1819 = vsel %vm1724, %v1817, %v1818
          %v1820 = vrot.slane %v1818, 4
          %v1821 = vrot.slane %v869, 5
          %v1822 = vsel %vm1724, %v1820, %v1821
          %v1823 = vrot.slane %v1688, 5
          %v1824 = vrot.slane %v1823, 4
          %v1825 = vrot.slane %v849, 5
          %v1826 = vsel %vm1724, %v1824, %v1825
          %v1827 = vrot.slane %v1825, 4
          %v1828 = vrot.slane %v870, 5
          %v1829 = vsel %vm1724, %v1827, %v1828
          %v1830 = vrot.slane %v1689, 5
          %v1831 = vrot.slane %v1830, 4
          %v1832 = vrot.slane %v851, 5
          %v1833 = vsel %vm1724, %v1831, %v1832
          %v1834 = vrot.slane %v1832, 4
          %v1835 = vrot.slane %v871, 5
          %v1836 = vsel %vm1724, %v1834, %v1835
          %v1837 = vld [vmem:[%s854 + $0x4] sm:$0x3]
          %v1838 = vunpack.c.l.b16 %v1728
          %v1839 = vunpack.c.l.b16 %v1731
          %v1840 = vunpack.c.l.b16 %v1735
          %v1841 = vunpack.c.l.b16 %v1738
          %v1842 = vunpack.c.l.b16 %v1742
          %v1843 = vunpack.c.l.b16 %v1745
          %v1844 = vunpack.c.l.b16 %v1749
          %v1845 = vunpack.c.l.b16 %v1752
          %v1846 = vunpack.c.l.b16 %v1756
          %v1847 = vunpack.c.l.b16 %v1759
          %v1848 = vunpack.c.l.b16 %v1763
          %v1849 = vunpack.c.l.b16 %v1766
          %v1850 = vunpack.c.l.b16 %v1770
          %v1851 = vunpack.c.l.b16 %v1773
          %v1852 = vunpack.c.l.b16 %v1777
          %v1853 = vunpack.c.l.b16 %v1780
          %v1854 = vunpack.c.l.b16 %v1784
          %v1855 = vunpack.c.l.b16 %v1787
          %v1856 = vunpack.c.l.b16 %v1791
          %v1857 = vunpack.c.l.b16 %v1794
          %v1858 = vunpack.c.l.b16 %v1798
          %v1859 = vunpack.c.l.b16 %v1801
          %v1860 = vunpack.c.l.b16 %v1805
          %v1861 = vunpack.c.l.b16 %v1808
          %v1862 = vunpack.c.l.b16 %v1812
          %v1863 = vunpack.c.l.b16 %v1815
          %v1864 = vunpack.c.l.b16 %v1819
          %v1865 = vunpack.c.l.b16 %v1822
          %v1866 = vunpack.c.l.b16 %v1826
          %v1867 = vunpack.c.l.b16 %v1829
          %v1868 = vunpack.c.l.b16 %v1833
          %v1869 = vunpack.c.l.b16 %v1836
          %v1870 = vpack.c.b16 %v1839, %v1838
          %v1871 = vpack.c.b16 %v1841, %v1840
          %v1872 = vpack.c.b16 %v1843, %v1842
          %v1873 = vpack.c.b16 %v1845, %v1844
          %v1874 = vpack.c.b16 %v1847, %v1846
          %v1875 = vpack.c.b16 %v1849, %v1848
          %v1876 = vpack.c.b16 %v1851, %v1850
          %v1877 = vpack.c.b16 %v1853, %v1852
          %v1878 = vpack.c.b16 %v1855, %v1854
          %v1879 = vpack.c.b16 %v1857, %v1856
          %v1880 = vpack.c.b16 %v1859, %v1858
          %v1881 = vpack.c.b16 %v1861, %v1860
          %v1882 = vpack.c.b16 %v1863, %v1862
          %v1883 = vpack.c.b16 %v1865, %v1864
          %v1884 = vpack.c.b16 %v1867, %v1866
          %v1885 = vpack.c.b16 %v1869, %v1868
          %v1887 = vsel %vm1312, %v1870, 0
          %v1890 = vsel %vm1312, %v1871, 0
          %v1893 = vsel %vm1312, %v1872, 0
          %v1896 = vsel %vm1312, %v1873, 0
          %v1899 = vsel %vm1312, %v1874, 0
          %v1902 = vsel %vm1312, %v1875, 0
          %v1905 = vsel %vm1312, %v1876, 0
          %v1908 = vsel %vm1312, %v1877, 0
          %v1911 = vsel %vm1312, %v1878, 0
          %v1914 = vsel %vm1312, %v1879, 0
          %v1917 = vsel %vm1312, %v1880, 0
          %v1920 = vsel %vm1312, %v1881, 0
          %v1923 = vsel %vm1312, %v1882, 0
          %v1926 = vsel %vm1312, %v1883, 0
          %v1929 = vsel %vm1312, %v1884, 0
          %v1932 = vsel %vm1312, %v1885, 0
          %v1935 = vsel %vm1361, %v1837, 0
          %1937 = vmatpush.bf16.msra.mxu0 0
          %1938 = vmatpush.bf16.msra.mxu0 0
          %1939 = vmatpush.bf16.msra.mxu0 0
          %1940 = vmatpush.bf16.msra.mxu0 0
          %1941 = vmatpush.bf16.msra.mxu0 0
          %1942 = vmatpush.bf16.msra.mxu0 0
          %1943 = vmatpush.bf16.msra.mxu0 0
          %1944 = vmatpush.bf16.msra.mxu0 %v1935
          %1945 = vmatmul.bf16.gmra.mxu0 %v1887
          %v1946 = vpop.f32.mrf.mxu0
          %v1947 = vadd.f32 0.0, %v1946
          %v1948 = vpop.f32.mrf.mxu0
          %v1949 = vadd.f32 0.0, %v1948
          %1950 = vmatmul.bf16.gmra.mxu0 %v1890
          %v1951 = vpop.f32.mrf.mxu0
          %v1952 = vadd.f32 0.0, %v1951
          %v1953 = vpop.f32.mrf.mxu0
          %v1954 = vadd.f32 0.0, %v1953
          %1955 = vmatmul.bf16.gmra.mxu0 %v1893
          %v1956 = vpop.f32.mrf.mxu0
          %v1957 = vadd.f32 0.0, %v1956
          %v1958 = vpop.f32.mrf.mxu0
          %v1959 = vadd.f32 0.0, %v1958
          %1960 = vmatmul.bf16.gmra.mxu0 %v1896
          %v1961 = vpop.f32.mrf.mxu0
          %v1962 = vadd.f32 0.0, %v1961
          %v1963 = vpop.f32.mrf.mxu0
          %v1964 = vadd.f32 0.0, %v1963
          %1965 = vmatmul.bf16.gmra.mxu0 %v1899
          %v1966 = vpop.f32.mrf.mxu0
          %v1967 = vadd.f32 0.0, %v1966
          %v1968 = vpop.f32.mrf.mxu0
          %v1969 = vadd.f32 0.0, %v1968
          %1970 = vmatmul.bf16.gmra.mxu0 %v1902
          %v1971 = vpop.f32.mrf.mxu0
          %v1972 = vadd.f32 0.0, %v1971
          %v1973 = vpop.f32.mrf.mxu0
          %v1974 = vadd.f32 0.0, %v1973
          %1975 = vmatmul.bf16.gmra.mxu0 %v1905
          %v1976 = vpop.f32.mrf.mxu0
          %v1977 = vadd.f32 0.0, %v1976
          %v1978 = vpop.f32.mrf.mxu0
          %v1979 = vadd.f32 0.0, %v1978
          %1980 = vmatmul.bf16.gmra.mxu0 %v1908
          %v1981 = vpop.f32.mrf.mxu0
          %v1982 = vadd.f32 0.0, %v1981
          %v1983 = vpop.f32.mrf.mxu0
          %v1984 = vadd.f32 0.0, %v1983
          %1985 = vmatmul.bf16.gmra.mxu0 %v1911
          %v1986 = vpop.f32.mrf.mxu0
          %v1987 = vadd.f32 0.0, %v1986
          %v1988 = vpop.f32.mrf.mxu0
          %v1989 = vadd.f32 0.0, %v1988
          %1990 = vmatmul.bf16.gmra.mxu0 %v1914
          %v1991 = vpop.f32.mrf.mxu0
          %v1992 = vadd.f32 0.0, %v1991
          %v1993 = vpop.f32.mrf.mxu0
          %v1994 = vadd.f32 0.0, %v1993
          %1995 = vmatmul.bf16.gmra.mxu0 %v1917
          %v1996 = vpop.f32.mrf.mxu0
          %v1997 = vadd.f32 0.0, %v1996
          %v1998 = vpop.f32.mrf.mxu0
          %v1999 = vadd.f32 0.0, %v1998
          %2000 = vmatmul.bf16.gmra.mxu0 %v1920
          %v2001 = vpop.f32.mrf.mxu0
          %v2002 = vadd.f32 0.0, %v2001
          %v2003 = vpop.f32.mrf.mxu0
          %v2004 = vadd.f32 0.0, %v2003
          %2005 = vmatmul.bf16.gmra.mxu0 %v1923
          %v2006 = vpop.f32.mrf.mxu0
          %v2007 = vadd.f32 0.0, %v2006
          %v2008 = vpop.f32.mrf.mxu0
          %v2009 = vadd.f32 0.0, %v2008
          %2010 = vmatmul.bf16.gmra.mxu0 %v1926
          %v2011 = vpop.f32.mrf.mxu0
          %v2012 = vadd.f32 0.0, %v2011
          %v2013 = vpop.f32.mrf.mxu0
          %v2014 = vadd.f32 0.0, %v2013
          %2015 = vmatmul.bf16.gmra.mxu0 %v1929
          %v2016 = vpop.f32.mrf.mxu0
          %v2017 = vadd.f32 0.0, %v2016
          %v2018 = vpop.f32.mrf.mxu0
          %v2019 = vadd.f32 0.0, %v2018
          %2020 = vmatmul.bf16.gmra.mxu0 %v1932
          %v2021 = vpop.f32.mrf.mxu0
          %v2022 = vadd.f32 0.0, %v2021
          %v2023 = vpop.f32.mrf.mxu0
          %v2024 = vadd.f32 0.0, %v2023
          %2025 = vdwg.mxu0
          %v2026 = vadd.f32 %v1595, %v1947
          %v2027 = vadd.f32 %v1597, %v1949
          %v2028 = vadd.f32 %v1600, %v1952
          %v2029 = vadd.f32 %v1602, %v1954
          %v2030 = vadd.f32 %v1605, %v1957
          %v2031 = vadd.f32 %v1607, %v1959
          %v2032 = vadd.f32 %v1610, %v1962
          %v2033 = vadd.f32 %v1612, %v1964
          %v2034 = vadd.f32 %v1615, %v1967
          %v2035 = vadd.f32 %v1617, %v1969
          %v2036 = vadd.f32 %v1620, %v1972
          %v2037 = vadd.f32 %v1622, %v1974
          %v2038 = vadd.f32 %v1625, %v1977
          %v2039 = vadd.f32 %v1627, %v1979
          %v2040 = vadd.f32 %v1630, %v1982
          %v2041 = vadd.f32 %v1632, %v1984
          %v2042 = vadd.f32 %v1635, %v1987
          %v2043 = vadd.f32 %v1637, %v1989
          %v2044 = vadd.f32 %v1640, %v1992
          %v2045 = vadd.f32 %v1642, %v1994
          %v2046 = vadd.f32 %v1645, %v1997
          %v2047 = vadd.f32 %v1647, %v1999
          %v2048 = vadd.f32 %v1650, %v2002
          %v2049 = vadd.f32 %v1652, %v2004
          %v2050 = vadd.f32 %v1655, %v2007
          %v2051 = vadd.f32 %v1657, %v2009
          %v2052 = vadd.f32 %v1660, %v2012
          %v2053 = vadd.f32 %v1662, %v2014
          %v2054 = vadd.f32 %v1665, %v2017
          %v2055 = vadd.f32 %v1667, %v2019
          %v2056 = vadd.f32 %v1670, %v2022
          %v2057 = vadd.f32 %v1672, %v2024
          %v2058 = vld [vmem:[%s699] sm:$0xf]
          %v2059 = vld [vmem:[%s699 + $0x4] sm:$0xf]
          %v2060 = vld [vmem:[%s699 + $0xc] sm:$0xf]
          %v2061 = vld [vmem:[%s699 + $0x10] sm:$0xf]
          %v2062 = vld [vmem:[%s699 + $0x18] sm:$0xf]
          %v2063 = vld [vmem:[%s699 + $0x1c] sm:$0xf]
          %v2064 = vld [vmem:[%s699 + $0x24] sm:$0xf]
          %v2065 = vld [vmem:[%s699 + $0x28] sm:$0xf]
          %v2066 = vld [vmem:[%s699 + $0x30] sm:$0xf]
          %v2067 = vld [vmem:[%s699 + $0x34] sm:$0xf]
          %v2068 = vld [vmem:[%s699 + $0x3c] sm:$0xf]
          %v2069 = vld [vmem:[%s699 + $0x40] sm:$0xf]
          %v2070 = vld [vmem:[%s699 + $0x48] sm:$0xf]
          %v2071 = vld [vmem:[%s699 + $0x4c] sm:$0xf]
          %v2072 = vld [vmem:[%s699 + $0x54] sm:$0xf]
          %v2073 = vld [vmem:[%s699 + $0x58] sm:$0xf]
          %v2074 = vld [vmem:[%s699 + $0x60] sm:$0xf]
          %v2075 = vld [vmem:[%s699 + $0x64] sm:$0xf]
          %v2076 = vld [vmem:[%s699 + $0x6c] sm:$0xf]
          %v2077 = vld [vmem:[%s699 + $0x70] sm:$0xf]
          %v2078 = vld [vmem:[%s699 + $0x78] sm:$0xf]
          %v2079 = vld [vmem:[%s699 + $0x7c] sm:$0xf]
          %v2080 = vld [vmem:[%s699 + $0x84] sm:$0xf]
          %v2081 = vld [vmem:[%s699 + $0x88] sm:$0xf]
          %v2082 = vld [vmem:[%s699 + $0x90] sm:$0xf]
          %v2083 = vld [vmem:[%s699 + $0x94] sm:$0xf]
          %v2084 = vld [vmem:[%s699 + $0x9c] sm:$0xf]
          %v2085 = vld [vmem:[%s699 + $0xa0] sm:$0xf]
          %v2086 = vld [vmem:[%s699 + $0xa8] sm:$0xf]
          %v2087 = vld [vmem:[%s699 + $0xac] sm:$0xf]
          %v2088 = vld [vmem:[%s699 + $0xb4] sm:$0xf]
          %v2089 = vld [vmem:[%s699 + $0xb8] sm:$0xf]
          %v2090 = vld [vmem:[%s854 + $0x4] sm:$0xc]
          %v2123 = vunpack.c.l.b16 %v2058
          %v2124 = vunpack.c.l.b16 %v2059
          %v2125 = vunpack.c.l.b16 %v2060
          %v2126 = vunpack.c.l.b16 %v2061
          %v2127 = vunpack.c.l.b16 %v2062
          %v2128 = vunpack.c.l.b16 %v2063
          %v2129 = vunpack.c.l.b16 %v2064
          %v2130 = vunpack.c.l.b16 %v2065
          %v2131 = vunpack.c.l.b16 %v2066
          %v2132 = vunpack.c.l.b16 %v2067
          %v2133 = vunpack.c.l.b16 %v2068
          %v2134 = vunpack.c.l.b16 %v2069
          %v2135 = vunpack.c.l.b16 %v2070
          %v2136 = vunpack.c.l.b16 %v2071
          %v2137 = vunpack.c.l.b16 %v2072
          %v2138 = vunpack.c.l.b16 %v2073
          %v2139 = vunpack.c.l.b16 %v2074
          %v2140 = vunpack.c.l.b16 %v2075
          %v2141 = vunpack.c.l.b16 %v2076
          %v2142 = vunpack.c.l.b16 %v2077
          %v2143 = vunpack.c.l.b16 %v2078
          %v2144 = vunpack.c.l.b16 %v2079
          %v2145 = vunpack.c.l.b16 %v2080
          %v2146 = vunpack.c.l.b16 %v2081
          %v2147 = vunpack.c.l.b16 %v2082
          %v2148 = vunpack.c.l.b16 %v2083
          %v2149 = vunpack.c.l.b16 %v2084
          %v2150 = vunpack.c.l.b16 %v2085
          %v2151 = vunpack.c.l.b16 %v2086
          %v2152 = vunpack.c.l.b16 %v2087
          %v2153 = vunpack.c.l.b16 %v2088
          %v2154 = vunpack.c.l.b16 %v2089
          %v2155 = vpack.c.b16 %v2124, %v2123
          %v2156 = vpack.c.b16 %v2126, %v2125
          %v2157 = vpack.c.b16 %v2128, %v2127
          %v2158 = vpack.c.b16 %v2130, %v2129
          %v2159 = vpack.c.b16 %v2132, %v2131
          %v2160 = vpack.c.b16 %v2134, %v2133
          %v2161 = vpack.c.b16 %v2136, %v2135
          %v2162 = vpack.c.b16 %v2138, %v2137
          %v2163 = vpack.c.b16 %v2140, %v2139
          %v2164 = vpack.c.b16 %v2142, %v2141
          %v2165 = vpack.c.b16 %v2144, %v2143
          %v2166 = vpack.c.b16 %v2146, %v2145
          %v2167 = vpack.c.b16 %v2148, %v2147
          %v2168 = vpack.c.b16 %v2150, %v2149
          %v2169 = vpack.c.b16 %v2152, %v2151
          %v2170 = vpack.c.b16 %v2154, %v2153
          %v2172 = vunpack.c.l.b16 %v2090
          %v2173 = vpack.c.b16 %v2172, %v2172
          %v2174 = vrot.slane %v2173, 2
          %v2176 = vsel %vm1312, %v2155, 0
          %v2179 = vsel %vm1312, %v2156, 0
          %v2182 = vsel %vm1312, %v2157, 0
          %v2185 = vsel %vm1312, %v2158, 0
          %v2188 = vsel %vm1312, %v2159, 0
          %v2191 = vsel %vm1312, %v2160, 0
          %v2194 = vsel %vm1312, %v2161, 0
          %v2197 = vsel %vm1312, %v2162, 0
          %v2200 = vsel %vm1312, %v2163, 0
          %v2203 = vsel %vm1312, %v2164, 0
          %v2206 = vsel %vm1312, %v2165, 0
          %v2209 = vsel %vm1312, %v2166, 0
          %v2212 = vsel %vm1312, %v2167, 0
          %v2215 = vsel %vm1312, %v2168, 0
          %v2218 = vsel %vm1312, %v2169, 0
          %v2221 = vsel %vm1312, %v2170, 0
          %v2224 = vsel %vm1361, %v2174, 0
          %2226 = vmatpush.bf16.msra.mxu0 0
          %2227 = vmatpush.bf16.msra.mxu0 0
          %2228 = vmatpush.bf16.msra.mxu0 0
          %2229 = vmatpush.bf16.msra.mxu0 0
          %2230 = vmatpush.bf16.msra.mxu0 0
          %2231 = vmatpush.bf16.msra.mxu0 0
          %2232 = vmatpush.bf16.msra.mxu0 0
          %2233 = vmatpush.bf16.msra.mxu0 %v2224
          %2234 = vmatmul.bf16.gmra.mxu0 %v2176
          %v2235 = vpop.f32.mrf.mxu0
          %v2236 = vadd.f32 0.0, %v2235
          %v2237 = vpop.f32.mrf.mxu0
          %v2238 = vadd.f32 0.0, %v2237
          %2239 = vmatmul.bf16.gmra.mxu0 %v2179
          %v2240 = vpop.f32.mrf.mxu0
          %v2241 = vadd.f32 0.0, %v2240
          %v2242 = vpop.f32.mrf.mxu0
          %v2243 = vadd.f32 0.0, %v2242
          %2244 = vmatmul.bf16.gmra.mxu0 %v2182
          %v2245 = vpop.f32.mrf.mxu0
          %v2246 = vadd.f32 0.0, %v2245
          %v2247 = vpop.f32.mrf.mxu0
          %v2248 = vadd.f32 0.0, %v2247
          %2249 = vmatmul.bf16.gmra.mxu0 %v2185
          %v2250 = vpop.f32.mrf.mxu0
          %v2251 = vadd.f32 0.0, %v2250
          %v2252 = vpop.f32.mrf.mxu0
          %v2253 = vadd.f32 0.0, %v2252
          %2254 = vmatmul.bf16.gmra.mxu0 %v2188
          %v2255 = vpop.f32.mrf.mxu0
          %v2256 = vadd.f32 0.0, %v2255
          %v2257 = vpop.f32.mrf.mxu0
          %v2258 = vadd.f32 0.0, %v2257
          %2259 = vmatmul.bf16.gmra.mxu0 %v2191
          %v2260 = vpop.f32.mrf.mxu0
          %v2261 = vadd.f32 0.0, %v2260
          %v2262 = vpop.f32.mrf.mxu0
          %v2263 = vadd.f32 0.0, %v2262
          %2264 = vmatmul.bf16.gmra.mxu0 %v2194
          %v2265 = vpop.f32.mrf.mxu0
          %v2266 = vadd.f32 0.0, %v2265
          %v2267 = vpop.f32.mrf.mxu0
          %v2268 = vadd.f32 0.0, %v2267
          %2269 = vmatmul.bf16.gmra.mxu0 %v2197
          %v2270 = vpop.f32.mrf.mxu0
          %v2271 = vadd.f32 0.0, %v2270
          %v2272 = vpop.f32.mrf.mxu0
          %v2273 = vadd.f32 0.0, %v2272
          %2274 = vmatmul.bf16.gmra.mxu0 %v2200
          %v2275 = vpop.f32.mrf.mxu0
          %v2276 = vadd.f32 0.0, %v2275
          %v2277 = vpop.f32.mrf.mxu0
          %v2278 = vadd.f32 0.0, %v2277
          %2279 = vmatmul.bf16.gmra.mxu0 %v2203
          %v2280 = vpop.f32.mrf.mxu0
          %v2281 = vadd.f32 0.0, %v2280
          %v2282 = vpop.f32.mrf.mxu0
          %v2283 = vadd.f32 0.0, %v2282
          %2284 = vmatmul.bf16.gmra.mxu0 %v2206
          %v2285 = vpop.f32.mrf.mxu0
          %v2286 = vadd.f32 0.0, %v2285
          %v2287 = vpop.f32.mrf.mxu0
          %v2288 = vadd.f32 0.0, %v2287
          %2289 = vmatmul.bf16.gmra.mxu0 %v2209
          %v2290 = vpop.f32.mrf.mxu0
          %v2291 = vadd.f32 0.0, %v2290
          %v2292 = vpop.f32.mrf.mxu0
          %v2293 = vadd.f32 0.0, %v2292
          %2294 = vmatmul.bf16.gmra.mxu0 %v2212
          %v2295 = vpop.f32.mrf.mxu0
          %v2296 = vadd.f32 0.0, %v2295
          %v2297 = vpop.f32.mrf.mxu0
          %v2298 = vadd.f32 0.0, %v2297
          %2299 = vmatmul.bf16.gmra.mxu0 %v2215
          %v2300 = vpop.f32.mrf.mxu0
          %v2301 = vadd.f32 0.0, %v2300
          %v2302 = vpop.f32.mrf.mxu0
          %v2303 = vadd.f32 0.0, %v2302
          %2304 = vmatmul.bf16.gmra.mxu0 %v2218
          %v2305 = vpop.f32.mrf.mxu0
          %v2306 = vadd.f32 0.0, %v2305
          %v2307 = vpop.f32.mrf.mxu0
          %v2308 = vadd.f32 0.0, %v2307
          %2309 = vmatmul.bf16.gmra.mxu0 %v2221
          %v2310 = vpop.f32.mrf.mxu0
          %v2311 = vadd.f32 0.0, %v2310
          %v2312 = vpop.f32.mrf.mxu0
          %v2313 = vadd.f32 0.0, %v2312
          %2314 = vdwg.mxu0
          %v2315 = vadd.f32 %v2026, %v2236
          %v2316 = vadd.f32 %v2027, %v2238
          %v2317 = vadd.f32 %v2028, %v2241
          %v2318 = vadd.f32 %v2029, %v2243
          %v2319 = vadd.f32 %v2030, %v2246
          %v2320 = vadd.f32 %v2031, %v2248
          %v2321 = vadd.f32 %v2032, %v2251
          %v2322 = vadd.f32 %v2033, %v2253
          %v2323 = vadd.f32 %v2034, %v2256
          %v2324 = vadd.f32 %v2035, %v2258
          %v2325 = vadd.f32 %v2036, %v2261
          %v2326 = vadd.f32 %v2037, %v2263
          %v2327 = vadd.f32 %v2038, %v2266
          %v2328 = vadd.f32 %v2039, %v2268
          %v2329 = vadd.f32 %v2040, %v2271
          %v2330 = vadd.f32 %v2041, %v2273
          %v2331 = vadd.f32 %v2042, %v2276
          %v2332 = vadd.f32 %v2043, %v2278
          %v2333 = vadd.f32 %v2044, %v2281
          %v2334 = vadd.f32 %v2045, %v2283
          %v2335 = vadd.f32 %v2046, %v2286
          %v2336 = vadd.f32 %v2047, %v2288
          %v2337 = vadd.f32 %v2048, %v2291
          %v2338 = vadd.f32 %v2049, %v2293
          %v2339 = vadd.f32 %v2050, %v2296
          %v2340 = vadd.f32 %v2051, %v2298
          %v2341 = vadd.f32 %v2052, %v2301
          %v2342 = vadd.f32 %v2053, %v2303
          %v2343 = vadd.f32 %v2054, %v2306
          %v2344 = vadd.f32 %v2055, %v2308
          %v2345 = vadd.f32 %v2056, %v2311
          %v2346 = vadd.f32 %v2057, %v2313
          %v2347 = vld [vmem:[%s699] sm:$0xf]
          %v2348 = vld [vmem:[%s699 + $0x4] sm:$0xf]
          %v2349 = vld [vmem:[%s699 + $0x8] sm:$0x1]
          %v2350 = vld [vmem:[%s699 + $0xc] sm:$0xf]
          %v2351 = vld [vmem:[%s699 + $0x10] sm:$0xf]
          %v2352 = vld [vmem:[%s699 + $0x14] sm:$0x1]
          %v2353 = vld [vmem:[%s699 + $0x18] sm:$0xf]
          %v2354 = vld [vmem:[%s699 + $0x1c] sm:$0xf]
          %v2355 = vld [vmem:[%s699 + $0x20] sm:$0x1]
          %v2356 = vld [vmem:[%s699 + $0x24] sm:$0xf]
          %v2357 = vld [vmem:[%s699 + $0x28] sm:$0xf]
          %v2358 = vld [vmem:[%s699 + $0x2c] sm:$0x1]
          %v2359 = vld [vmem:[%s699 + $0x30] sm:$0xf]
          %v2360 = vld [vmem:[%s699 + $0x34] sm:$0xf]
          %v2361 = vld [vmem:[%s699 + $0x38] sm:$0x1]
          %v2362 = vld [vmem:[%s699 + $0x3c] sm:$0xf]
          %v2363 = vld [vmem:[%s699 + $0x40] sm:$0xf]
          %v2364 = vld [vmem:[%s699 + $0x44] sm:$0x1]
          %v2365 = vld [vmem:[%s699 + $0x48] sm:$0xf]
          %v2366 = vld [vmem:[%s699 + $0x4c] sm:$0xf]
          %v2367 = vld [vmem:[%s699 + $0x50] sm:$0x1]
          %v2368 = vld [vmem:[%s699 + $0x54] sm:$0xf]
          %v2369 = vld [vmem:[%s699 + $0x58] sm:$0xf]
          %v2370 = vld [vmem:[%s699 + $0x5c] sm:$0x1]
          %v2371 = vld [vmem:[%s699 + $0x60] sm:$0xf]
          %v2372 = vld [vmem:[%s699 + $0x64] sm:$0xf]
          %v2373 = vld [vmem:[%s699 + $0x68] sm:$0x1]
          %v2374 = vld [vmem:[%s699 + $0x6c] sm:$0xf]
          %v2375 = vld [vmem:[%s699 + $0x70] sm:$0xf]
          %v2376 = vld [vmem:[%s699 + $0x74] sm:$0x1]
          %v2377 = vld [vmem:[%s699 + $0x78] sm:$0xf]
          %v2378 = vld [vmem:[%s699 + $0x7c] sm:$0xf]
          %v2379 = vld [vmem:[%s699 + $0x80] sm:$0x1]
          %v2380 = vld [vmem:[%s699 + $0x84] sm:$0xf]
          %v2381 = vld [vmem:[%s699 + $0x88] sm:$0xf]
          %v2382 = vld [vmem:[%s699 + $0x8c] sm:$0x1]
          %v2383 = vld [vmem:[%s699 + $0x90] sm:$0xf]
          %v2384 = vld [vmem:[%s699 + $0x94] sm:$0xf]
          %v2385 = vld [vmem:[%s699 + $0x98] sm:$0x1]
          %v2386 = vld [vmem:[%s699 + $0x9c] sm:$0xf]
          %v2387 = vld [vmem:[%s699 + $0xa0] sm:$0xf]
          %v2388 = vld [vmem:[%s699 + $0xa4] sm:$0x1]
          %v2389 = vld [vmem:[%s699 + $0xa8] sm:$0xf]
          %v2390 = vld [vmem:[%s699 + $0xac] sm:$0xf]
          %v2391 = vld [vmem:[%s699 + $0xb0] sm:$0x1]
          %v2392 = vld [vmem:[%s699 + $0xb4] sm:$0xf]
          %v2393 = vld [vmem:[%s699 + $0xb8] sm:$0xf]
          %v2394 = vld [vmem:[%s699 + $0xbc] sm:$0x1]
          %v2396 = vshrl.u32 %v2347, 16
          %v2398 = vrot.slane %v2396, 4
          %v2399 = vshll.u32 %v2347, 16
          %v2401 = vrot.slane %v2399, 5
          %v2402 = vor.u32 %v2398, %v2401
          %v2403 = vrot.slane %v2402, 4
          %v2405 = vshll.u32 %v2348, 16
          %v2407 = vrot.slane %v2405, 5
          %v2408 = vsel %vm874, %v2403, %v2407
          %v2409 = vshrl.u32 %v2348, 16
          %v2411 = vrot.slane %v2409, 4
          %v2412 = vor.u32 %v2411, %v2407
          %v2413 = vrot.slane %v2412, 4
          %v2415 = vshll.u32 %v2349, 16
          %v2417 = vrot.slane %v2415, 5
          %v2418 = vsel %vm874, %v2413, %v2417
          %v2420 = vshrl.u32 %v2350, 16
          %v2422 = vrot.slane %v2420, 4
          %v2423 = vshll.u32 %v2350, 16
          %v2425 = vrot.slane %v2423, 5
          %v2426 = vor.u32 %v2422, %v2425
          %v2427 = vrot.slane %v2426, 4
          %v2429 = vshll.u32 %v2351, 16
          %v2431 = vrot.slane %v2429, 5
          %v2432 = vsel %vm874, %v2427, %v2431
          %v2433 = vshrl.u32 %v2351, 16
          %v2435 = vrot.slane %v2433, 4
          %v2436 = vor.u32 %v2435, %v2431
          %v2437 = vrot.slane %v2436, 4
          %v2439 = vshll.u32 %v2352, 16
          %v2441 = vrot.slane %v2439, 5
          %v2442 = vsel %vm874, %v2437, %v2441
          %v2444 = vshrl.u32 %v2353, 16
          %v2446 = vrot.slane %v2444, 4
          %v2447 = vshll.u32 %v2353, 16
          %v2449 = vrot.slane %v2447, 5
          %v2450 = vor.u32 %v2446, %v2449
          %v2451 = vrot.slane %v2450, 4
          %v2453 = vshll.u32 %v2354, 16
          %v2455 = vrot.slane %v2453, 5
          %v2456 = vsel %vm874, %v2451, %v2455
          %v2457 = vshrl.u32 %v2354, 16
          %v2459 = vrot.slane %v2457, 4
          %v2460 = vor.u32 %v2459, %v2455
          %v2461 = vrot.slane %v2460, 4
          %v2463 = vshll.u32 %v2355, 16
          %v2465 = vrot.slane %v2463, 5
          %v2466 = vsel %vm874, %v2461, %v2465
          %v2468 = vshrl.u32 %v2356, 16
          %v2470 = vrot.slane %v2468, 4
          %v2471 = vshll.u32 %v2356, 16
          %v2473 = vrot.slane %v2471, 5
          %v2474 = vor.u32 %v2470, %v2473
          %v2475 = vrot.slane %v2474, 4
          %v2477 = vshll.u32 %v2357, 16
          %v2479 = vrot.slane %v2477, 5
          %v2480 = vsel %vm874, %v2475, %v2479
          %v2481 = vshrl.u32 %v2357, 16
          %v2483 = vrot.slane %v2481, 4
          %v2484 = vor.u32 %v2483, %v2479
          %v2485 = vrot.slane %v2484, 4
          %v2487 = vshll.u32 %v2358, 16
          %v2489 = vrot.slane %v2487, 5
          %v2490 = vsel %vm874, %v2485, %v2489
          %v2492 = vshrl.u32 %v2359, 16
          %v2494 = vrot.slane %v2492, 4
          %v2495 = vshll.u32 %v2359, 16
          %v2497 = vrot.slane %v2495, 5
          %v2498 = vor.u32 %v2494, %v2497
          %v2499 = vrot.slane %v2498, 4
          %v2501 = vshll.u32 %v2360, 16
          %v2503 = vrot.slane %v2501, 5
          %v2504 = vsel %vm874, %v2499, %v2503
          %v2505 = vshrl.u32 %v2360, 16
          %v2507 = vrot.slane %v2505, 4
          %v2508 = vor.u32 %v2507, %v2503
          %v2509 = vrot.slane %v2508, 4
          %v2511 = vshll.u32 %v2361, 16
          %v2513 = vrot.slane %v2511, 5
          %v2514 = vsel %vm874, %v2509, %v2513
          %v2516 = vshrl.u32 %v2362, 16
          %v2518 = vrot.slane %v2516, 4
          %v2519 = vshll.u32 %v2362, 16
          %v2521 = vrot.slane %v2519, 5
          %v2522 = vor.u32 %v2518, %v2521
          %v2523 = vrot.slane %v2522, 4
          %v2525 = vshll.u32 %v2363, 16
          %v2527 = vrot.slane %v2525, 5
          %v2528 = vsel %vm874, %v2523, %v2527
          %v2529 = vshrl.u32 %v2363, 16
          %v2531 = vrot.slane %v2529, 4
          %v2532 = vor.u32 %v2531, %v2527
          %v2533 = vrot.slane %v2532, 4
          %v2535 = vshll.u32 %v2364, 16
          %v2537 = vrot.slane %v2535, 5
          %v2538 = vsel %vm874, %v2533, %v2537
          %v2540 = vshrl.u32 %v2365, 16
          %v2542 = vrot.slane %v2540, 4
          %v2543 = vshll.u32 %v2365, 16
          %v2545 = vrot.slane %v2543, 5
          %v2546 = vor.u32 %v2542, %v2545
          %v2547 = vrot.slane %v2546, 4
          %v2549 = vshll.u32 %v2366, 16
          %v2551 = vrot.slane %v2549, 5
          %v2552 = vsel %vm874, %v2547, %v2551
          %v2553 = vshrl.u32 %v2366, 16
          %v2555 = vrot.slane %v2553, 4
          %v2556 = vor.u32 %v2555, %v2551
          %v2557 = vrot.slane %v2556, 4
          %v2559 = vshll.u32 %v2367, 16
          %v2561 = vrot.slane %v2559, 5
          %v2562 = vsel %vm874, %v2557, %v2561
          %v2564 = vshrl.u32 %v2368, 16
          %v2566 = vrot.slane %v2564, 4
          %v2567 = vshll.u32 %v2368, 16
          %v2569 = vrot.slane %v2567, 5
          %v2570 = vor.u32 %v2566, %v2569
          %v2571 = vrot.slane %v2570, 4
          %v2573 = vshll.u32 %v2369, 16
          %v2575 = vrot.slane %v2573, 5
          %v2576 = vsel %vm874, %v2571, %v2575
          %v2577 = vshrl.u32 %v2369, 16
          %v2579 = vrot.slane %v2577, 4
          %v2580 = vor.u32 %v2579, %v2575
          %v2581 = vrot.slane %v2580, 4
          %v2583 = vshll.u32 %v2370, 16
          %v2585 = vrot.slane %v2583, 5
          %v2586 = vsel %vm874, %v2581, %v2585
          %v2588 = vshrl.u32 %v2371, 16
          %v2590 = vrot.slane %v2588, 4
          %v2591 = vshll.u32 %v2371, 16
          %v2593 = vrot.slane %v2591, 5
          %v2594 = vor.u32 %v2590, %v2593
          %v2595 = vrot.slane %v2594, 4
          %v2597 = vshll.u32 %v2372, 16
          %v2599 = vrot.slane %v2597, 5
          %v2600 = vsel %vm874, %v2595, %v2599
          %v2601 = vshrl.u32 %v2372, 16
          %v2603 = vrot.slane %v2601, 4
          %v2604 = vor.u32 %v2603, %v2599
          %v2605 = vrot.slane %v2604, 4
          %v2607 = vshll.u32 %v2373, 16
          %v2609 = vrot.slane %v2607, 5
          %v2610 = vsel %vm874, %v2605, %v2609
          %v2612 = vshrl.u32 %v2374, 16
          %v2614 = vrot.slane %v2612, 4
          %v2615 = vshll.u32 %v2374, 16
          %v2617 = vrot.slane %v2615, 5
          %v2618 = vor.u32 %v2614, %v2617
          %v2619 = vrot.slane %v2618, 4
          %v2621 = vshll.u32 %v2375, 16
          %v2623 = vrot.slane %v2621, 5
          %v2624 = vsel %vm874, %v2619, %v2623
          %v2625 = vshrl.u32 %v2375, 16
          %v2627 = vrot.slane %v2625, 4
          %v2628 = vor.u32 %v2627, %v2623
          %v2629 = vrot.slane %v2628, 4
          %v2631 = vshll.u32 %v2376, 16
          %v2633 = vrot.slane %v2631, 5
          %v2634 = vsel %vm874, %v2629, %v2633
          %v2636 = vshrl.u32 %v2377, 16
          %v2638 = vrot.slane %v2636, 4
          %v2639 = vshll.u32 %v2377, 16
          %v2641 = vrot.slane %v2639, 5
          %v2642 = vor.u32 %v2638, %v2641
          %v2643 = vrot.slane %v2642, 4
          %v2645 = vshll.u32 %v2378, 16
          %v2647 = vrot.slane %v2645, 5
          %v2648 = vsel %vm874, %v2643, %v2647
          %v2649 = vshrl.u32 %v2378, 16
          %v2651 = vrot.slane %v2649, 4
          %v2652 = vor.u32 %v2651, %v2647
          %v2653 = vrot.slane %v2652, 4
          %v2655 = vshll.u32 %v2379, 16
          %v2657 = vrot.slane %v2655, 5
          %v2658 = vsel %vm874, %v2653, %v2657
          %v2660 = vshrl.u32 %v2380, 16
          %v2662 = vrot.slane %v2660, 4
          %v2663 = vshll.u32 %v2380, 16
          %v2665 = vrot.slane %v2663, 5
          %v2666 = vor.u32 %v2662, %v2665
          %v2667 = vrot.slane %v2666, 4
          %v2669 = vshll.u32 %v2381, 16
          %v2671 = vrot.slane %v2669, 5
          %v2672 = vsel %vm874, %v2667, %v2671
          %v2673 = vshrl.u32 %v2381, 16
          %v2675 = vrot.slane %v2673, 4
          %v2676 = vor.u32 %v2675, %v2671
          %v2677 = vrot.slane %v2676, 4
          %v2679 = vshll.u32 %v2382, 16
          %v2681 = vrot.slane %v2679, 5
          %v2682 = vsel %vm874, %v2677, %v2681
          %v2684 = vshrl.u32 %v2383, 16
          %v2686 = vrot.slane %v2684, 4
          %v2687 = vshll.u32 %v2383, 16
          %v2689 = vrot.slane %v2687, 5
          %v2690 = vor.u32 %v2686, %v2689
          %v2691 = vrot.slane %v2690, 4
          %v2693 = vshll.u32 %v2384, 16
          %v2695 = vrot.slane %v2693, 5
          %v2696 = vsel %vm874, %v2691, %v2695
          %v2697 = vshrl.u32 %v2384, 16
          %v2699 = vrot.slane %v2697, 4
          %v2700 = vor.u32 %v2699, %v2695
          %v2701 = vrot.slane %v2700, 4
          %v2703 = vshll.u32 %v2385, 16
          %v2705 = vrot.slane %v2703, 5
          %v2706 = vsel %vm874, %v2701, %v2705
          %v2708 = vshrl.u32 %v2386, 16
          %v2710 = vrot.slane %v2708, 4
          %v2711 = vshll.u32 %v2386, 16
          %v2713 = vrot.slane %v2711, 5
          %v2714 = vor.u32 %v2710, %v2713
          %v2715 = vrot.slane %v2714, 4
          %v2717 = vshll.u32 %v2387, 16
          %v2719 = vrot.slane %v2717, 5
          %v2720 = vsel %vm874, %v2715, %v2719
          %v2721 = vshrl.u32 %v2387, 16
          %v2723 = vrot.slane %v2721, 4
          %v2724 = vor.u32 %v2723, %v2719
          %v2725 = vrot.slane %v2724, 4
          %v2727 = vshll.u32 %v2388, 16
          %v2729 = vrot.slane %v2727, 5
          %v2730 = vsel %vm874, %v2725, %v2729
          %v2732 = vshrl.u32 %v2389, 16
          %v2734 = vrot.slane %v2732, 4
          %v2735 = vshll.u32 %v2389, 16
          %v2737 = vrot.slane %v2735, 5
          %v2738 = vor.u32 %v2734, %v2737
          %v2739 = vrot.slane %v2738, 4
          %v2741 = vshll.u32 %v2390, 16
          %v2743 = vrot.slane %v2741, 5
          %v2744 = vsel %vm874, %v2739, %v2743
          %v2745 = vshrl.u32 %v2390, 16
          %v2747 = vrot.slane %v2745, 4
          %v2748 = vor.u32 %v2747, %v2743
          %v2749 = vrot.slane %v2748, 4
          %v2751 = vshll.u32 %v2391, 16
          %v2753 = vrot.slane %v2751, 5
          %v2754 = vsel %vm874, %v2749, %v2753
          %v2756 = vshrl.u32 %v2392, 16
          %v2758 = vrot.slane %v2756, 4
          %v2759 = vshll.u32 %v2392, 16
          %v2761 = vrot.slane %v2759, 5
          %v2762 = vor.u32 %v2758, %v2761
          %v2763 = vrot.slane %v2762, 4
          %v2765 = vshll.u32 %v2393, 16
          %v2767 = vrot.slane %v2765, 5
          %v2768 = vsel %vm874, %v2763, %v2767
          %v2769 = vshrl.u32 %v2393, 16
          %v2771 = vrot.slane %v2769, 4
          %v2772 = vor.u32 %v2771, %v2767
          %v2773 = vrot.slane %v2772, 4
          %v2775 = vshll.u32 %v2394, 16
          %v2777 = vrot.slane %v2775, 5
          %v2778 = vsel %vm874, %v2773, %v2777
          %v2779 = vld [vmem:[%s854 + $0x8] sm:$0x3]
          %v2780 = vunpack.c.l.b16 %v2408
          %v2781 = vunpack.c.l.b16 %v2418
          %v2782 = vunpack.c.l.b16 %v2432
          %v2783 = vunpack.c.l.b16 %v2442
          %v2784 = vunpack.c.l.b16 %v2456
          %v2785 = vunpack.c.l.b16 %v2466
          %v2786 = vunpack.c.l.b16 %v2480
          %v2787 = vunpack.c.l.b16 %v2490
          %v2788 = vunpack.c.l.b16 %v2504
          %v2789 = vunpack.c.l.b16 %v2514
          %v2790 = vunpack.c.l.b16 %v2528
          %v2791 = vunpack.c.l.b16 %v2538
          %v2792 = vunpack.c.l.b16 %v2552
          %v2793 = vunpack.c.l.b16 %v2562
          %v2794 = vunpack.c.l.b16 %v2576
          %v2795 = vunpack.c.l.b16 %v2586
          %v2796 = vunpack.c.l.b16 %v2600
          %v2797 = vunpack.c.l.b16 %v2610
          %v2798 = vunpack.c.l.b16 %v2624
          %v2799 = vunpack.c.l.b16 %v2634
          %v2800 = vunpack.c.l.b16 %v2648
          %v2801 = vunpack.c.l.b16 %v2658
          %v2802 = vunpack.c.l.b16 %v2672
          %v2803 = vunpack.c.l.b16 %v2682
          %v2804 = vunpack.c.l.b16 %v2696
          %v2805 = vunpack.c.l.b16 %v2706
          %v2806 = vunpack.c.l.b16 %v2720
          %v2807 = vunpack.c.l.b16 %v2730
          %v2808 = vunpack.c.l.b16 %v2744
          %v2809 = vunpack.c.l.b16 %v2754
          %v2810 = vunpack.c.l.b16 %v2768
          %v2811 = vunpack.c.l.b16 %v2778
          %v2812 = vpack.c.b16 %v2781, %v2780
          %v2813 = vpack.c.b16 %v2783, %v2782
          %v2814 = vpack.c.b16 %v2785, %v2784
          %v2815 = vpack.c.b16 %v2787, %v2786
          %v2816 = vpack.c.b16 %v2789, %v2788
          %v2817 = vpack.c.b16 %v2791, %v2790
          %v2818 = vpack.c.b16 %v2793, %v2792
          %v2819 = vpack.c.b16 %v2795, %v2794
          %v2820 = vpack.c.b16 %v2797, %v2796
          %v2821 = vpack.c.b16 %v2799, %v2798
          %v2822 = vpack.c.b16 %v2801, %v2800
          %v2823 = vpack.c.b16 %v2803, %v2802
          %v2824 = vpack.c.b16 %v2805, %v2804
          %v2825 = vpack.c.b16 %v2807, %v2806
          %v2826 = vpack.c.b16 %v2809, %v2808
          %v2827 = vpack.c.b16 %v2811, %v2810
          %v2829 = vsel %vm1312, %v2812, 0
          %v2832 = vsel %vm1312, %v2813, 0
          %v2835 = vsel %vm1312, %v2814, 0
          %v2838 = vsel %vm1312, %v2815, 0
          %v2841 = vsel %vm1312, %v2816, 0
          %v2844 = vsel %vm1312, %v2817, 0
          %v2847 = vsel %vm1312, %v2818, 0
          %v2850 = vsel %vm1312, %v2819, 0
          %v2853 = vsel %vm1312, %v2820, 0
          %v2856 = vsel %vm1312, %v2821, 0
          %v2859 = vsel %vm1312, %v2822, 0
          %v2862 = vsel %vm1312, %v2823, 0
          %v2865 = vsel %vm1312, %v2824, 0
          %v2868 = vsel %vm1312, %v2825, 0
          %v2871 = vsel %vm1312, %v2826, 0
          %v2874 = vsel %vm1312, %v2827, 0
          %v2877 = vsel %vm1361, %v2779, 0
          %2879 = vmatpush.bf16.msra.mxu0 0
          %2880 = vmatpush.bf16.msra.mxu0 0
          %2881 = vmatpush.bf16.msra.mxu0 0
          %2882 = vmatpush.bf16.msra.mxu0 0
          %2883 = vmatpush.bf16.msra.mxu0 0
          %2884 = vmatpush.bf16.msra.mxu0 0
          %2885 = vmatpush.bf16.msra.mxu0 0
          %2886 = vmatpush.bf16.msra.mxu0 %v2877
          %2887 = vmatmul.bf16.gmra.mxu0 %v2829
          %v2888 = vpop.f32.mrf.mxu0
          %v2889 = vadd.f32 0.0, %v2888
          %v2890 = vpop.f32.mrf.mxu0
          %v2891 = vadd.f32 0.0, %v2890
          %2892 = vmatmul.bf16.gmra.mxu0 %v2832
          %v2893 = vpop.f32.mrf.mxu0
          %v2894 = vadd.f32 0.0, %v2893
          %v2895 = vpop.f32.mrf.mxu0
          %v2896 = vadd.f32 0.0, %v2895
          %2897 = vmatmul.bf16.gmra.mxu0 %v2835
          %v2898 = vpop.f32.mrf.mxu0
          %v2899 = vadd.f32 0.0, %v2898
          %v2900 = vpop.f32.mrf.mxu0
          %v2901 = vadd.f32 0.0, %v2900
          %2902 = vmatmul.bf16.gmra.mxu0 %v2838
          %v2903 = vpop.f32.mrf.mxu0
          %v2904 = vadd.f32 0.0, %v2903
          %v2905 = vpop.f32.mrf.mxu0
          %v2906 = vadd.f32 0.0, %v2905
          %2907 = vmatmul.bf16.gmra.mxu0 %v2841
          %v2908 = vpop.f32.mrf.mxu0
          %v2909 = vadd.f32 0.0, %v2908
          %v2910 = vpop.f32.mrf.mxu0
          %v2911 = vadd.f32 0.0, %v2910
          %2912 = vmatmul.bf16.gmra.mxu0 %v2844
          %v2913 = vpop.f32.mrf.mxu0
          %v2914 = vadd.f32 0.0, %v2913
          %v2915 = vpop.f32.mrf.mxu0
          %v2916 = vadd.f32 0.0, %v2915
          %2917 = vmatmul.bf16.gmra.mxu0 %v2847
          %v2918 = vpop.f32.mrf.mxu0
          %v2919 = vadd.f32 0.0, %v2918
          %v2920 = vpop.f32.mrf.mxu0
          %v2921 = vadd.f32 0.0, %v2920
          %2922 = vmatmul.bf16.gmra.mxu0 %v2850
          %v2923 = vpop.f32.mrf.mxu0
          %v2924 = vadd.f32 0.0, %v2923
          %v2925 = vpop.f32.mrf.mxu0
          %v2926 = vadd.f32 0.0, %v2925
          %2927 = vmatmul.bf16.gmra.mxu0 %v2853
          %v2928 = vpop.f32.mrf.mxu0
          %v2929 = vadd.f32 0.0, %v2928
          %v2930 = vpop.f32.mrf.mxu0
          %v2931 = vadd.f32 0.0, %v2930
          %2932 = vmatmul.bf16.gmra.mxu0 %v2856
          %v2933 = vpop.f32.mrf.mxu0
          %v2934 = vadd.f32 0.0, %v2933
          %v2935 = vpop.f32.mrf.mxu0
          %v2936 = vadd.f32 0.0, %v2935
          %2937 = vmatmul.bf16.gmra.mxu0 %v2859
          %v2938 = vpop.f32.mrf.mxu0
          %v2939 = vadd.f32 0.0, %v2938
          %v2940 = vpop.f32.mrf.mxu0
          %v2941 = vadd.f32 0.0, %v2940
          %2942 = vmatmul.bf16.gmra.mxu0 %v2862
          %v2943 = vpop.f32.mrf.mxu0
          %v2944 = vadd.f32 0.0, %v2943
          %v2945 = vpop.f32.mrf.mxu0
          %v2946 = vadd.f32 0.0, %v2945
          %2947 = vmatmul.bf16.gmra.mxu0 %v2865
          %v2948 = vpop.f32.mrf.mxu0
          %v2949 = vadd.f32 0.0, %v2948
          %v2950 = vpop.f32.mrf.mxu0
          %v2951 = vadd.f32 0.0, %v2950
          %2952 = vmatmul.bf16.gmra.mxu0 %v2868
          %v2953 = vpop.f32.mrf.mxu0
          %v2954 = vadd.f32 0.0, %v2953
          %v2955 = vpop.f32.mrf.mxu0
          %v2956 = vadd.f32 0.0, %v2955
          %2957 = vmatmul.bf16.gmra.mxu0 %v2871
          %v2958 = vpop.f32.mrf.mxu0
          %v2959 = vadd.f32 0.0, %v2958
          %v2960 = vpop.f32.mrf.mxu0
          %v2961 = vadd.f32 0.0, %v2960
          %2962 = vmatmul.bf16.gmra.mxu0 %v2874
          %v2963 = vpop.f32.mrf.mxu0
          %v2964 = vadd.f32 0.0, %v2963
          %v2965 = vpop.f32.mrf.mxu0
          %v2966 = vadd.f32 0.0, %v2965
          %2967 = vdwg.mxu0
          %v2968 = vadd.f32 %v2315, %v2889
          %v2969 = vadd.f32 %v2316, %v2891
          %v2970 = vadd.f32 %v2317, %v2894
          %v2971 = vadd.f32 %v2318, %v2896
          %v2972 = vadd.f32 %v2319, %v2899
          %v2973 = vadd.f32 %v2320, %v2901
          %v2974 = vadd.f32 %v2321, %v2904
          %v2975 = vadd.f32 %v2322, %v2906
          %v2976 = vadd.f32 %v2323, %v2909
          %v2977 = vadd.f32 %v2324, %v2911
          %v2978 = vadd.f32 %v2325, %v2914
          %v2979 = vadd.f32 %v2326, %v2916
          %v2980 = vadd.f32 %v2327, %v2919
          %v2981 = vadd.f32 %v2328, %v2921
          %v2982 = vadd.f32 %v2329, %v2924
          %v2983 = vadd.f32 %v2330, %v2926
          %v2984 = vadd.f32 %v2331, %v2929
          %v2985 = vadd.f32 %v2332, %v2931
          %v2986 = vadd.f32 %v2333, %v2934
          %v2987 = vadd.f32 %v2334, %v2936
          %v2988 = vadd.f32 %v2335, %v2939
          %v2989 = vadd.f32 %v2336, %v2941
          %v2990 = vadd.f32 %v2337, %v2944
          %v2991 = vadd.f32 %v2338, %v2946
          %v2992 = vadd.f32 %v2339, %v2949
          %v2993 = vadd.f32 %v2340, %v2951
          %v2994 = vadd.f32 %v2341, %v2954
          %v2995 = vadd.f32 %v2342, %v2956
          %v2996 = vadd.f32 %v2343, %v2959
          %v2997 = vadd.f32 %v2344, %v2961
          %v2998 = vadd.f32 %v2345, %v2964
          %v2999 = vadd.f32 %v2346, %v2966
          %v3000 = vld [vmem:[%s699] sm:$0xe]
          %v3001 = vld [vmem:[%s699 + $0xc] sm:$0xe]
          %v3002 = vld [vmem:[%s699 + $0x18] sm:$0xe]
          %v3003 = vld [vmem:[%s699 + $0x24] sm:$0xe]
          %v3004 = vld [vmem:[%s699 + $0x30] sm:$0xe]
          %v3005 = vld [vmem:[%s699 + $0x3c] sm:$0xe]
          %v3006 = vld [vmem:[%s699 + $0x48] sm:$0xe]
          %v3007 = vld [vmem:[%s699 + $0x54] sm:$0xe]
          %v3008 = vld [vmem:[%s699 + $0x60] sm:$0xe]
          %v3009 = vld [vmem:[%s699 + $0x6c] sm:$0xe]
          %v3010 = vld [vmem:[%s699 + $0x78] sm:$0xe]
          %v3011 = vld [vmem:[%s699 + $0x84] sm:$0xe]
          %v3012 = vld [vmem:[%s699 + $0x90] sm:$0xe]
          %v3013 = vld [vmem:[%s699 + $0x9c] sm:$0xe]
          %v3014 = vld [vmem:[%s699 + $0xa8] sm:$0xe]
          %v3015 = vld [vmem:[%s699 + $0xb4] sm:$0xe]
          %v3064 = vrot.slane %v3000, 5
          %v3065 = vrot.slane %v3064, 4
          %v3066 = vrot.slane %v2348, 5
          %v3067 = vsel %vm1724, %v3065, %v3066
          %v3068 = vrot.slane %v3066, 4
          %v3069 = vrot.slane %v2349, 5
          %v3070 = vsel %vm1724, %v3068, %v3069
          %v3071 = vrot.slane %v3001, 5
          %v3072 = vrot.slane %v3071, 4
          %v3073 = vrot.slane %v2351, 5
          %v3074 = vsel %vm1724, %v3072, %v3073
          %v3075 = vrot.slane %v3073, 4
          %v3076 = vrot.slane %v2352, 5
          %v3077 = vsel %vm1724, %v3075, %v3076
          %v3078 = vrot.slane %v3002, 5
          %v3079 = vrot.slane %v3078, 4
          %v3080 = vrot.slane %v2354, 5
          %v3081 = vsel %vm1724, %v3079, %v3080
          %v3082 = vrot.slane %v3080, 4
          %v3083 = vrot.slane %v2355, 5
          %v3084 = vsel %vm1724, %v3082, %v3083
          %v3085 = vrot.slane %v3003, 5
          %v3086 = vrot.slane %v3085, 4
          %v3087 = vrot.slane %v2357, 5
          %v3088 = vsel %vm1724, %v3086, %v3087
          %v3089 = vrot.slane %v3087, 4
          %v3090 = vrot.slane %v2358, 5
          %v3091 = vsel %vm1724, %v3089, %v3090
          %v3092 = vrot.slane %v3004, 5
          %v3093 = vrot.slane %v3092, 4
          %v3094 = vrot.slane %v2360, 5
          %v3095 = vsel %vm1724, %v3093, %v3094
          %v3096 = vrot.slane %v3094, 4
          %v3097 = vrot.slane %v2361, 5
          %v3098 = vsel %vm1724, %v3096, %v3097
          %v3099 = vrot.slane %v3005, 5
          %v3100 = vrot.slane %v3099, 4
          %v3101 = vrot.slane %v2363, 5
          %v3102 = vsel %vm1724, %v3100, %v3101
          %v3103 = vrot.slane %v3101, 4
          %v3104 = vrot.slane %v2364, 5
          %v3105 = vsel %vm1724, %v3103, %v3104
          %v3106 = vrot.slane %v3006, 5
          %v3107 = vrot.slane %v3106, 4
          %v3108 = vrot.slane %v2366, 5
          %v3109 = vsel %vm1724, %v3107, %v3108
          %v3110 = vrot.slane %v3108, 4
          %v3111 = vrot.slane %v2367, 5
          %v3112 = vsel %vm1724, %v3110, %v3111
          %v3113 = vrot.slane %v3007, 5
          %v3114 = vrot.slane %v3113, 4
          %v3115 = vrot.slane %v2369, 5
          %v3116 = vsel %vm1724, %v3114, %v3115
          %v3117 = vrot.slane %v3115, 4
          %v3118 = vrot.slane %v2370, 5
          %v3119 = vsel %vm1724, %v3117, %v3118
          %v3120 = vrot.slane %v3008, 5
          %v3121 = vrot.slane %v3120, 4
          %v3122 = vrot.slane %v2372, 5
          %v3123 = vsel %vm1724, %v3121, %v3122
          %v3124 = vrot.slane %v3122, 4
          %v3125 = vrot.slane %v2373, 5
          %v3126 = vsel %vm1724, %v3124, %v3125
          %v3127 = vrot.slane %v3009, 5
          %v3128 = vrot.slane %v3127, 4
          %v3129 = vrot.slane %v2375, 5
          %v3130 = vsel %vm1724, %v3128, %v3129
          %v3131 = vrot.slane %v3129, 4
          %v3132 = vrot.slane %v2376, 5
          %v3133 = vsel %vm1724, %v3131, %v3132
          %v3134 = vrot.slane %v3010, 5
          %v3135 = vrot.slane %v3134, 4
          %v3136 = vrot.slane %v2378, 5
          %v3137 = vsel %vm1724, %v3135, %v3136
          %v3138 = vrot.slane %v3136, 4
          %v3139 = vrot.slane %v2379, 5
          %v3140 = vsel %vm1724, %v3138, %v3139
          %v3141 = vrot.slane %v3011, 5
          %v3142 = vrot.slane %v3141, 4
          %v3143 = vrot.slane %v2381, 5
          %v3144 = vsel %vm1724, %v3142, %v3143
          %v3145 = vrot.slane %v3143, 4
          %v3146 = vrot.slane %v2382, 5
          %v3147 = vsel %vm1724, %v3145, %v3146
          %v3148 = vrot.slane %v3012, 5
          %v3149 = vrot.slane %v3148, 4
          %v3150 = vrot.slane %v2384, 5
          %v3151 = vsel %vm1724, %v3149, %v3150
          %v3152 = vrot.slane %v3150, 4
          %v3153 = vrot.slane %v2385, 5
          %v3154 = vsel %vm1724, %v3152, %v3153
          %v3155 = vrot.slane %v3013, 5
          %v3156 = vrot.slane %v3155, 4
          %v3157 = vrot.slane %v2387, 5
          %v3158 = vsel %vm1724, %v3156, %v3157
          %v3159 = vrot.slane %v3157, 4
          %v3160 = vrot.slane %v2388, 5
          %v3161 = vsel %vm1724, %v3159, %v3160
          %v3162 = vrot.slane %v3014, 5
          %v3163 = vrot.slane %v3162, 4
          %v3164 = vrot.slane %v2390, 5
          %v3165 = vsel %vm1724, %v3163, %v3164
          %v3166 = vrot.slane %v3164, 4
          %v3167 = vrot.slane %v2391, 5
          %v3168 = vsel %vm1724, %v3166, %v3167
          %v3169 = vrot.slane %v3015, 5
          %v3170 = vrot.slane %v3169, 4
          %v3171 = vrot.slane %v2393, 5
          %v3172 = vsel %vm1724, %v3170, %v3171
          %v3173 = vrot.slane %v3171, 4
          %v3174 = vrot.slane %v2394, 5
          %v3175 = vsel %vm1724, %v3173, %v3174
          %v3176 = vld [vmem:[%s854 + $0x8] sm:$0xc]
          %v3177 = vunpack.c.l.b16 %v3067
          %v3178 = vunpack.c.l.b16 %v3070
          %v3179 = vunpack.c.l.b16 %v3074
          %v3180 = vunpack.c.l.b16 %v3077
          %v3181 = vunpack.c.l.b16 %v3081
          %v3182 = vunpack.c.l.b16 %v3084
          %v3183 = vunpack.c.l.b16 %v3088
          %v3184 = vunpack.c.l.b16 %v3091
          %v3185 = vunpack.c.l.b16 %v3095
          %v3186 = vunpack.c.l.b16 %v3098
          %v3187 = vunpack.c.l.b16 %v3102
          %v3188 = vunpack.c.l.b16 %v3105
          %v3189 = vunpack.c.l.b16 %v3109
          %v3190 = vunpack.c.l.b16 %v3112
          %v3191 = vunpack.c.l.b16 %v3116
          %v3192 = vunpack.c.l.b16 %v3119
          %v3193 = vunpack.c.l.b16 %v3123
          %v3194 = vunpack.c.l.b16 %v3126
          %v3195 = vunpack.c.l.b16 %v3130
          %v3196 = vunpack.c.l.b16 %v3133
          %v3197 = vunpack.c.l.b16 %v3137
          %v3198 = vunpack.c.l.b16 %v3140
          %v3199 = vunpack.c.l.b16 %v3144
          %v3200 = vunpack.c.l.b16 %v3147
          %v3201 = vunpack.c.l.b16 %v3151
          %v3202 = vunpack.c.l.b16 %v3154
          %v3203 = vunpack.c.l.b16 %v3158
          %v3204 = vunpack.c.l.b16 %v3161
          %v3205 = vunpack.c.l.b16 %v3165
          %v3206 = vunpack.c.l.b16 %v3168
          %v3207 = vunpack.c.l.b16 %v3172
          %v3208 = vunpack.c.l.b16 %v3175
          %v3209 = vpack.c.b16 %v3178, %v3177
          %v3210 = vpack.c.b16 %v3180, %v3179
          %v3211 = vpack.c.b16 %v3182, %v3181
          %v3212 = vpack.c.b16 %v3184, %v3183
          %v3213 = vpack.c.b16 %v3186, %v3185
          %v3214 = vpack.c.b16 %v3188, %v3187
          %v3215 = vpack.c.b16 %v3190, %v3189
          %v3216 = vpack.c.b16 %v3192, %v3191
          %v3217 = vpack.c.b16 %v3194, %v3193
          %v3218 = vpack.c.b16 %v3196, %v3195
          %v3219 = vpack.c.b16 %v3198, %v3197
          %v3220 = vpack.c.b16 %v3200, %v3199
          %v3221 = vpack.c.b16 %v3202, %v3201
          %v3222 = vpack.c.b16 %v3204, %v3203
          %v3223 = vpack.c.b16 %v3206, %v3205
          %v3224 = vpack.c.b16 %v3208, %v3207
          %v3226 = vunpack.c.l.b16 %v3176
          %v3227 = vpack.c.b16 %v3226, %v3226
          %v3228 = vrot.slane %v3227, 2
          %v3230 = vsel %vm1312, %v3209, 0
          %v3233 = vsel %vm1312, %v3210, 0
          %v3236 = vsel %vm1312, %v3211, 0
          %v3239 = vsel %vm1312, %v3212, 0
          %v3242 = vsel %vm1312, %v3213, 0
          %v3245 = vsel %vm1312, %v3214, 0
          %v3248 = vsel %vm1312, %v3215, 0
          %v3251 = vsel %vm1312, %v3216, 0
          %v3254 = vsel %vm1312, %v3217, 0
          %v3257 = vsel %vm1312, %v3218, 0
          %v3260 = vsel %vm1312, %v3219, 0
          %v3263 = vsel %vm1312, %v3220, 0
          %v3266 = vsel %vm1312, %v3221, 0
          %v3269 = vsel %vm1312, %v3222, 0
          %v3272 = vsel %vm1312, %v3223, 0
          %v3275 = vsel %vm1312, %v3224, 0
          %v3278 = vsel %vm1361, %v3228, 0
          %3280 = vmatpush.bf16.msra.mxu0 0
          %3281 = vmatpush.bf16.msra.mxu0 0
          %3282 = vmatpush.bf16.msra.mxu0 0
          %3283 = vmatpush.bf16.msra.mxu0 0
          %3284 = vmatpush.bf16.msra.mxu0 0
          %3285 = vmatpush.bf16.msra.mxu0 0
          %3286 = vmatpush.bf16.msra.mxu0 0
          %3287 = vmatpush.bf16.msra.mxu0 %v3278
          %3288 = vmatmul.bf16.gmra.mxu0 %v3230
          %v3289 = vpop.f32.mrf.mxu0
          %v3290 = vadd.f32 0.0, %v3289
          %v3291 = vpop.f32.mrf.mxu0
          %v3292 = vadd.f32 0.0, %v3291
          %3293 = vmatmul.bf16.gmra.mxu0 %v3233
          %v3294 = vpop.f32.mrf.mxu0
          %v3295 = vadd.f32 0.0, %v3294
          %v3296 = vpop.f32.mrf.mxu0
          %v3297 = vadd.f32 0.0, %v3296
          %3298 = vmatmul.bf16.gmra.mxu0 %v3236
          %v3299 = vpop.f32.mrf.mxu0
          %v3300 = vadd.f32 0.0, %v3299
          %v3301 = vpop.f32.mrf.mxu0
          %v3302 = vadd.f32 0.0, %v3301
          %3303 = vmatmul.bf16.gmra.mxu0 %v3239
          %v3304 = vpop.f32.mrf.mxu0
          %v3305 = vadd.f32 0.0, %v3304
          %v3306 = vpop.f32.mrf.mxu0
          %v3307 = vadd.f32 0.0, %v3306
          %3308 = vmatmul.bf16.gmra.mxu0 %v3242
          %v3309 = vpop.f32.mrf.mxu0
          %v3310 = vadd.f32 0.0, %v3309
          %v3311 = vpop.f32.mrf.mxu0
          %v3312 = vadd.f32 0.0, %v3311
          %3313 = vmatmul.bf16.gmra.mxu0 %v3245
          %v3314 = vpop.f32.mrf.mxu0
          %v3315 = vadd.f32 0.0, %v3314
          %v3316 = vpop.f32.mrf.mxu0
          %v3317 = vadd.f32 0.0, %v3316
          %3318 = vmatmul.bf16.gmra.mxu0 %v3248
          %v3319 = vpop.f32.mrf.mxu0
          %v3320 = vadd.f32 0.0, %v3319
          %v3321 = vpop.f32.mrf.mxu0
          %v3322 = vadd.f32 0.0, %v3321
          %3323 = vmatmul.bf16.gmra.mxu0 %v3251
          %v3324 = vpop.f32.mrf.mxu0
          %v3325 = vadd.f32 0.0, %v3324
          %v3326 = vpop.f32.mrf.mxu0
          %v3327 = vadd.f32 0.0, %v3326
          %3328 = vmatmul.bf16.gmra.mxu0 %v3254
          %v3329 = vpop.f32.mrf.mxu0
          %v3330 = vadd.f32 0.0, %v3329
          %v3331 = vpop.f32.mrf.mxu0
          %v3332 = vadd.f32 0.0, %v3331
          %3333 = vmatmul.bf16.gmra.mxu0 %v3257
          %v3334 = vpop.f32.mrf.mxu0
          %v3335 = vadd.f32 0.0, %v3334
          %v3336 = vpop.f32.mrf.mxu0
          %v3337 = vadd.f32 0.0, %v3336
          %3338 = vmatmul.bf16.gmra.mxu0 %v3260
          %v3339 = vpop.f32.mrf.mxu0
          %v3340 = vadd.f32 0.0, %v3339
          %v3341 = vpop.f32.mrf.mxu0
          %v3342 = vadd.f32 0.0, %v3341
          %3343 = vmatmul.bf16.gmra.mxu0 %v3263
          %v3344 = vpop.f32.mrf.mxu0
          %v3345 = vadd.f32 0.0, %v3344
          %v3346 = vpop.f32.mrf.mxu0
          %v3347 = vadd.f32 0.0, %v3346
          %3348 = vmatmul.bf16.gmra.mxu0 %v3266
          %v3349 = vpop.f32.mrf.mxu0
          %v3350 = vadd.f32 0.0, %v3349
          %v3351 = vpop.f32.mrf.mxu0
          %v3352 = vadd.f32 0.0, %v3351
          %3353 = vmatmul.bf16.gmra.mxu0 %v3269
          %v3354 = vpop.f32.mrf.mxu0
          %v3355 = vadd.f32 0.0, %v3354
          %v3356 = vpop.f32.mrf.mxu0
          %v3357 = vadd.f32 0.0, %v3356
          %3358 = vmatmul.bf16.gmra.mxu0 %v3272
          %v3359 = vpop.f32.mrf.mxu0
          %v3360 = vadd.f32 0.0, %v3359
          %v3361 = vpop.f32.mrf.mxu0
          %v3362 = vadd.f32 0.0, %v3361
          %3363 = vmatmul.bf16.gmra.mxu0 %v3275
          %v3364 = vpop.f32.mrf.mxu0
          %v3365 = vadd.f32 0.0, %v3364
          %v3366 = vpop.f32.mrf.mxu0
          %v3367 = vadd.f32 0.0, %v3366
          %3368 = vdwg.mxu0
          %v3369 = vadd.f32 %v2968, %v3290
          %v3370 = vadd.f32 %v2969, %v3292
          %v3371 = vadd.f32 %v2970, %v3295
          %v3372 = vadd.f32 %v2971, %v3297
          %v3373 = vadd.f32 %v2972, %v3300
          %v3374 = vadd.f32 %v2973, %v3302
          %v3375 = vadd.f32 %v2974, %v3305
          %v3376 = vadd.f32 %v2975, %v3307
          %v3377 = vadd.f32 %v2976, %v3310
          %v3378 = vadd.f32 %v2977, %v3312
          %v3379 = vadd.f32 %v2978, %v3315
          %v3380 = vadd.f32 %v2979, %v3317
          %v3381 = vadd.f32 %v2980, %v3320
          %v3382 = vadd.f32 %v2981, %v3322
          %v3383 = vadd.f32 %v2982, %v3325
          %v3384 = vadd.f32 %v2983, %v3327
          %v3385 = vadd.f32 %v2984, %v3330
          %v3386 = vadd.f32 %v2985, %v3332
          %v3387 = vadd.f32 %v2986, %v3335
          %v3388 = vadd.f32 %v2987, %v3337
          %v3389 = vadd.f32 %v2988, %v3340
          %v3390 = vadd.f32 %v2989, %v3342
          %v3391 = vadd.f32 %v2990, %v3345
          %v3392 = vadd.f32 %v2991, %v3347
          %v3393 = vadd.f32 %v2992, %v3350
          %v3394 = vadd.f32 %v2993, %v3352
          %v3395 = vadd.f32 %v2994, %v3355
          %v3396 = vadd.f32 %v2995, %v3357
          %v3397 = vadd.f32 %v2996, %v3360
          %v3398 = vadd.f32 %v2997, %v3362
          %v3399 = vadd.f32 %v2998, %v3365
          %v3400 = vadd.f32 %v2999, %v3367
          %s3401 = scalar_lea.vmem [#allocation2], 24
          %v3402 = vld [vmem:[%s3401] sm:$0xf]
          %v3403 = vld [vmem:[%s3401 + $0x4] sm:$0xf]
          %v3404 = vld [vmem:[%s3401 + $0xc] sm:$0xf]
          %v3405 = vld [vmem:[%s3401 + $0x10] sm:$0xf]
          %v3406 = vld [vmem:[%s3401 + $0x18] sm:$0xf]
          %v3407 = vld [vmem:[%s3401 + $0x1c] sm:$0xf]
          %v3408 = vld [vmem:[%s3401 + $0x24] sm:$0xf]
          %v3409 = vld [vmem:[%s3401 + $0x28] sm:$0xf]
          %v3410 = vld [vmem:[%s3401 + $0x30] sm:$0xf]
          %v3411 = vld [vmem:[%s3401 + $0x34] sm:$0xf]
          %v3412 = vld [vmem:[%s3401 + $0x3c] sm:$0xf]
          %v3413 = vld [vmem:[%s3401 + $0x40] sm:$0xf]
          %v3414 = vld [vmem:[%s3401 + $0x48] sm:$0xf]
          %v3415 = vld [vmem:[%s3401 + $0x4c] sm:$0xf]
          %v3416 = vld [vmem:[%s3401 + $0x54] sm:$0xf]
          %v3417 = vld [vmem:[%s3401 + $0x58] sm:$0xf]
          %v3418 = vld [vmem:[%s3401 + $0x60] sm:$0xf]
          %v3419 = vld [vmem:[%s3401 + $0x64] sm:$0xf]
          %v3420 = vld [vmem:[%s3401 + $0x6c] sm:$0xf]
          %v3421 = vld [vmem:[%s3401 + $0x70] sm:$0xf]
          %v3422 = vld [vmem:[%s3401 + $0x78] sm:$0xf]
          %v3423 = vld [vmem:[%s3401 + $0x7c] sm:$0xf]
          %v3424 = vld [vmem:[%s3401 + $0x84] sm:$0xf]
          %v3425 = vld [vmem:[%s3401 + $0x88] sm:$0xf]
          %v3426 = vld [vmem:[%s3401 + $0x90] sm:$0xf]
          %v3427 = vld [vmem:[%s3401 + $0x94] sm:$0xf]
          %v3428 = vld [vmem:[%s3401 + $0x9c] sm:$0xf]
          %v3429 = vld [vmem:[%s3401 + $0xa0] sm:$0xf]
          %v3430 = vld [vmem:[%s3401 + $0xa8] sm:$0xf]
          %v3431 = vld [vmem:[%s3401 + $0xac] sm:$0xf]
          %v3432 = vld [vmem:[%s3401 + $0xb4] sm:$0xf]
          %v3433 = vld [vmem:[%s3401 + $0xb8] sm:$0xf]
          %v3434 = vld [vmem:[%s854 + $0xc] sm:$0x3]
          %v3467 = vunpack.c.l.b16 %v3402
          %v3468 = vunpack.c.l.b16 %v3403
          %v3469 = vunpack.c.l.b16 %v3404
          %v3470 = vunpack.c.l.b16 %v3405
          %v3471 = vunpack.c.l.b16 %v3406
          %v3472 = vunpack.c.l.b16 %v3407
          %v3473 = vunpack.c.l.b16 %v3408
          %v3474 = vunpack.c.l.b16 %v3409
          %v3475 = vunpack.c.l.b16 %v3410
          %v3476 = vunpack.c.l.b16 %v3411
          %v3477 = vunpack.c.l.b16 %v3412
          %v3478 = vunpack.c.l.b16 %v3413
          %v3479 = vunpack.c.l.b16 %v3414
          %v3480 = vunpack.c.l.b16 %v3415
          %v3481 = vunpack.c.l.b16 %v3416
          %v3482 = vunpack.c.l.b16 %v3417
          %v3483 = vunpack.c.l.b16 %v3418
          %v3484 = vunpack.c.l.b16 %v3419
          %v3485 = vunpack.c.l.b16 %v3420
          %v3486 = vunpack.c.l.b16 %v3421
          %v3487 = vunpack.c.l.b16 %v3422
          %v3488 = vunpack.c.l.b16 %v3423
          %v3489 = vunpack.c.l.b16 %v3424
          %v3490 = vunpack.c.l.b16 %v3425
          %v3491 = vunpack.c.l.b16 %v3426
          %v3492 = vunpack.c.l.b16 %v3427
          %v3493 = vunpack.c.l.b16 %v3428
          %v3494 = vunpack.c.l.b16 %v3429
          %v3495 = vunpack.c.l.b16 %v3430
          %v3496 = vunpack.c.l.b16 %v3431
          %v3497 = vunpack.c.l.b16 %v3432
          %v3498 = vunpack.c.l.b16 %v3433
          %v3499 = vpack.c.b16 %v3468, %v3467
          %v3500 = vpack.c.b16 %v3470, %v3469
          %v3501 = vpack.c.b16 %v3472, %v3471
          %v3502 = vpack.c.b16 %v3474, %v3473
          %v3503 = vpack.c.b16 %v3476, %v3475
          %v3504 = vpack.c.b16 %v3478, %v3477
          %v3505 = vpack.c.b16 %v3480, %v3479
          %v3506 = vpack.c.b16 %v3482, %v3481
          %v3507 = vpack.c.b16 %v3484, %v3483
          %v3508 = vpack.c.b16 %v3486, %v3485
          %v3509 = vpack.c.b16 %v3488, %v3487
          %v3510 = vpack.c.b16 %v3490, %v3489
          %v3511 = vpack.c.b16 %v3492, %v3491
          %v3512 = vpack.c.b16 %v3494, %v3493
          %v3513 = vpack.c.b16 %v3496, %v3495
          %v3514 = vpack.c.b16 %v3498, %v3497
          %v3516 = vsel %vm1312, %v3499, 0
          %v3519 = vsel %vm1312, %v3500, 0
          %v3522 = vsel %vm1312, %v3501, 0
          %v3525 = vsel %vm1312, %v3502, 0
          %v3528 = vsel %vm1312, %v3503, 0
          %v3531 = vsel %vm1312, %v3504, 0
          %v3534 = vsel %vm1312, %v3505, 0
          %v3537 = vsel %vm1312, %v3506, 0
          %v3540 = vsel %vm1312, %v3507, 0
          %v3543 = vsel %vm1312, %v3508, 0
          %v3546 = vsel %vm1312, %v3509, 0
          %v3549 = vsel %vm1312, %v3510, 0
          %v3552 = vsel %vm1312, %v3511, 0
          %v3555 = vsel %vm1312, %v3512, 0
          %v3558 = vsel %vm1312, %v3513, 0
          %v3561 = vsel %vm1312, %v3514, 0
          %v3564 = vsel %vm1361, %v3434, 0
          %3566 = vmatpush.bf16.msra.mxu0 0
          %3567 = vmatpush.bf16.msra.mxu0 0
          %3568 = vmatpush.bf16.msra.mxu0 0
          %3569 = vmatpush.bf16.msra.mxu0 0
          %3570 = vmatpush.bf16.msra.mxu0 0
          %3571 = vmatpush.bf16.msra.mxu0 0
          %3572 = vmatpush.bf16.msra.mxu0 0
          %3573 = vmatpush.bf16.msra.mxu0 %v3564
          %3574 = vmatmul.bf16.gmra.mxu0 %v3516
          %v3575 = vpop.f32.mrf.mxu0
          %v3576 = vadd.f32 0.0, %v3575
          %v3577 = vpop.f32.mrf.mxu0
          %v3578 = vadd.f32 0.0, %v3577
          %3579 = vmatmul.bf16.gmra.mxu0 %v3519
          %v3580 = vpop.f32.mrf.mxu0
          %v3581 = vadd.f32 0.0, %v3580
          %v3582 = vpop.f32.mrf.mxu0
          %v3583 = vadd.f32 0.0, %v3582
          %3584 = vmatmul.bf16.gmra.mxu0 %v3522
          %v3585 = vpop.f32.mrf.mxu0
          %v3586 = vadd.f32 0.0, %v3585
          %v3587 = vpop.f32.mrf.mxu0
          %v3588 = vadd.f32 0.0, %v3587
          %3589 = vmatmul.bf16.gmra.mxu0 %v3525
          %v3590 = vpop.f32.mrf.mxu0
          %v3591 = vadd.f32 0.0, %v3590
          %v3592 = vpop.f32.mrf.mxu0
          %v3593 = vadd.f32 0.0, %v3592
          %3594 = vmatmul.bf16.gmra.mxu0 %v3528
          %v3595 = vpop.f32.mrf.mxu0
          %v3596 = vadd.f32 0.0, %v3595
          %v3597 = vpop.f32.mrf.mxu0
          %v3598 = vadd.f32 0.0, %v3597
          %3599 = vmatmul.bf16.gmra.mxu0 %v3531
          %v3600 = vpop.f32.mrf.mxu0
          %v3601 = vadd.f32 0.0, %v3600
          %v3602 = vpop.f32.mrf.mxu0
          %v3603 = vadd.f32 0.0, %v3602
          %3604 = vmatmul.bf16.gmra.mxu0 %v3534
          %v3605 = vpop.f32.mrf.mxu0
          %v3606 = vadd.f32 0.0, %v3605
          %v3607 = vpop.f32.mrf.mxu0
          %v3608 = vadd.f32 0.0, %v3607
          %3609 = vmatmul.bf16.gmra.mxu0 %v3537
          %v3610 = vpop.f32.mrf.mxu0
          %v3611 = vadd.f32 0.0, %v3610
          %v3612 = vpop.f32.mrf.mxu0
          %v3613 = vadd.f32 0.0, %v3612
          %3614 = vmatmul.bf16.gmra.mxu0 %v3540
          %v3615 = vpop.f32.mrf.mxu0
          %v3616 = vadd.f32 0.0, %v3615
          %v3617 = vpop.f32.mrf.mxu0
          %v3618 = vadd.f32 0.0, %v3617
          %3619 = vmatmul.bf16.gmra.mxu0 %v3543
          %v3620 = vpop.f32.mrf.mxu0
          %v3621 = vadd.f32 0.0, %v3620
          %v3622 = vpop.f32.mrf.mxu0
          %v3623 = vadd.f32 0.0, %v3622
          %3624 = vmatmul.bf16.gmra.mxu0 %v3546
          %v3625 = vpop.f32.mrf.mxu0
          %v3626 = vadd.f32 0.0, %v3625
          %v3627 = vpop.f32.mrf.mxu0
          %v3628 = vadd.f32 0.0, %v3627
          %3629 = vmatmul.bf16.gmra.mxu0 %v3549
          %v3630 = vpop.f32.mrf.mxu0
          %v3631 = vadd.f32 0.0, %v3630
          %v3632 = vpop.f32.mrf.mxu0
          %v3633 = vadd.f32 0.0, %v3632
          %3634 = vmatmul.bf16.gmra.mxu0 %v3552
          %v3635 = vpop.f32.mrf.mxu0
          %v3636 = vadd.f32 0.0, %v3635
          %v3637 = vpop.f32.mrf.mxu0
          %v3638 = vadd.f32 0.0, %v3637
          %3639 = vmatmul.bf16.gmra.mxu0 %v3555
          %v3640 = vpop.f32.mrf.mxu0
          %v3641 = vadd.f32 0.0, %v3640
          %v3642 = vpop.f32.mrf.mxu0
          %v3643 = vadd.f32 0.0, %v3642
          %3644 = vmatmul.bf16.gmra.mxu0 %v3558
          %v3645 = vpop.f32.mrf.mxu0
          %v3646 = vadd.f32 0.0, %v3645
          %v3647 = vpop.f32.mrf.mxu0
          %v3648 = vadd.f32 0.0, %v3647
          %3649 = vmatmul.bf16.gmra.mxu0 %v3561
          %v3650 = vpop.f32.mrf.mxu0
          %v3651 = vadd.f32 0.0, %v3650
          %v3652 = vpop.f32.mrf.mxu0
          %v3653 = vadd.f32 0.0, %v3652
          %3654 = vdwg.mxu0
          %v3655 = vadd.f32 %v3369, %v3576
          %v3656 = vadd.f32 %v3370, %v3578
          %v3657 = vadd.f32 %v3371, %v3581
          %v3658 = vadd.f32 %v3372, %v3583
          %v3659 = vadd.f32 %v3373, %v3586
          %v3660 = vadd.f32 %v3374, %v3588
          %v3661 = vadd.f32 %v3375, %v3591
          %v3662 = vadd.f32 %v3376, %v3593
          %v3663 = vadd.f32 %v3377, %v3596
          %v3664 = vadd.f32 %v3378, %v3598
          %v3665 = vadd.f32 %v3379, %v3601
          %v3666 = vadd.f32 %v3380, %v3603
          %v3667 = vadd.f32 %v3381, %v3606
          %v3668 = vadd.f32 %v3382, %v3608
          %v3669 = vadd.f32 %v3383, %v3611
          %v3670 = vadd.f32 %v3384, %v3613
          %v3671 = vadd.f32 %v3385, %v3616
          %v3672 = vadd.f32 %v3386, %v3618
          %v3673 = vadd.f32 %v3387, %v3621
          %v3674 = vadd.f32 %v3388, %v3623
          %v3675 = vadd.f32 %v3389, %v3626
          %v3676 = vadd.f32 %v3390, %v3628
          %v3677 = vadd.f32 %v3391, %v3631
          %v3678 = vadd.f32 %v3392, %v3633
          %v3679 = vadd.f32 %v3393, %v3636
          %v3680 = vadd.f32 %v3394, %v3638
          %v3681 = vadd.f32 %v3395, %v3641
          %v3682 = vadd.f32 %v3396, %v3643
          %v3683 = vadd.f32 %v3397, %v3646
          %v3684 = vadd.f32 %v3398, %v3648
          %v3685 = vadd.f32 %v3399, %v3651
          %v3686 = vadd.f32 %v3400, %v3653
          %v3687 = vld [vmem:[%s3401] sm:$0xf]
          %v3688 = vld [vmem:[%s3401 + $0x4] sm:$0xf]
          %v3689 = vld [vmem:[%s3401 + $0x8] sm:$0x1]
          %v3690 = vld [vmem:[%s3401 + $0xc] sm:$0xf]
          %v3691 = vld [vmem:[%s3401 + $0x10] sm:$0xf]
          %v3692 = vld [vmem:[%s3401 + $0x14] sm:$0x1]
          %v3693 = vld [vmem:[%s3401 + $0x18] sm:$0xf]
          %v3694 = vld [vmem:[%s3401 + $0x1c] sm:$0xf]
          %v3695 = vld [vmem:[%s3401 + $0x20] sm:$0x1]
          %v3696 = vld [vmem:[%s3401 + $0x24] sm:$0xf]
          %v3697 = vld [vmem:[%s3401 + $0x28] sm:$0xf]
          %v3698 = vld [vmem:[%s3401 + $0x2c] sm:$0x1]
          %v3699 = vld [vmem:[%s3401 + $0x30] sm:$0xf]
          %v3700 = vld [vmem:[%s3401 + $0x34] sm:$0xf]
          %v3701 = vld [vmem:[%s3401 + $0x38] sm:$0x1]
          %v3702 = vld [vmem:[%s3401 + $0x3c] sm:$0xf]
          %v3703 = vld [vmem:[%s3401 + $0x40] sm:$0xf]
          %v3704 = vld [vmem:[%s3401 + $0x44] sm:$0x1]
          %v3705 = vld [vmem:[%s3401 + $0x48] sm:$0xf]
          %v3706 = vld [vmem:[%s3401 + $0x4c] sm:$0xf]
          %v3707 = vld [vmem:[%s3401 + $0x50] sm:$0x1]
          %v3708 = vld [vmem:[%s3401 + $0x54] sm:$0xf]
          %v3709 = vld [vmem:[%s3401 + $0x58] sm:$0xf]
          %v3710 = vld [vmem:[%s3401 + $0x5c] sm:$0x1]
          %v3711 = vld [vmem:[%s3401 + $0x60] sm:$0xf]
          %v3712 = vld [vmem:[%s3401 + $0x64] sm:$0xf]
          %v3713 = vld [vmem:[%s3401 + $0x68] sm:$0x1]
          %v3714 = vld [vmem:[%s3401 + $0x6c] sm:$0xf]
          %v3715 = vld [vmem:[%s3401 + $0x70] sm:$0xf]
          %v3716 = vld [vmem:[%s3401 + $0x74] sm:$0x1]
          %v3717 = vld [vmem:[%s3401 + $0x78] sm:$0xf]
          %v3718 = vld [vmem:[%s3401 + $0x7c] sm:$0xf]
          %v3719 = vld [vmem:[%s3401 + $0x80] sm:$0x1]
          %v3720 = vld [vmem:[%s3401 + $0x84] sm:$0xf]
          %v3721 = vld [vmem:[%s3401 + $0x88] sm:$0xf]
          %v3722 = vld [vmem:[%s3401 + $0x8c] sm:$0x1]
          %v3723 = vld [vmem:[%s3401 + $0x90] sm:$0xf]
          %v3724 = vld [vmem:[%s3401 + $0x94] sm:$0xf]
          %v3725 = vld [vmem:[%s3401 + $0x98] sm:$0x1]
          %v3726 = vld [vmem:[%s3401 + $0x9c] sm:$0xf]
          %v3727 = vld [vmem:[%s3401 + $0xa0] sm:$0xf]
          %v3728 = vld [vmem:[%s3401 + $0xa4] sm:$0x1]
          %v3729 = vld [vmem:[%s3401 + $0xa8] sm:$0xf]
          %v3730 = vld [vmem:[%s3401 + $0xac] sm:$0xf]
          %v3731 = vld [vmem:[%s3401 + $0xb0] sm:$0x1]
          %v3732 = vld [vmem:[%s3401 + $0xb4] sm:$0xf]
          %v3733 = vld [vmem:[%s3401 + $0xb8] sm:$0xf]
          %v3734 = vld [vmem:[%s3401 + $0xbc] sm:$0x1]
          %v3736 = vshrl.u32 %v3687, 16
          %v3738 = vrot.slane %v3736, 4
          %v3739 = vshll.u32 %v3687, 16
          %v3741 = vrot.slane %v3739, 5
          %v3742 = vor.u32 %v3738, %v3741
          %v3743 = vrot.slane %v3742, 4
          %v3745 = vshll.u32 %v3688, 16
          %v3747 = vrot.slane %v3745, 5
          %v3748 = vsel %vm874, %v3743, %v3747
          %v3749 = vshrl.u32 %v3688, 16
          %v3751 = vrot.slane %v3749, 4
          %v3752 = vor.u32 %v3751, %v3747
          %v3753 = vrot.slane %v3752, 4
          %v3755 = vshll.u32 %v3689, 16
          %v3757 = vrot.slane %v3755, 5
          %v3758 = vsel %vm874, %v3753, %v3757
          %v3760 = vshrl.u32 %v3690, 16
          %v3762 = vrot.slane %v3760, 4
          %v3763 = vshll.u32 %v3690, 16
          %v3765 = vrot.slane %v3763, 5
          %v3766 = vor.u32 %v3762, %v3765
          %v3767 = vrot.slane %v3766, 4
          %v3769 = vshll.u32 %v3691, 16
          %v3771 = vrot.slane %v3769, 5
          %v3772 = vsel %vm874, %v3767, %v3771
          %v3773 = vshrl.u32 %v3691, 16
          %v3775 = vrot.slane %v3773, 4
          %v3776 = vor.u32 %v3775, %v3771
          %v3777 = vrot.slane %v3776, 4
          %v3779 = vshll.u32 %v3692, 16
          %v3781 = vrot.slane %v3779, 5
          %v3782 = vsel %vm874, %v3777, %v3781
          %v3784 = vshrl.u32 %v3693, 16
          %v3786 = vrot.slane %v3784, 4
          %v3787 = vshll.u32 %v3693, 16
          %v3789 = vrot.slane %v3787, 5
          %v3790 = vor.u32 %v3786, %v3789
          %v3791 = vrot.slane %v3790, 4
          %v3793 = vshll.u32 %v3694, 16
          %v3795 = vrot.slane %v3793, 5
          %v3796 = vsel %vm874, %v3791, %v3795
          %v3797 = vshrl.u32 %v3694, 16
          %v3799 = vrot.slane %v3797, 4
          %v3800 = vor.u32 %v3799, %v3795
          %v3801 = vrot.slane %v3800, 4
          %v3803 = vshll.u32 %v3695, 16
          %v3805 = vrot.slane %v3803, 5
          %v3806 = vsel %vm874, %v3801, %v3805
          %v3808 = vshrl.u32 %v3696, 16
          %v3810 = vrot.slane %v3808, 4
          %v3811 = vshll.u32 %v3696, 16
          %v3813 = vrot.slane %v3811, 5
          %v3814 = vor.u32 %v3810, %v3813
          %v3815 = vrot.slane %v3814, 4
          %v3817 = vshll.u32 %v3697, 16
          %v3819 = vrot.slane %v3817, 5
          %v3820 = vsel %vm874, %v3815, %v3819
          %v3821 = vshrl.u32 %v3697, 16
          %v3823 = vrot.slane %v3821, 4
          %v3824 = vor.u32 %v3823, %v3819
          %v3825 = vrot.slane %v3824, 4
          %v3827 = vshll.u32 %v3698, 16
          %v3829 = vrot.slane %v3827, 5
          %v3830 = vsel %vm874, %v3825, %v3829
          %v3832 = vshrl.u32 %v3699, 16
          %v3834 = vrot.slane %v3832, 4
          %v3835 = vshll.u32 %v3699, 16
          %v3837 = vrot.slane %v3835, 5
          %v3838 = vor.u32 %v3834, %v3837
          %v3839 = vrot.slane %v3838, 4
          %v3841 = vshll.u32 %v3700, 16
          %v3843 = vrot.slane %v3841, 5
          %v3844 = vsel %vm874, %v3839, %v3843
          %v3845 = vshrl.u32 %v3700, 16
          %v3847 = vrot.slane %v3845, 4
          %v3848 = vor.u32 %v3847, %v3843
          %v3849 = vrot.slane %v3848, 4
          %v3851 = vshll.u32 %v3701, 16
          %v3853 = vrot.slane %v3851, 5
          %v3854 = vsel %vm874, %v3849, %v3853
          %v3856 = vshrl.u32 %v3702, 16
          %v3858 = vrot.slane %v3856, 4
          %v3859 = vshll.u32 %v3702, 16
          %v3861 = vrot.slane %v3859, 5
          %v3862 = vor.u32 %v3858, %v3861
          %v3863 = vrot.slane %v3862, 4
          %v3865 = vshll.u32 %v3703, 16
          %v3867 = vrot.slane %v3865, 5
          %v3868 = vsel %vm874, %v3863, %v3867
          %v3869 = vshrl.u32 %v3703, 16
          %v3871 = vrot.slane %v3869, 4
          %v3872 = vor.u32 %v3871, %v3867
          %v3873 = vrot.slane %v3872, 4
          %v3875 = vshll.u32 %v3704, 16
          %v3877 = vrot.slane %v3875, 5
          %v3878 = vsel %vm874, %v3873, %v3877
          %v3880 = vshrl.u32 %v3705, 16
          %v3882 = vrot.slane %v3880, 4
          %v3883 = vshll.u32 %v3705, 16
          %v3885 = vrot.slane %v3883, 5
          %v3886 = vor.u32 %v3882, %v3885
          %v3887 = vrot.slane %v3886, 4
          %v3889 = vshll.u32 %v3706, 16
          %v3891 = vrot.slane %v3889, 5
          %v3892 = vsel %vm874, %v3887, %v3891
          %v3893 = vshrl.u32 %v3706, 16
          %v3895 = vrot.slane %v3893, 4
          %v3896 = vor.u32 %v3895, %v3891
          %v3897 = vrot.slane %v3896, 4
          %v3899 = vshll.u32 %v3707, 16
          %v3901 = vrot.slane %v3899, 5
          %v3902 = vsel %vm874, %v3897, %v3901
          %v3904 = vshrl.u32 %v3708, 16
          %v3906 = vrot.slane %v3904, 4
          %v3907 = vshll.u32 %v3708, 16
          %v3909 = vrot.slane %v3907, 5
          %v3910 = vor.u32 %v3906, %v3909
          %v3911 = vrot.slane %v3910, 4
          %v3913 = vshll.u32 %v3709, 16
          %v3915 = vrot.slane %v3913, 5
          %v3916 = vsel %vm874, %v3911, %v3915
          %v3917 = vshrl.u32 %v3709, 16
          %v3919 = vrot.slane %v3917, 4
          %v3920 = vor.u32 %v3919, %v3915
          %v3921 = vrot.slane %v3920, 4
          %v3923 = vshll.u32 %v3710, 16
          %v3925 = vrot.slane %v3923, 5
          %v3926 = vsel %vm874, %v3921, %v3925
          %v3928 = vshrl.u32 %v3711, 16
          %v3930 = vrot.slane %v3928, 4
          %v3931 = vshll.u32 %v3711, 16
          %v3933 = vrot.slane %v3931, 5
          %v3934 = vor.u32 %v3930, %v3933
          %v3935 = vrot.slane %v3934, 4
          %v3937 = vshll.u32 %v3712, 16
          %v3939 = vrot.slane %v3937, 5
          %v3940 = vsel %vm874, %v3935, %v3939
          %v3941 = vshrl.u32 %v3712, 16
          %v3943 = vrot.slane %v3941, 4
          %v3944 = vor.u32 %v3943, %v3939
          %v3945 = vrot.slane %v3944, 4
          %v3947 = vshll.u32 %v3713, 16
          %v3949 = vrot.slane %v3947, 5
          %v3950 = vsel %vm874, %v3945, %v3949
          %v3952 = vshrl.u32 %v3714, 16
          %v3954 = vrot.slane %v3952, 4
          %v3955 = vshll.u32 %v3714, 16
          %v3957 = vrot.slane %v3955, 5
          %v3958 = vor.u32 %v3954, %v3957
          %v3959 = vrot.slane %v3958, 4
          %v3961 = vshll.u32 %v3715, 16
          %v3963 = vrot.slane %v3961, 5
          %v3964 = vsel %vm874, %v3959, %v3963
          %v3965 = vshrl.u32 %v3715, 16
          %v3967 = vrot.slane %v3965, 4
          %v3968 = vor.u32 %v3967, %v3963
          %v3969 = vrot.slane %v3968, 4
          %v3971 = vshll.u32 %v3716, 16
          %v3973 = vrot.slane %v3971, 5
          %v3974 = vsel %vm874, %v3969, %v3973
          %v3976 = vshrl.u32 %v3717, 16
          %v3978 = vrot.slane %v3976, 4
          %v3979 = vshll.u32 %v3717, 16
          %v3981 = vrot.slane %v3979, 5
          %v3982 = vor.u32 %v3978, %v3981
          %v3983 = vrot.slane %v3982, 4
          %v3985 = vshll.u32 %v3718, 16
          %v3987 = vrot.slane %v3985, 5
          %v3988 = vsel %vm874, %v3983, %v3987
          %v3989 = vshrl.u32 %v3718, 16
          %v3991 = vrot.slane %v3989, 4
          %v3992 = vor.u32 %v3991, %v3987
          %v3993 = vrot.slane %v3992, 4
          %v3995 = vshll.u32 %v3719, 16
          %v3997 = vrot.slane %v3995, 5
          %v3998 = vsel %vm874, %v3993, %v3997
          %v4000 = vshrl.u32 %v3720, 16
          %v4002 = vrot.slane %v4000, 4
          %v4003 = vshll.u32 %v3720, 16
          %v4005 = vrot.slane %v4003, 5
          %v4006 = vor.u32 %v4002, %v4005
          %v4007 = vrot.slane %v4006, 4
          %v4009 = vshll.u32 %v3721, 16
          %v4011 = vrot.slane %v4009, 5
          %v4012 = vsel %vm874, %v4007, %v4011
          %v4013 = vshrl.u32 %v3721, 16
          %v4015 = vrot.slane %v4013, 4
          %v4016 = vor.u32 %v4015, %v4011
          %v4017 = vrot.slane %v4016, 4
          %v4019 = vshll.u32 %v3722, 16
          %v4021 = vrot.slane %v4019, 5
          %v4022 = vsel %vm874, %v4017, %v4021
          %v4024 = vshrl.u32 %v3723, 16
          %v4026 = vrot.slane %v4024, 4
          %v4027 = vshll.u32 %v3723, 16
          %v4029 = vrot.slane %v4027, 5
          %v4030 = vor.u32 %v4026, %v4029
          %v4031 = vrot.slane %v4030, 4
          %v4033 = vshll.u32 %v3724, 16
          %v4035 = vrot.slane %v4033, 5
          %v4036 = vsel %vm874, %v4031, %v4035
          %v4037 = vshrl.u32 %v3724, 16
          %v4039 = vrot.slane %v4037, 4
          %v4040 = vor.u32 %v4039, %v4035
          %v4041 = vrot.slane %v4040, 4
          %v4043 = vshll.u32 %v3725, 16
          %v4045 = vrot.slane %v4043, 5
          %v4046 = vsel %vm874, %v4041, %v4045
          %v4048 = vshrl.u32 %v3726, 16
          %v4050 = vrot.slane %v4048, 4
          %v4051 = vshll.u32 %v3726, 16
          %v4053 = vrot.slane %v4051, 5
          %v4054 = vor.u32 %v4050, %v4053
          %v4055 = vrot.slane %v4054, 4
          %v4057 = vshll.u32 %v3727, 16
          %v4059 = vrot.slane %v4057, 5
          %v4060 = vsel %vm874, %v4055, %v4059
          %v4061 = vshrl.u32 %v3727, 16
          %v4063 = vrot.slane %v4061, 4
          %v4064 = vor.u32 %v4063, %v4059
          %v4065 = vrot.slane %v4064, 4
          %v4067 = vshll.u32 %v3728, 16
          %v4069 = vrot.slane %v4067, 5
          %v4070 = vsel %vm874, %v4065, %v4069
          %v4072 = vshrl.u32 %v3729, 16
          %v4074 = vrot.slane %v4072, 4
          %v4075 = vshll.u32 %v3729, 16
          %v4077 = vrot.slane %v4075, 5
          %v4078 = vor.u32 %v4074, %v4077
          %v4079 = vrot.slane %v4078, 4
          %v4081 = vshll.u32 %v3730, 16
          %v4083 = vrot.slane %v4081, 5
          %v4084 = vsel %vm874, %v4079, %v4083
          %v4085 = vshrl.u32 %v3730, 16
          %v4087 = vrot.slane %v4085, 4
          %v4088 = vor.u32 %v4087, %v4083
          %v4089 = vrot.slane %v4088, 4
          %v4091 = vshll.u32 %v3731, 16
          %v4093 = vrot.slane %v4091, 5
          %v4094 = vsel %vm874, %v4089, %v4093
          %v4096 = vshrl.u32 %v3732, 16
          %v4098 = vrot.slane %v4096, 4
          %v4099 = vshll.u32 %v3732, 16
          %v4101 = vrot.slane %v4099, 5
          %v4102 = vor.u32 %v4098, %v4101
          %v4103 = vrot.slane %v4102, 4
          %v4105 = vshll.u32 %v3733, 16
          %v4107 = vrot.slane %v4105, 5
          %v4108 = vsel %vm874, %v4103, %v4107
          %v4109 = vshrl.u32 %v3733, 16
          %v4111 = vrot.slane %v4109, 4
          %v4112 = vor.u32 %v4111, %v4107
          %v4113 = vrot.slane %v4112, 4
          %v4115 = vshll.u32 %v3734, 16
          %v4117 = vrot.slane %v4115, 5
          %v4118 = vsel %vm874, %v4113, %v4117
          %v4119 = vld [vmem:[%s854 + $0xc] sm:$0xc]
          %v4120 = vunpack.c.l.b16 %v3748
          %v4121 = vunpack.c.l.b16 %v3758
          %v4122 = vunpack.c.l.b16 %v3772
          %v4123 = vunpack.c.l.b16 %v3782
          %v4124 = vunpack.c.l.b16 %v3796
          %v4125 = vunpack.c.l.b16 %v3806
          %v4126 = vunpack.c.l.b16 %v3820
          %v4127 = vunpack.c.l.b16 %v3830
          %v4128 = vunpack.c.l.b16 %v3844
          %v4129 = vunpack.c.l.b16 %v3854
          %v4130 = vunpack.c.l.b16 %v3868
          %v4131 = vunpack.c.l.b16 %v3878
          %v4132 = vunpack.c.l.b16 %v3892
          %v4133 = vunpack.c.l.b16 %v3902
          %v4134 = vunpack.c.l.b16 %v3916
          %v4135 = vunpack.c.l.b16 %v3926
          %v4136 = vunpack.c.l.b16 %v3940
          %v4137 = vunpack.c.l.b16 %v3950
          %v4138 = vunpack.c.l.b16 %v3964
          %v4139 = vunpack.c.l.b16 %v3974
          %v4140 = vunpack.c.l.b16 %v3988
          %v4141 = vunpack.c.l.b16 %v3998
          %v4142 = vunpack.c.l.b16 %v4012
          %v4143 = vunpack.c.l.b16 %v4022
          %v4144 = vunpack.c.l.b16 %v4036
          %v4145 = vunpack.c.l.b16 %v4046
          %v4146 = vunpack.c.l.b16 %v4060
          %v4147 = vunpack.c.l.b16 %v4070
          %v4148 = vunpack.c.l.b16 %v4084
          %v4149 = vunpack.c.l.b16 %v4094
          %v4150 = vunpack.c.l.b16 %v4108
          %v4151 = vunpack.c.l.b16 %v4118
          %v4152 = vpack.c.b16 %v4121, %v4120
          %v4153 = vpack.c.b16 %v4123, %v4122
          %v4154 = vpack.c.b16 %v4125, %v4124
          %v4155 = vpack.c.b16 %v4127, %v4126
          %v4156 = vpack.c.b16 %v4129, %v4128
          %v4157 = vpack.c.b16 %v4131, %v4130
          %v4158 = vpack.c.b16 %v4133, %v4132
          %v4159 = vpack.c.b16 %v4135, %v4134
          %v4160 = vpack.c.b16 %v4137, %v4136
          %v4161 = vpack.c.b16 %v4139, %v4138
          %v4162 = vpack.c.b16 %v4141, %v4140
          %v4163 = vpack.c.b16 %v4143, %v4142
          %v4164 = vpack.c.b16 %v4145, %v4144
          %v4165 = vpack.c.b16 %v4147, %v4146
          %v4166 = vpack.c.b16 %v4149, %v4148
          %v4167 = vpack.c.b16 %v4151, %v4150
          %v4169 = vunpack.c.l.b16 %v4119
          %v4170 = vpack.c.b16 %v4169, %v4169
          %v4171 = vrot.slane %v4170, 2
          %v4173 = vsel %vm1312, %v4152, 0
          %v4176 = vsel %vm1312, %v4153, 0
          %v4179 = vsel %vm1312, %v4154, 0
          %v4182 = vsel %vm1312, %v4155, 0
          %v4185 = vsel %vm1312, %v4156, 0
          %v4188 = vsel %vm1312, %v4157, 0
          %v4191 = vsel %vm1312, %v4158, 0
          %v4194 = vsel %vm1312, %v4159, 0
          %v4197 = vsel %vm1312, %v4160, 0
          %v4200 = vsel %vm1312, %v4161, 0
          %v4203 = vsel %vm1312, %v4162, 0
          %v4206 = vsel %vm1312, %v4163, 0
          %v4209 = vsel %vm1312, %v4164, 0
          %v4212 = vsel %vm1312, %v4165, 0
          %v4215 = vsel %vm1312, %v4166, 0
          %v4218 = vsel %vm1312, %v4167, 0
          %v4221 = vsel %vm1361, %v4171, 0
          %4223 = vmatpush.bf16.msra.mxu0 0
          %4224 = vmatpush.bf16.msra.mxu0 0
          %4225 = vmatpush.bf16.msra.mxu0 0
          %4226 = vmatpush.bf16.msra.mxu0 0
          %4227 = vmatpush.bf16.msra.mxu0 0
          %4228 = vmatpush.bf16.msra.mxu0 0
          %4229 = vmatpush.bf16.msra.mxu0 0
          %4230 = vmatpush.bf16.msra.mxu0 %v4221
          %4231 = vmatmul.bf16.gmra.mxu0 %v4173
          %v4232 = vpop.f32.mrf.mxu0
          %v4233 = vadd.f32 0.0, %v4232
          %v4234 = vpop.f32.mrf.mxu0
          %v4235 = vadd.f32 0.0, %v4234
          %4236 = vmatmul.bf16.gmra.mxu0 %v4176
          %v4237 = vpop.f32.mrf.mxu0
          %v4238 = vadd.f32 0.0, %v4237
          %v4239 = vpop.f32.mrf.mxu0
          %v4240 = vadd.f32 0.0, %v4239
          %4241 = vmatmul.bf16.gmra.mxu0 %v4179
          %v4242 = vpop.f32.mrf.mxu0
          %v4243 = vadd.f32 0.0, %v4242
          %v4244 = vpop.f32.mrf.mxu0
          %v4245 = vadd.f32 0.0, %v4244
          %4246 = vmatmul.bf16.gmra.mxu0 %v4182
          %v4247 = vpop.f32.mrf.mxu0
          %v4248 = vadd.f32 0.0, %v4247
          %v4249 = vpop.f32.mrf.mxu0
          %v4250 = vadd.f32 0.0, %v4249
          %4251 = vmatmul.bf16.gmra.mxu0 %v4185
          %v4252 = vpop.f32.mrf.mxu0
          %v4253 = vadd.f32 0.0, %v4252
          %v4254 = vpop.f32.mrf.mxu0
          %v4255 = vadd.f32 0.0, %v4254
          %4256 = vmatmul.bf16.gmra.mxu0 %v4188
          %v4257 = vpop.f32.mrf.mxu0
          %v4258 = vadd.f32 0.0, %v4257
          %v4259 = vpop.f32.mrf.mxu0
          %v4260 = vadd.f32 0.0, %v4259
          %4261 = vmatmul.bf16.gmra.mxu0 %v4191
          %v4262 = vpop.f32.mrf.mxu0
          %v4263 = vadd.f32 0.0, %v4262
          %v4264 = vpop.f32.mrf.mxu0
          %v4265 = vadd.f32 0.0, %v4264
          %4266 = vmatmul.bf16.gmra.mxu0 %v4194
          %v4267 = vpop.f32.mrf.mxu0
          %v4268 = vadd.f32 0.0, %v4267
          %v4269 = vpop.f32.mrf.mxu0
          %v4270 = vadd.f32 0.0, %v4269
          %4271 = vmatmul.bf16.gmra.mxu0 %v4197
          %v4272 = vpop.f32.mrf.mxu0
          %v4273 = vadd.f32 0.0, %v4272
          %v4274 = vpop.f32.mrf.mxu0
          %v4275 = vadd.f32 0.0, %v4274
          %4276 = vmatmul.bf16.gmra.mxu0 %v4200
          %v4277 = vpop.f32.mrf.mxu0
          %v4278 = vadd.f32 0.0, %v4277
          %v4279 = vpop.f32.mrf.mxu0
          %v4280 = vadd.f32 0.0, %v4279
          %4281 = vmatmul.bf16.gmra.mxu0 %v4203
          %v4282 = vpop.f32.mrf.mxu0
          %v4283 = vadd.f32 0.0, %v4282
          %v4284 = vpop.f32.mrf.mxu0
          %v4285 = vadd.f32 0.0, %v4284
          %4286 = vmatmul.bf16.gmra.mxu0 %v4206
          %v4287 = vpop.f32.mrf.mxu0
          %v4288 = vadd.f32 0.0, %v4287
          %v4289 = vpop.f32.mrf.mxu0
          %v4290 = vadd.f32 0.0, %v4289
          %4291 = vmatmul.bf16.gmra.mxu0 %v4209
          %v4292 = vpop.f32.mrf.mxu0
          %v4293 = vadd.f32 0.0, %v4292
          %v4294 = vpop.f32.mrf.mxu0
          %v4295 = vadd.f32 0.0, %v4294
          %4296 = vmatmul.bf16.gmra.mxu0 %v4212
          %v4297 = vpop.f32.mrf.mxu0
          %v4298 = vadd.f32 0.0, %v4297
          %v4299 = vpop.f32.mrf.mxu0
          %v4300 = vadd.f32 0.0, %v4299
          %4301 = vmatmul.bf16.gmra.mxu0 %v4215
          %v4302 = vpop.f32.mrf.mxu0
          %v4303 = vadd.f32 0.0, %v4302
          %v4304 = vpop.f32.mrf.mxu0
          %v4305 = vadd.f32 0.0, %v4304
          %4306 = vmatmul.bf16.gmra.mxu0 %v4218
          %v4307 = vpop.f32.mrf.mxu0
          %v4308 = vadd.f32 0.0, %v4307
          %v4309 = vpop.f32.mrf.mxu0
          %v4310 = vadd.f32 0.0, %v4309
          %4311 = vdwg.mxu0
          %v4312 = vadd.f32 %v3655, %v4233
          %v4313 = vadd.f32 %v3656, %v4235
          %v4314 = vadd.f32 %v3657, %v4238
          %v4315 = vadd.f32 %v3658, %v4240
          %v4316 = vadd.f32 %v3659, %v4243
          %v4317 = vadd.f32 %v3660, %v4245
          %v4318 = vadd.f32 %v3661, %v4248
          %v4319 = vadd.f32 %v3662, %v4250
          %v4320 = vadd.f32 %v3663, %v4253
          %v4321 = vadd.f32 %v3664, %v4255
          %v4322 = vadd.f32 %v3665, %v4258
          %v4323 = vadd.f32 %v3666, %v4260
          %v4324 = vadd.f32 %v3667, %v4263
          %v4325 = vadd.f32 %v3668, %v4265
          %v4326 = vadd.f32 %v3669, %v4268
          %v4327 = vadd.f32 %v3670, %v4270
          %v4328 = vadd.f32 %v3671, %v4273
          %v4329 = vadd.f32 %v3672, %v4275
          %v4330 = vadd.f32 %v3673, %v4278
          %v4331 = vadd.f32 %v3674, %v4280
          %v4332 = vadd.f32 %v3675, %v4283
          %v4333 = vadd.f32 %v3676, %v4285
          %v4334 = vadd.f32 %v3677, %v4288
          %v4335 = vadd.f32 %v3678, %v4290
          %v4336 = vadd.f32 %v3679, %v4293
          %v4337 = vadd.f32 %v3680, %v4295
          %v4338 = vadd.f32 %v3681, %v4298
          %v4339 = vadd.f32 %v3682, %v4300
          %v4340 = vadd.f32 %v3683, %v4303
          %v4341 = vadd.f32 %v3684, %v4305
          %v4342 = vadd.f32 %v3685, %v4308
          %v4343 = vadd.f32 %v3686, %v4310
          %v4344 = vld [vmem:[%s3401] sm:$0xe]
          %v4345 = vld [vmem:[%s3401 + $0xc] sm:$0xe]
          %v4346 = vld [vmem:[%s3401 + $0x18] sm:$0xe]
          %v4347 = vld [vmem:[%s3401 + $0x24] sm:$0xe]
          %v4348 = vld [vmem:[%s3401 + $0x30] sm:$0xe]
          %v4349 = vld [vmem:[%s3401 + $0x3c] sm:$0xe]
          %v4350 = vld [vmem:[%s3401 + $0x48] sm:$0xe]
          %v4351 = vld [vmem:[%s3401 + $0x54] sm:$0xe]
          %v4352 = vld [vmem:[%s3401 + $0x60] sm:$0xe]
          %v4353 = vld [vmem:[%s3401 + $0x6c] sm:$0xe]
          %v4354 = vld [vmem:[%s3401 + $0x78] sm:$0xe]
          %v4355 = vld [vmem:[%s3401 + $0x84] sm:$0xe]
          %v4356 = vld [vmem:[%s3401 + $0x90] sm:$0xe]
          %v4357 = vld [vmem:[%s3401 + $0x9c] sm:$0xe]
          %v4358 = vld [vmem:[%s3401 + $0xa8] sm:$0xe]
          %v4359 = vld [vmem:[%s3401 + $0xb4] sm:$0xe]
          %v4408 = vrot.slane %v4344, 5
          %v4409 = vrot.slane %v4408, 4
          %v4410 = vrot.slane %v3688, 5
          %v4411 = vsel %vm1724, %v4409, %v4410
          %v4412 = vrot.slane %v4410, 4
          %v4413 = vrot.slane %v3689, 5
          %v4414 = vsel %vm1724, %v4412, %v4413
          %v4415 = vrot.slane %v4345, 5
          %v4416 = vrot.slane %v4415, 4
          %v4417 = vrot.slane %v3691, 5
          %v4418 = vsel %vm1724, %v4416, %v4417
          %v4419 = vrot.slane %v4417, 4
          %v4420 = vrot.slane %v3692, 5
          %v4421 = vsel %vm1724, %v4419, %v4420
          %v4422 = vrot.slane %v4346, 5
          %v4423 = vrot.slane %v4422, 4
          %v4424 = vrot.slane %v3694, 5
          %v4425 = vsel %vm1724, %v4423, %v4424
          %v4426 = vrot.slane %v4424, 4
          %v4427 = vrot.slane %v3695, 5
          %v4428 = vsel %vm1724, %v4426, %v4427
          %v4429 = vrot.slane %v4347, 5
          %v4430 = vrot.slane %v4429, 4
          %v4431 = vrot.slane %v3697, 5
          %v4432 = vsel %vm1724, %v4430, %v4431
          %v4433 = vrot.slane %v4431, 4
          %v4434 = vrot.slane %v3698, 5
          %v4435 = vsel %vm1724, %v4433, %v4434
          %v4436 = vrot.slane %v4348, 5
          %v4437 = vrot.slane %v4436, 4
          %v4438 = vrot.slane %v3700, 5
          %v4439 = vsel %vm1724, %v4437, %v4438
          %v4440 = vrot.slane %v4438, 4
          %v4441 = vrot.slane %v3701, 5
          %v4442 = vsel %vm1724, %v4440, %v4441
          %v4443 = vrot.slane %v4349, 5
          %v4444 = vrot.slane %v4443, 4
          %v4445 = vrot.slane %v3703, 5
          %v4446 = vsel %vm1724, %v4444, %v4445
          %v4447 = vrot.slane %v4445, 4
          %v4448 = vrot.slane %v3704, 5
          %v4449 = vsel %vm1724, %v4447, %v4448
          %v4450 = vrot.slane %v4350, 5
          %v4451 = vrot.slane %v4450, 4
          %v4452 = vrot.slane %v3706, 5
          %v4453 = vsel %vm1724, %v4451, %v4452
          %v4454 = vrot.slane %v4452, 4
          %v4455 = vrot.slane %v3707, 5
          %v4456 = vsel %vm1724, %v4454, %v4455
          %v4457 = vrot.slane %v4351, 5
          %v4458 = vrot.slane %v4457, 4
          %v4459 = vrot.slane %v3709, 5
          %v4460 = vsel %vm1724, %v4458, %v4459
          %v4461 = vrot.slane %v4459, 4
          %v4462 = vrot.slane %v3710, 5
          %v4463 = vsel %vm1724, %v4461, %v4462
          %v4464 = vrot.slane %v4352, 5
          %v4465 = vrot.slane %v4464, 4
          %v4466 = vrot.slane %v3712, 5
          %v4467 = vsel %vm1724, %v4465, %v4466
          %v4468 = vrot.slane %v4466, 4
          %v4469 = vrot.slane %v3713, 5
          %v4470 = vsel %vm1724, %v4468, %v4469
          %v4471 = vrot.slane %v4353, 5
          %v4472 = vrot.slane %v4471, 4
          %v4473 = vrot.slane %v3715, 5
          %v4474 = vsel %vm1724, %v4472, %v4473
          %v4475 = vrot.slane %v4473, 4
          %v4476 = vrot.slane %v3716, 5
          %v4477 = vsel %vm1724, %v4475, %v4476
          %v4478 = vrot.slane %v4354, 5
          %v4479 = vrot.slane %v4478, 4
          %v4480 = vrot.slane %v3718, 5
          %v4481 = vsel %vm1724, %v4479, %v4480
          %v4482 = vrot.slane %v4480, 4
          %v4483 = vrot.slane %v3719, 5
          %v4484 = vsel %vm1724, %v4482, %v4483
          %v4485 = vrot.slane %v4355, 5
          %v4486 = vrot.slane %v4485, 4
          %v4487 = vrot.slane %v3721, 5
          %v4488 = vsel %vm1724, %v4486, %v4487
          %v4489 = vrot.slane %v4487, 4
          %v4490 = vrot.slane %v3722, 5
          %v4491 = vsel %vm1724, %v4489, %v4490
          %v4492 = vrot.slane %v4356, 5
          %v4493 = vrot.slane %v4492, 4
          %v4494 = vrot.slane %v3724, 5
          %v4495 = vsel %vm1724, %v4493, %v4494
          %v4496 = vrot.slane %v4494, 4
          %v4497 = vrot.slane %v3725, 5
          %v4498 = vsel %vm1724, %v4496, %v4497
          %v4499 = vrot.slane %v4357, 5
          %v4500 = vrot.slane %v4499, 4
          %v4501 = vrot.slane %v3727, 5
          %v4502 = vsel %vm1724, %v4500, %v4501
          %v4503 = vrot.slane %v4501, 4
          %v4504 = vrot.slane %v3728, 5
          %v4505 = vsel %vm1724, %v4503, %v4504
          %v4506 = vrot.slane %v4358, 5
          %v4507 = vrot.slane %v4506, 4
          %v4508 = vrot.slane %v3730, 5
          %v4509 = vsel %vm1724, %v4507, %v4508
          %v4510 = vrot.slane %v4508, 4
          %v4511 = vrot.slane %v3731, 5
          %v4512 = vsel %vm1724, %v4510, %v4511
          %v4513 = vrot.slane %v4359, 5
          %v4514 = vrot.slane %v4513, 4
          %v4515 = vrot.slane %v3733, 5
          %v4516 = vsel %vm1724, %v4514, %v4515
          %v4517 = vrot.slane %v4515, 4
          %v4518 = vrot.slane %v3734, 5
          %v4519 = vsel %vm1724, %v4517, %v4518
          %v4520 = vld [vmem:[%s854 + $0x10] sm:$0x3]
          %v4521 = vunpack.c.l.b16 %v4411
          %v4522 = vunpack.c.l.b16 %v4414
          %v4523 = vunpack.c.l.b16 %v4418
          %v4524 = vunpack.c.l.b16 %v4421
          %v4525 = vunpack.c.l.b16 %v4425
          %v4526 = vunpack.c.l.b16 %v4428
          %v4527 = vunpack.c.l.b16 %v4432
          %v4528 = vunpack.c.l.b16 %v4435
          %v4529 = vunpack.c.l.b16 %v4439
          %v4530 = vunpack.c.l.b16 %v4442
          %v4531 = vunpack.c.l.b16 %v4446
          %v4532 = vunpack.c.l.b16 %v4449
          %v4533 = vunpack.c.l.b16 %v4453
          %v4534 = vunpack.c.l.b16 %v4456
          %v4535 = vunpack.c.l.b16 %v4460
          %v4536 = vunpack.c.l.b16 %v4463
          %v4537 = vunpack.c.l.b16 %v4467
          %v4538 = vunpack.c.l.b16 %v4470
          %v4539 = vunpack.c.l.b16 %v4474
          %v4540 = vunpack.c.l.b16 %v4477
          %v4541 = vunpack.c.l.b16 %v4481
          %v4542 = vunpack.c.l.b16 %v4484
          %v4543 = vunpack.c.l.b16 %v4488
          %v4544 = vunpack.c.l.b16 %v4491
          %v4545 = vunpack.c.l.b16 %v4495
          %v4546 = vunpack.c.l.b16 %v4498
          %v4547 = vunpack.c.l.b16 %v4502
          %v4548 = vunpack.c.l.b16 %v4505
          %v4549 = vunpack.c.l.b16 %v4509
          %v4550 = vunpack.c.l.b16 %v4512
          %v4551 = vunpack.c.l.b16 %v4516
          %v4552 = vunpack.c.l.b16 %v4519
          %v4553 = vpack.c.b16 %v4522, %v4521
          %v4554 = vpack.c.b16 %v4524, %v4523
          %v4555 = vpack.c.b16 %v4526, %v4525
          %v4556 = vpack.c.b16 %v4528, %v4527
          %v4557 = vpack.c.b16 %v4530, %v4529
          %v4558 = vpack.c.b16 %v4532, %v4531
          %v4559 = vpack.c.b16 %v4534, %v4533
          %v4560 = vpack.c.b16 %v4536, %v4535
          %v4561 = vpack.c.b16 %v4538, %v4537
          %v4562 = vpack.c.b16 %v4540, %v4539
          %v4563 = vpack.c.b16 %v4542, %v4541
          %v4564 = vpack.c.b16 %v4544, %v4543
          %v4565 = vpack.c.b16 %v4546, %v4545
          %v4566 = vpack.c.b16 %v4548, %v4547
          %v4567 = vpack.c.b16 %v4550, %v4549
          %v4568 = vpack.c.b16 %v4552, %v4551
          %v4570 = vsel %vm1312, %v4553, 0
          %v4573 = vsel %vm1312, %v4554, 0
          %v4576 = vsel %vm1312, %v4555, 0
          %v4579 = vsel %vm1312, %v4556, 0
          %v4582 = vsel %vm1312, %v4557, 0
          %v4585 = vsel %vm1312, %v4558, 0
          %v4588 = vsel %vm1312, %v4559, 0
          %v4591 = vsel %vm1312, %v4560, 0
          %v4594 = vsel %vm1312, %v4561, 0
          %v4597 = vsel %vm1312, %v4562, 0
          %v4600 = vsel %vm1312, %v4563, 0
          %v4603 = vsel %vm1312, %v4564, 0
          %v4606 = vsel %vm1312, %v4565, 0
          %v4609 = vsel %vm1312, %v4566, 0
          %v4612 = vsel %vm1312, %v4567, 0
          %v4615 = vsel %vm1312, %v4568, 0
          %v4618 = vsel %vm1361, %v4520, 0
          %4620 = vmatpush.bf16.msra.mxu0 0
          %4621 = vmatpush.bf16.msra.mxu0 0
          %4622 = vmatpush.bf16.msra.mxu0 0
          %4623 = vmatpush.bf16.msra.mxu0 0
          %4624 = vmatpush.bf16.msra.mxu0 0
          %4625 = vmatpush.bf16.msra.mxu0 0
          %4626 = vmatpush.bf16.msra.mxu0 0
          %4627 = vmatpush.bf16.msra.mxu0 %v4618
          %4628 = vmatmul.bf16.gmra.mxu0 %v4570
          %v4629 = vpop.f32.mrf.mxu0
          %v4630 = vadd.f32 0.0, %v4629
          %v4631 = vpop.f32.mrf.mxu0
          %v4632 = vadd.f32 0.0, %v4631
          %4633 = vmatmul.bf16.gmra.mxu0 %v4573
          %v4634 = vpop.f32.mrf.mxu0
          %v4635 = vadd.f32 0.0, %v4634
          %v4636 = vpop.f32.mrf.mxu0
          %v4637 = vadd.f32 0.0, %v4636
          %4638 = vmatmul.bf16.gmra.mxu0 %v4576
          %v4639 = vpop.f32.mrf.mxu0
          %v4640 = vadd.f32 0.0, %v4639
          %v4641 = vpop.f32.mrf.mxu0
          %v4642 = vadd.f32 0.0, %v4641
          %4643 = vmatmul.bf16.gmra.mxu0 %v4579
          %v4644 = vpop.f32.mrf.mxu0
          %v4645 = vadd.f32 0.0, %v4644
          %v4646 = vpop.f32.mrf.mxu0
          %v4647 = vadd.f32 0.0, %v4646
          %4648 = vmatmul.bf16.gmra.mxu0 %v4582
          %v4649 = vpop.f32.mrf.mxu0
          %v4650 = vadd.f32 0.0, %v4649
          %v4651 = vpop.f32.mrf.mxu0
          %v4652 = vadd.f32 0.0, %v4651
          %4653 = vmatmul.bf16.gmra.mxu0 %v4585
          %v4654 = vpop.f32.mrf.mxu0
          %v4655 = vadd.f32 0.0, %v4654
          %v4656 = vpop.f32.mrf.mxu0
          %v4657 = vadd.f32 0.0, %v4656
          %4658 = vmatmul.bf16.gmra.mxu0 %v4588
          %v4659 = vpop.f32.mrf.mxu0
          %v4660 = vadd.f32 0.0, %v4659
          %v4661 = vpop.f32.mrf.mxu0
          %v4662 = vadd.f32 0.0, %v4661
          %4663 = vmatmul.bf16.gmra.mxu0 %v4591
          %v4664 = vpop.f32.mrf.mxu0
          %v4665 = vadd.f32 0.0, %v4664
          %v4666 = vpop.f32.mrf.mxu0
          %v4667 = vadd.f32 0.0, %v4666
          %4668 = vmatmul.bf16.gmra.mxu0 %v4594
          %v4669 = vpop.f32.mrf.mxu0
          %v4670 = vadd.f32 0.0, %v4669
          %v4671 = vpop.f32.mrf.mxu0
          %v4672 = vadd.f32 0.0, %v4671
          %4673 = vmatmul.bf16.gmra.mxu0 %v4597
          %v4674 = vpop.f32.mrf.mxu0
          %v4675 = vadd.f32 0.0, %v4674
          %v4676 = vpop.f32.mrf.mxu0
          %v4677 = vadd.f32 0.0, %v4676
          %4678 = vmatmul.bf16.gmra.mxu0 %v4600
          %v4679 = vpop.f32.mrf.mxu0
          %v4680 = vadd.f32 0.0, %v4679
          %v4681 = vpop.f32.mrf.mxu0
          %v4682 = vadd.f32 0.0, %v4681
          %4683 = vmatmul.bf16.gmra.mxu0 %v4603
          %v4684 = vpop.f32.mrf.mxu0
          %v4685 = vadd.f32 0.0, %v4684
          %v4686 = vpop.f32.mrf.mxu0
          %v4687 = vadd.f32 0.0, %v4686
          %4688 = vmatmul.bf16.gmra.mxu0 %v4606
          %v4689 = vpop.f32.mrf.mxu0
          %v4690 = vadd.f32 0.0, %v4689
          %v4691 = vpop.f32.mrf.mxu0
          %v4692 = vadd.f32 0.0, %v4691
          %4693 = vmatmul.bf16.gmra.mxu0 %v4609
          %v4694 = vpop.f32.mrf.mxu0
          %v4695 = vadd.f32 0.0, %v4694
          %v4696 = vpop.f32.mrf.mxu0
          %v4697 = vadd.f32 0.0, %v4696
          %4698 = vmatmul.bf16.gmra.mxu0 %v4612
          %v4699 = vpop.f32.mrf.mxu0
          %v4700 = vadd.f32 0.0, %v4699
          %v4701 = vpop.f32.mrf.mxu0
          %v4702 = vadd.f32 0.0, %v4701
          %4703 = vmatmul.bf16.gmra.mxu0 %v4615
          %v4704 = vpop.f32.mrf.mxu0
          %v4705 = vadd.f32 0.0, %v4704
          %v4706 = vpop.f32.mrf.mxu0
          %v4707 = vadd.f32 0.0, %v4706
          %4708 = vdwg.mxu0
          %v4709 = vadd.f32 %v4312, %v4630
          %v4710 = vadd.f32 %v4313, %v4632
          %v4711 = vadd.f32 %v4314, %v4635
          %v4712 = vadd.f32 %v4315, %v4637
          %v4713 = vadd.f32 %v4316, %v4640
          %v4714 = vadd.f32 %v4317, %v4642
          %v4715 = vadd.f32 %v4318, %v4645
          %v4716 = vadd.f32 %v4319, %v4647
          %v4717 = vadd.f32 %v4320, %v4650
          %v4718 = vadd.f32 %v4321, %v4652
          %v4719 = vadd.f32 %v4322, %v4655
          %v4720 = vadd.f32 %v4323, %v4657
          %v4721 = vadd.f32 %v4324, %v4660
          %v4722 = vadd.f32 %v4325, %v4662
          %v4723 = vadd.f32 %v4326, %v4665
          %v4724 = vadd.f32 %v4327, %v4667
          %v4725 = vadd.f32 %v4328, %v4670
          %v4726 = vadd.f32 %v4329, %v4672
          %v4727 = vadd.f32 %v4330, %v4675
          %v4728 = vadd.f32 %v4331, %v4677
          %v4729 = vadd.f32 %v4332, %v4680
          %v4730 = vadd.f32 %v4333, %v4682
          %v4731 = vadd.f32 %v4334, %v4685
          %v4732 = vadd.f32 %v4335, %v4687
          %v4733 = vadd.f32 %v4336, %v4690
          %v4734 = vadd.f32 %v4337, %v4692
          %v4735 = vadd.f32 %v4338, %v4695
          %v4736 = vadd.f32 %v4339, %v4697
          %v4737 = vadd.f32 %v4340, %v4700
          %v4738 = vadd.f32 %v4341, %v4702
          %v4739 = vadd.f32 %v4342, %v4705
          %v4740 = vadd.f32 %v4343, %v4707
          %s4741 = scalar_lea.vmem %s2, %s815
          %v4742 = vld [vmem:[%s4741] sm:$0x1]
          %v4744 = vperm.slane %v4742, 0
          %v4746 = vadd.f32 %v4709, %v4744
          %v4747 = vadd.f32 %v4710, %v4744
          %v4748 = vadd.f32 %v4711, %v4744
          %v4749 = vadd.f32 %v4712, %v4744
          %v4750 = vadd.f32 %v4713, %v4744
          %v4751 = vadd.f32 %v4714, %v4744
          %v4752 = vadd.f32 %v4715, %v4744
          %v4753 = vadd.f32 %v4716, %v4744
          %v4754 = vadd.f32 %v4717, %v4744
          %v4755 = vadd.f32 %v4718, %v4744
          %v4756 = vadd.f32 %v4719, %v4744
          %v4757 = vadd.f32 %v4720, %v4744
          %v4758 = vadd.f32 %v4721, %v4744
          %v4759 = vadd.f32 %v4722, %v4744
          %v4760 = vadd.f32 %v4723, %v4744
          %v4761 = vadd.f32 %v4724, %v4744
          %v4762 = vadd.f32 %v4725, %v4744
          %v4763 = vadd.f32 %v4726, %v4744
          %v4764 = vadd.f32 %v4727, %v4744
          %v4765 = vadd.f32 %v4728, %v4744
          %v4766 = vadd.f32 %v4729, %v4744
          %v4767 = vadd.f32 %v4730, %v4744
          %v4768 = vadd.f32 %v4731, %v4744
          %v4769 = vadd.f32 %v4732, %v4744
          %v4770 = vadd.f32 %v4733, %v4744
          %v4771 = vadd.f32 %v4734, %v4744
          %v4772 = vadd.f32 %v4735, %v4744
          %v4773 = vadd.f32 %v4736, %v4744
          %v4774 = vadd.f32 %v4737, %v4744
          %v4775 = vadd.f32 %v4738, %v4744
          %v4776 = vadd.f32 %v4739, %v4744
          %v4777 = vadd.f32 %v4740, %v4744
          %v4778 = vmax.f32 %v4746, 0.0
          %v4779 = vmax.f32 %v4747, 0.0
          %v4780 = vmax.f32 %v4748, 0.0
          %v4781 = vmax.f32 %v4749, 0.0
          %v4782 = vmax.f32 %v4750, 0.0
          %v4783 = vmax.f32 %v4751, 0.0
          %v4784 = vmax.f32 %v4752, 0.0
          %v4785 = vmax.f32 %v4753, 0.0
          %v4786 = vmax.f32 %v4754, 0.0
          %v4787 = vmax.f32 %v4755, 0.0
          %v4788 = vmax.f32 %v4756, 0.0
          %v4789 = vmax.f32 %v4757, 0.0
          %v4790 = vmax.f32 %v4758, 0.0
          %v4791 = vmax.f32 %v4759, 0.0
          %v4792 = vmax.f32 %v4760, 0.0
          %v4793 = vmax.f32 %v4761, 0.0
          %v4794 = vmax.f32 %v4762, 0.0
          %v4795 = vmax.f32 %v4763, 0.0
          %v4796 = vmax.f32 %v4764, 0.0
          %v4797 = vmax.f32 %v4765, 0.0
          %v4798 = vmax.f32 %v4766, 0.0
          %v4799 = vmax.f32 %v4767, 0.0
          %v4800 = vmax.f32 %v4768, 0.0
          %v4801 = vmax.f32 %v4769, 0.0
          %v4802 = vmax.f32 %v4770, 0.0
          %v4803 = vmax.f32 %v4771, 0.0
          %v4804 = vmax.f32 %v4772, 0.0
          %v4805 = vmax.f32 %v4773, 0.0
          %v4806 = vmax.f32 %v4774, 0.0
          %v4807 = vmax.f32 %v4775, 0.0
          %v4808 = vmax.f32 %v4776, 0.0
          %v4809 = vmax.f32 %v4777, 0.0
          %v4810 = vpack.c.bf16 %v4778, %v4778
          %v4811 = vpack.c.bf16 %v4779, %v4779
          %v4812 = vpack.c.bf16 %v4780, %v4780
          %v4813 = vpack.c.bf16 %v4781, %v4781
          %v4814 = vpack.c.bf16 %v4782, %v4782
          %v4815 = vpack.c.bf16 %v4783, %v4783
          %v4816 = vpack.c.bf16 %v4784, %v4784
          %v4817 = vpack.c.bf16 %v4785, %v4785
          %v4818 = vpack.c.bf16 %v4786, %v4786
          %v4819 = vpack.c.bf16 %v4787, %v4787
          %v4820 = vpack.c.bf16 %v4788, %v4788
          %v4821 = vpack.c.bf16 %v4789, %v4789
          %v4822 = vpack.c.bf16 %v4790, %v4790
          %v4823 = vpack.c.bf16 %v4791, %v4791
          %v4824 = vpack.c.bf16 %v4792, %v4792
          %v4825 = vpack.c.bf16 %v4793, %v4793
          %v4826 = vpack.c.bf16 %v4794, %v4794
          %v4827 = vpack.c.bf16 %v4795, %v4795
          %v4828 = vpack.c.bf16 %v4796, %v4796
          %v4829 = vpack.c.bf16 %v4797, %v4797
          %v4830 = vpack.c.bf16 %v4798, %v4798
          %v4831 = vpack.c.bf16 %v4799, %v4799
          %v4832 = vpack.c.bf16 %v4800, %v4800
          %v4833 = vpack.c.bf16 %v4801, %v4801
          %v4834 = vpack.c.bf16 %v4802, %v4802
          %v4835 = vpack.c.bf16 %v4803, %v4803
          %v4836 = vpack.c.bf16 %v4804, %v4804
          %v4837 = vpack.c.bf16 %v4805, %v4805
          %v4838 = vpack.c.bf16 %v4806, %v4806
          %v4839 = vpack.c.bf16 %v4807, %v4807
          %v4840 = vpack.c.bf16 %v4808, %v4808
          %v4841 = vpack.c.bf16 %v4809, %v4809
          %v4843 = vshrl.u32 %v4810, 16
          %v4845 = vrot.slane %v4843, 7
          %v4846 = vshll.u32 %v4810, 16
          %v4848 = vor.u32 %v4845, %v4846
          %v4849 = vrot.slane %v4845, 4
          %v4851 = vshrl.u32 %v4811, 16
          %v4853 = vrot.slane %v4851, 7
          %v4854 = vshll.u32 %v4811, 16
          %v4856 = vor.u32 %v4853, %v4854
          %v4857 = vsel %vm378, %v4849, %v4856
          %v4858 = vrot.slane %v4853, 4
          %v4860 = vshrl.u32 %v4812, 16
          %v4862 = vrot.slane %v4860, 7
          %v4863 = vshll.u32 %v4812, 16
          %v4865 = vor.u32 %v4862, %v4863
          %v4866 = vrot.slane %v4862, 4
          %v4868 = vshrl.u32 %v4813, 16
          %v4870 = vrot.slane %v4868, 7
          %v4871 = vshll.u32 %v4813, 16
          %v4873 = vor.u32 %v4870, %v4871
          %v4874 = vsel %vm378, %v4866, %v4873
          %v4875 = vrot.slane %v4870, 4
          %v4877 = vshrl.u32 %v4814, 16
          %v4879 = vrot.slane %v4877, 7
          %v4880 = vshll.u32 %v4814, 16
          %v4882 = vor.u32 %v4879, %v4880
          %v4883 = vrot.slane %v4879, 4
          %v4885 = vshrl.u32 %v4815, 16
          %v4887 = vrot.slane %v4885, 7
          %v4888 = vshll.u32 %v4815, 16
          %v4890 = vor.u32 %v4887, %v4888
          %v4891 = vsel %vm378, %v4883, %v4890
          %v4892 = vrot.slane %v4887, 4
          %v4894 = vshrl.u32 %v4816, 16
          %v4896 = vrot.slane %v4894, 7
          %v4897 = vshll.u32 %v4816, 16
          %v4899 = vor.u32 %v4896, %v4897
          %v4900 = vrot.slane %v4896, 4
          %v4902 = vshrl.u32 %v4817, 16
          %v4904 = vrot.slane %v4902, 7
          %v4905 = vshll.u32 %v4817, 16
          %v4907 = vor.u32 %v4904, %v4905
          %v4908 = vsel %vm378, %v4900, %v4907
          %v4909 = vrot.slane %v4904, 4
          %v4911 = vshrl.u32 %v4818, 16
          %v4913 = vrot.slane %v4911, 7
          %v4914 = vshll.u32 %v4818, 16
          %v4916 = vor.u32 %v4913, %v4914
          %v4917 = vrot.slane %v4913, 4
          %v4919 = vshrl.u32 %v4819, 16
          %v4921 = vrot.slane %v4919, 7
          %v4922 = vshll.u32 %v4819, 16
          %v4924 = vor.u32 %v4921, %v4922
          %v4925 = vsel %vm378, %v4917, %v4924
          %v4926 = vrot.slane %v4921, 4
          %v4928 = vshrl.u32 %v4820, 16
          %v4930 = vrot.slane %v4928, 7
          %v4931 = vshll.u32 %v4820, 16
          %v4933 = vor.u32 %v4930, %v4931
          %v4934 = vrot.slane %v4930, 4
          %v4936 = vshrl.u32 %v4821, 16
          %v4938 = vrot.slane %v4936, 7
          %v4939 = vshll.u32 %v4821, 16
          %v4941 = vor.u32 %v4938, %v4939
          %v4942 = vsel %vm378, %v4934, %v4941
          %v4943 = vrot.slane %v4938, 4
          %v4945 = vshrl.u32 %v4822, 16
          %v4947 = vrot.slane %v4945, 7
          %v4948 = vshll.u32 %v4822, 16
          %v4950 = vor.u32 %v4947, %v4948
          %v4951 = vrot.slane %v4947, 4
          %v4953 = vshrl.u32 %v4823, 16
          %v4955 = vrot.slane %v4953, 7
          %v4956 = vshll.u32 %v4823, 16
          %v4958 = vor.u32 %v4955, %v4956
          %v4959 = vsel %vm378, %v4951, %v4958
          %v4960 = vrot.slane %v4955, 4
          %v4962 = vshrl.u32 %v4824, 16
          %v4964 = vrot.slane %v4962, 7
          %v4965 = vshll.u32 %v4824, 16
          %v4967 = vor.u32 %v4964, %v4965
          %v4968 = vrot.slane %v4964, 4
          %v4970 = vshrl.u32 %v4825, 16
          %v4972 = vrot.slane %v4970, 7
          %v4973 = vshll.u32 %v4825, 16
          %v4975 = vor.u32 %v4972, %v4973
          %v4976 = vsel %vm378, %v4968, %v4975
          %v4977 = vrot.slane %v4972, 4
          %v4979 = vshrl.u32 %v4826, 16
          %v4981 = vrot.slane %v4979, 7
          %v4982 = vshll.u32 %v4826, 16
          %v4984 = vor.u32 %v4981, %v4982
          %v4985 = vrot.slane %v4981, 4
          %v4987 = vshrl.u32 %v4827, 16
          %v4989 = vrot.slane %v4987, 7
          %v4990 = vshll.u32 %v4827, 16
          %v4992 = vor.u32 %v4989, %v4990
          %v4993 = vsel %vm378, %v4985, %v4992
          %v4994 = vrot.slane %v4989, 4
          %v4996 = vshrl.u32 %v4828, 16
          %v4998 = vrot.slane %v4996, 7
          %v4999 = vshll.u32 %v4828, 16
          %v5001 = vor.u32 %v4998, %v4999
          %v5002 = vrot.slane %v4998, 4
          %v5004 = vshrl.u32 %v4829, 16
          %v5006 = vrot.slane %v5004, 7
          %v5007 = vshll.u32 %v4829, 16
          %v5009 = vor.u32 %v5006, %v5007
          %v5010 = vsel %vm378, %v5002, %v5009
          %v5011 = vrot.slane %v5006, 4
          %v5013 = vshrl.u32 %v4830, 16
          %v5015 = vrot.slane %v5013, 7
          %v5016 = vshll.u32 %v4830, 16
          %v5018 = vor.u32 %v5015, %v5016
          %v5019 = vrot.slane %v5015, 4
          %v5021 = vshrl.u32 %v4831, 16
          %v5023 = vrot.slane %v5021, 7
          %v5024 = vshll.u32 %v4831, 16
          %v5026 = vor.u32 %v5023, %v5024
          %v5027 = vsel %vm378, %v5019, %v5026
          %v5028 = vrot.slane %v5023, 4
          %v5030 = vshrl.u32 %v4832, 16
          %v5032 = vrot.slane %v5030, 7
          %v5033 = vshll.u32 %v4832, 16
          %v5035 = vor.u32 %v5032, %v5033
          %v5036 = vrot.slane %v5032, 4
          %v5038 = vshrl.u32 %v4833, 16
          %v5040 = vrot.slane %v5038, 7
          %v5041 = vshll.u32 %v4833, 16
          %v5043 = vor.u32 %v5040, %v5041
          %v5044 = vsel %vm378, %v5036, %v5043
          %v5045 = vrot.slane %v5040, 4
          %v5047 = vshrl.u32 %v4834, 16
          %v5049 = vrot.slane %v5047, 7
          %v5050 = vshll.u32 %v4834, 16
          %v5052 = vor.u32 %v5049, %v5050
          %v5053 = vrot.slane %v5049, 4
          %v5055 = vshrl.u32 %v4835, 16
          %v5057 = vrot.slane %v5055, 7
          %v5058 = vshll.u32 %v4835, 16
          %v5060 = vor.u32 %v5057, %v5058
          %v5061 = vsel %vm378, %v5053, %v5060
          %v5062 = vrot.slane %v5057, 4
          %v5064 = vshrl.u32 %v4836, 16
          %v5066 = vrot.slane %v5064, 7
          %v5067 = vshll.u32 %v4836, 16
          %v5069 = vor.u32 %v5066, %v5067
          %v5070 = vrot.slane %v5066, 4
          %v5072 = vshrl.u32 %v4837, 16
          %v5074 = vrot.slane %v5072, 7
          %v5075 = vshll.u32 %v4837, 16
          %v5077 = vor.u32 %v5074, %v5075
          %v5078 = vsel %vm378, %v5070, %v5077
          %v5079 = vrot.slane %v5074, 4
          %v5081 = vshrl.u32 %v4838, 16
          %v5083 = vrot.slane %v5081, 7
          %v5084 = vshll.u32 %v4838, 16
          %v5086 = vor.u32 %v5083, %v5084
          %v5087 = vrot.slane %v5083, 4
          %v5089 = vshrl.u32 %v4839, 16
          %v5091 = vrot.slane %v5089, 7
          %v5092 = vshll.u32 %v4839, 16
          %v5094 = vor.u32 %v5091, %v5092
          %v5095 = vsel %vm378, %v5087, %v5094
          %v5096 = vrot.slane %v5091, 4
          %v5098 = vshrl.u32 %v4840, 16
          %v5100 = vrot.slane %v5098, 7
          %v5101 = vshll.u32 %v4840, 16
          %v5103 = vor.u32 %v5100, %v5101
          %v5104 = vrot.slane %v5100, 4
          %v5106 = vshrl.u32 %v4841, 16
          %v5108 = vrot.slane %v5106, 7
          %v5109 = vshll.u32 %v4841, 16
          %v5111 = vor.u32 %v5108, %v5109
          %v5112 = vsel %vm378, %v5104, %v5111
          %v5113 = vrot.slane %v5108, 4
          %v5162 = vsel %vm701, %v4848, %v2347
          %5163 = vst [vmem:[%s699] sm:$0xf] %v5162
          %5164 = vst.msk [vmem:[%s699 + $0x4] sm:$0xf] %vm223, %v4857
          %v5165 = vld [vmem:[%s699 + $0x8] sm:$0x1]
          %v5166 = vsel %vm234, %v4858, %v5165
          %5167 = vst [vmem:[%s699 + $0x8] sm:$0x1] %v5166
          %v5168 = vld [vmem:[%s699 + $0xc] sm:$0xf]
          %v5169 = vsel %vm701, %v4865, %v5168
          %5170 = vst [vmem:[%s699 + $0xc] sm:$0xf] %v5169
          %5171 = vst.msk [vmem:[%s699 + $0x10] sm:$0xf] %vm223, %v4874
          %v5172 = vld [vmem:[%s699 + $0x14] sm:$0x1]
          %v5173 = vsel %vm234, %v4875, %v5172
          %5174 = vst [vmem:[%s699 + $0x14] sm:$0x1] %v5173
          %v5175 = vld [vmem:[%s699 + $0x18] sm:$0xf]
          %v5176 = vsel %vm701, %v4882, %v5175
          %5177 = vst [vmem:[%s699 + $0x18] sm:$0xf] %v5176
          %5178 = vst.msk [vmem:[%s699 + $0x1c] sm:$0xf] %vm223, %v4891
          %v5179 = vld [vmem:[%s699 + $0x20] sm:$0x1]
          %v5180 = vsel %vm234, %v4892, %v5179
          %5181 = vst [vmem:[%s699 + $0x20] sm:$0x1] %v5180
          %v5182 = vld [vmem:[%s699 + $0x24] sm:$0xf]
          %v5183 = vsel %vm701, %v4899, %v5182
          %5184 = vst [vmem:[%s699 + $0x24] sm:$0xf] %v5183
          %5185 = vst.msk [vmem:[%s699 + $0x28] sm:$0xf] %vm223, %v4908
          %v5186 = vld [vmem:[%s699 + $0x2c] sm:$0x1]
          %v5187 = vsel %vm234, %v4909, %v5186
          %5188 = vst [vmem:[%s699 + $0x2c] sm:$0x1] %v5187
          %v5189 = vld [vmem:[%s699 + $0x30] sm:$0xf]
          %v5190 = vsel %vm701, %v4916, %v5189
          %5191 = vst [vmem:[%s699 + $0x30] sm:$0xf] %v5190
          %5192 = vst.msk [vmem:[%s699 + $0x34] sm:$0xf] %vm223, %v4925
          %v5193 = vld [vmem:[%s699 + $0x38] sm:$0x1]
          %v5194 = vsel %vm234, %v4926, %v5193
          %5195 = vst [vmem:[%s699 + $0x38] sm:$0x1] %v5194
          %v5196 = vld [vmem:[%s699 + $0x3c] sm:$0xf]
          %v5197 = vsel %vm701, %v4933, %v5196
          %5198 = vst [vmem:[%s699 + $0x3c] sm:$0xf] %v5197
          %5199 = vst.msk [vmem:[%s699 + $0x40] sm:$0xf] %vm223, %v4942
          %v5200 = vld [vmem:[%s699 + $0x44] sm:$0x1]
          %v5201 = vsel %vm234, %v4943, %v5200
          %5202 = vst [vmem:[%s699 + $0x44] sm:$0x1] %v5201
          %v5203 = vld [vmem:[%s699 + $0x48] sm:$0xf]
          %v5204 = vsel %vm701, %v4950, %v5203
          %5205 = vst [vmem:[%s699 + $0x48] sm:$0xf] %v5204
          %5206 = vst.msk [vmem:[%s699 + $0x4c] sm:$0xf] %vm223, %v4959
          %v5207 = vld [vmem:[%s699 + $0x50] sm:$0x1]
          %v5208 = vsel %vm234, %v4960, %v5207
          %5209 = vst [vmem:[%s699 + $0x50] sm:$0x1] %v5208
          %v5210 = vld [vmem:[%s699 + $0x54] sm:$0xf]
          %v5211 = vsel %vm701, %v4967, %v5210
          %5212 = vst [vmem:[%s699 + $0x54] sm:$0xf] %v5211
          %5213 = vst.msk [vmem:[%s699 + $0x58] sm:$0xf] %vm223, %v4976
          %v5214 = vld [vmem:[%s699 + $0x5c] sm:$0x1]
          %v5215 = vsel %vm234, %v4977, %v5214
          %5216 = vst [vmem:[%s699 + $0x5c] sm:$0x1] %v5215
          %v5217 = vld [vmem:[%s699 + $0x60] sm:$0xf]
          %v5218 = vsel %vm701, %v4984, %v5217
          %5219 = vst [vmem:[%s699 + $0x60] sm:$0xf] %v5218
          %5220 = vst.msk [vmem:[%s699 + $0x64] sm:$0xf] %vm223, %v4993
          %v5221 = vld [vmem:[%s699 + $0x68] sm:$0x1]
          %v5222 = vsel %vm234, %v4994, %v5221
          %5223 = vst [vmem:[%s699 + $0x68] sm:$0x1] %v5222
          %v5224 = vld [vmem:[%s699 + $0x6c] sm:$0xf]
          %v5225 = vsel %vm701, %v5001, %v5224
          %5226 = vst [vmem:[%s699 + $0x6c] sm:$0xf] %v5225
          %5227 = vst.msk [vmem:[%s699 + $0x70] sm:$0xf] %vm223, %v5010
          %v5228 = vld [vmem:[%s699 + $0x74] sm:$0x1]
          %v5229 = vsel %vm234, %v5011, %v5228
          %5230 = vst [vmem:[%s699 + $0x74] sm:$0x1] %v5229
          %v5231 = vld [vmem:[%s699 + $0x78] sm:$0xf]
          %v5232 = vsel %vm701, %v5018, %v5231
          %5233 = vst [vmem:[%s699 + $0x78] sm:$0xf] %v5232
          %5234 = vst.msk [vmem:[%s699 + $0x7c] sm:$0xf] %vm223, %v5027
          %v5235 = vld [vmem:[%s699 + $0x80] sm:$0x1]
          %v5236 = vsel %vm234, %v5028, %v5235
          %5237 = vst [vmem:[%s699 + $0x80] sm:$0x1] %v5236
          %v5238 = vld [vmem:[%s699 + $0x84] sm:$0xf]
          %v5239 = vsel %vm701, %v5035, %v5238
          %5240 = vst [vmem:[%s699 + $0x84] sm:$0xf] %v5239
          %5241 = vst.msk [vmem:[%s699 + $0x88] sm:$0xf] %vm223, %v5044
          %v5242 = vld [vmem:[%s699 + $0x8c] sm:$0x1]
          %v5243 = vsel %vm234, %v5045, %v5242
          %5244 = vst [vmem:[%s699 + $0x8c] sm:$0x1] %v5243
          %v5245 = vld [vmem:[%s699 + $0x90] sm:$0xf]
          %v5246 = vsel %vm701, %v5052, %v5245
          %5247 = vst [vmem:[%s699 + $0x90] sm:$0xf] %v5246
          %5248 = vst.msk [vmem:[%s699 + $0x94] sm:$0xf] %vm223, %v5061
          %v5249 = vld [vmem:[%s699 + $0x98] sm:$0x1]
          %v5250 = vsel %vm234, %v5062, %v5249
          %5251 = vst [vmem:[%s699 + $0x98] sm:$0x1] %v5250
          %v5252 = vld [vmem:[%s699 + $0x9c] sm:$0xf]
          %v5253 = vsel %vm701, %v5069, %v5252
          %5254 = vst [vmem:[%s699 + $0x9c] sm:$0xf] %v5253
          %5255 = vst.msk [vmem:[%s699 + $0xa0] sm:$0xf] %vm223, %v5078
          %v5256 = vld [vmem:[%s699 + $0xa4] sm:$0x1]
          %v5257 = vsel %vm234, %v5079, %v5256
          %5258 = vst [vmem:[%s699 + $0xa4] sm:$0x1] %v5257
          %v5259 = vld [vmem:[%s699 + $0xa8] sm:$0xf]
          %v5260 = vsel %vm701, %v5086, %v5259
          %5261 = vst [vmem:[%s699 + $0xa8] sm:$0xf] %v5260
          %5262 = vst.msk [vmem:[%s699 + $0xac] sm:$0xf] %vm223, %v5095
          %v5263 = vld [vmem:[%s699 + $0xb0] sm:$0x1]
          %v5264 = vsel %vm234, %v5096, %v5263
          %5265 = vst [vmem:[%s699 + $0xb0] sm:$0x1] %v5264
          %v5266 = vld [vmem:[%s699 + $0xb4] sm:$0xf]
          %v5267 = vsel %vm701, %v5103, %v5266
          %5268 = vst [vmem:[%s699 + $0xb4] sm:$0xf] %v5267
          %5269 = vst.msk [vmem:[%s699 + $0xb8] sm:$0xf] %vm223, %v5112
          %v5270 = vld [vmem:[%s699 + $0xbc] sm:$0x1]
          %v5271 = vsel %vm234, %v5113, %v5270
          %5272 = vst [vmem:[%s699 + $0xbc] sm:$0x1] %v5271
        $region45: #{inductive_neck_forward.1} parent=39 // loop_footer
          %s819 = sadd.s32 1, %s815
        $region46: #{inductive_neck_forward.1} parent=39 // loop_footer_branch
          %814 = sbr.rel target = $region42
        $region47: #{inductive_neck_forward.1} parent=39 // loop_exit
          _
        %v5273 = vld [vmem:[%s699] sm:$0xf]
        %v5274 = vld [vmem:[%s699 + $0x4] sm:$0xf]
        %v5275 = vld [vmem:[%s699 + $0x8] sm:$0x1]
        %v5276 = vld [vmem:[%s699 + $0xc] sm:$0xf]
        %v5277 = vld [vmem:[%s699 + $0x10] sm:$0xf]
        %v5278 = vld [vmem:[%s699 + $0x14] sm:$0x1]
        %v5279 = vld [vmem:[%s699 + $0x18] sm:$0xf]
        %v5280 = vld [vmem:[%s699 + $0x1c] sm:$0xf]
        %v5281 = vld [vmem:[%s699 + $0x20] sm:$0x1]
        %v5282 = vld [vmem:[%s699 + $0x24] sm:$0xf]
        %v5283 = vld [vmem:[%s699 + $0x28] sm:$0xf]
        %v5284 = vld [vmem:[%s699 + $0x2c] sm:$0x1]
        %v5285 = vld [vmem:[%s699 + $0x30] sm:$0xf]
        %v5286 = vld [vmem:[%s699 + $0x34] sm:$0xf]
        %v5287 = vld [vmem:[%s699 + $0x38] sm:$0x1]
        %v5288 = vld [vmem:[%s699 + $0x3c] sm:$0xf]
        %v5289 = vld [vmem:[%s699 + $0x40] sm:$0xf]
        %v5290 = vld [vmem:[%s699 + $0x44] sm:$0x1]
        %v5291 = vld [vmem:[%s699 + $0x48] sm:$0xf]
        %v5292 = vld [vmem:[%s699 + $0x4c] sm:$0xf]
        %v5293 = vld [vmem:[%s699 + $0x50] sm:$0x1]
        %v5294 = vld [vmem:[%s699 + $0x54] sm:$0xf]
        %v5295 = vld [vmem:[%s699 + $0x58] sm:$0xf]
        %v5296 = vld [vmem:[%s699 + $0x5c] sm:$0x1]
        %v5297 = vld [vmem:[%s699 + $0x60] sm:$0xf]
        %v5298 = vld [vmem:[%s699 + $0x64] sm:$0xf]
        %v5299 = vld [vmem:[%s699 + $0x68] sm:$0x1]
        %v5300 = vld [vmem:[%s699 + $0x6c] sm:$0xf]
        %v5301 = vld [vmem:[%s699 + $0x70] sm:$0xf]
        %v5302 = vld [vmem:[%s699 + $0x74] sm:$0x1]
        %v5303 = vld [vmem:[%s699 + $0x78] sm:$0xf]
        %v5304 = vld [vmem:[%s699 + $0x7c] sm:$0xf]
        %v5305 = vld [vmem:[%s699 + $0x80] sm:$0x1]
        %v5306 = vld [vmem:[%s699 + $0x84] sm:$0xf]
        %v5307 = vld [vmem:[%s699 + $0x88] sm:$0xf]
        %v5308 = vld [vmem:[%s699 + $0x8c] sm:$0x1]
        %v5309 = vld [vmem:[%s699 + $0x90] sm:$0xf]
        %v5310 = vld [vmem:[%s699 + $0x94] sm:$0xf]
        %v5311 = vld [vmem:[%s699 + $0x98] sm:$0x1]
        %v5312 = vld [vmem:[%s699 + $0x9c] sm:$0xf]
        %v5313 = vld [vmem:[%s699 + $0xa0] sm:$0xf]
        %v5314 = vld [vmem:[%s699 + $0xa4] sm:$0x1]
        %v5315 = vld [vmem:[%s699 + $0xa8] sm:$0xf]
        %v5316 = vld [vmem:[%s699 + $0xac] sm:$0xf]
        %v5317 = vld [vmem:[%s699 + $0xb0] sm:$0x1]
        %v5318 = vld [vmem:[%s699 + $0xb4] sm:$0xf]
        %v5319 = vld [vmem:[%s699 + $0xb8] sm:$0xf]
        %v5320 = vld [vmem:[%s699 + $0xbc] sm:$0x1]
        %vm5321 = vsmask.f32 3328
        %vm5322 = vsmask.f32 7440
        %vm5323 = vmor %vm5321, %vm5322
        %v5325 = vshrl.u32 %v5273, 16
        %v5327 = vrot.slane %v5325, 4
        %v5328 = vshll.u32 %v5273, 16
        %v5330 = vrot.slane %v5328, 5
        %v5331 = vor.u32 %v5327, %v5330
        %v5332 = vrot.slane %v5331, 4
        %v5334 = vshll.u32 %v5274, 16
        %v5336 = vrot.slane %v5334, 5
        %v5337 = vsel %vm5323, %v5332, %v5336
        %v5338 = vshrl.u32 %v5274, 16
        %v5340 = vrot.slane %v5338, 4
        %v5341 = vor.u32 %v5340, %v5336
        %v5342 = vrot.slane %v5341, 4
        %v5344 = vshll.u32 %v5275, 16
        %v5346 = vrot.slane %v5344, 5
        %v5347 = vsel %vm5323, %v5342, %v5346
        %v5349 = vshrl.u32 %v5276, 16
        %v5351 = vrot.slane %v5349, 4
        %v5352 = vshll.u32 %v5276, 16
        %v5354 = vrot.slane %v5352, 5
        %v5355 = vor.u32 %v5351, %v5354
        %v5356 = vrot.slane %v5355, 4
        %v5358 = vshll.u32 %v5277, 16
        %v5360 = vrot.slane %v5358, 5
        %v5361 = vsel %vm5323, %v5356, %v5360
        %v5362 = vshrl.u32 %v5277, 16
        %v5364 = vrot.slane %v5362, 4
        %v5365 = vor.u32 %v5364, %v5360
        %v5366 = vrot.slane %v5365, 4
        %v5368 = vshll.u32 %v5278, 16
        %v5370 = vrot.slane %v5368, 5
        %v5371 = vsel %vm5323, %v5366, %v5370
        %v5373 = vshrl.u32 %v5279, 16
        %v5375 = vrot.slane %v5373, 4
        %v5376 = vshll.u32 %v5279, 16
        %v5378 = vrot.slane %v5376, 5
        %v5379 = vor.u32 %v5375, %v5378
        %v5380 = vrot.slane %v5379, 4
        %v5382 = vshll.u32 %v5280, 16
        %v5384 = vrot.slane %v5382, 5
        %v5385 = vsel %vm5323, %v5380, %v5384
        %v5386 = vshrl.u32 %v5280, 16
        %v5388 = vrot.slane %v5386, 4
        %v5389 = vor.u32 %v5388, %v5384
        %v5390 = vrot.slane %v5389, 4
        %v5392 = vshll.u32 %v5281, 16
        %v5394 = vrot.slane %v5392, 5
        %v5395 = vsel %vm5323, %v5390, %v5394
        %v5397 = vshrl.u32 %v5282, 16
        %v5399 = vrot.slane %v5397, 4
        %v5400 = vshll.u32 %v5282, 16
        %v5402 = vrot.slane %v5400, 5
        %v5403 = vor.u32 %v5399, %v5402
        %v5404 = vrot.slane %v5403, 4
        %v5406 = vshll.u32 %v5283, 16
        %v5408 = vrot.slane %v5406, 5
        %v5409 = vsel %vm5323, %v5404, %v5408
        %v5410 = vshrl.u32 %v5283, 16
        %v5412 = vrot.slane %v5410, 4
        %v5413 = vor.u32 %v5412, %v5408
        %v5414 = vrot.slane %v5413, 4
        %v5416 = vshll.u32 %v5284, 16
        %v5418 = vrot.slane %v5416, 5
        %v5419 = vsel %vm5323, %v5414, %v5418
        %v5421 = vshrl.u32 %v5285, 16
        %v5423 = vrot.slane %v5421, 4
        %v5424 = vshll.u32 %v5285, 16
        %v5426 = vrot.slane %v5424, 5
        %v5427 = vor.u32 %v5423, %v5426
        %v5428 = vrot.slane %v5427, 4
        %v5430 = vshll.u32 %v5286, 16
        %v5432 = vrot.slane %v5430, 5
        %v5433 = vsel %vm5323, %v5428, %v5432
        %v5434 = vshrl.u32 %v5286, 16
        %v5436 = vrot.slane %v5434, 4
        %v5437 = vor.u32 %v5436, %v5432
        %v5438 = vrot.slane %v5437, 4
        %v5440 = vshll.u32 %v5287, 16
        %v5442 = vrot.slane %v5440, 5
        %v5443 = vsel %vm5323, %v5438, %v5442
        %v5445 = vshrl.u32 %v5288, 16
        %v5447 = vrot.slane %v5445, 4
        %v5448 = vshll.u32 %v5288, 16
        %v5450 = vrot.slane %v5448, 5
        %v5451 = vor.u32 %v5447, %v5450
        %v5452 = vrot.slane %v5451, 4
        %v5454 = vshll.u32 %v5289, 16
        %v5456 = vrot.slane %v5454, 5
        %v5457 = vsel %vm5323, %v5452, %v5456
        %v5458 = vshrl.u32 %v5289, 16
        %v5460 = vrot.slane %v5458, 4
        %v5461 = vor.u32 %v5460, %v5456
        %v5462 = vrot.slane %v5461, 4
        %v5464 = vshll.u32 %v5290, 16
        %v5466 = vrot.slane %v5464, 5
        %v5467 = vsel %vm5323, %v5462, %v5466
        %v5469 = vshrl.u32 %v5291, 16
        %v5471 = vrot.slane %v5469, 4
        %v5472 = vshll.u32 %v5291, 16
        %v5474 = vrot.slane %v5472, 5
        %v5475 = vor.u32 %v5471, %v5474
        %v5476 = vrot.slane %v5475, 4
        %v5478 = vshll.u32 %v5292, 16
        %v5480 = vrot.slane %v5478, 5
        %v5481 = vsel %vm5323, %v5476, %v5480
        %v5482 = vshrl.u32 %v5292, 16
        %v5484 = vrot.slane %v5482, 4
        %v5485 = vor.u32 %v5484, %v5480
        %v5486 = vrot.slane %v5485, 4
        %v5488 = vshll.u32 %v5293, 16
        %v5490 = vrot.slane %v5488, 5
        %v5491 = vsel %vm5323, %v5486, %v5490
        %v5493 = vshrl.u32 %v5294, 16
        %v5495 = vrot.slane %v5493, 4
        %v5496 = vshll.u32 %v5294, 16
        %v5498 = vrot.slane %v5496, 5
        %v5499 = vor.u32 %v5495, %v5498
        %v5500 = vrot.slane %v5499, 4
        %v5502 = vshll.u32 %v5295, 16
        %v5504 = vrot.slane %v5502, 5
        %v5505 = vsel %vm5323, %v5500, %v5504
        %v5506 = vshrl.u32 %v5295, 16
        %v5508 = vrot.slane %v5506, 4
        %v5509 = vor.u32 %v5508, %v5504
        %v5510 = vrot.slane %v5509, 4
        %v5512 = vshll.u32 %v5296, 16
        %v5514 = vrot.slane %v5512, 5
        %v5515 = vsel %vm5323, %v5510, %v5514
        %v5517 = vshrl.u32 %v5297, 16
        %v5519 = vrot.slane %v5517, 4
        %v5520 = vshll.u32 %v5297, 16
        %v5522 = vrot.slane %v5520, 5
        %v5523 = vor.u32 %v5519, %v5522
        %v5524 = vrot.slane %v5523, 4
        %v5526 = vshll.u32 %v5298, 16
        %v5528 = vrot.slane %v5526, 5
        %v5529 = vsel %vm5323, %v5524, %v5528
        %v5530 = vshrl.u32 %v5298, 16
        %v5532 = vrot.slane %v5530, 4
        %v5533 = vor.u32 %v5532, %v5528
        %v5534 = vrot.slane %v5533, 4
        %v5536 = vshll.u32 %v5299, 16
        %v5538 = vrot.slane %v5536, 5
        %v5539 = vsel %vm5323, %v5534, %v5538
        %v5541 = vshrl.u32 %v5300, 16
        %v5543 = vrot.slane %v5541, 4
        %v5544 = vshll.u32 %v5300, 16
        %v5546 = vrot.slane %v5544, 5
        %v5547 = vor.u32 %v5543, %v5546
        %v5548 = vrot.slane %v5547, 4
        %v5550 = vshll.u32 %v5301, 16
        %v5552 = vrot.slane %v5550, 5
        %v5553 = vsel %vm5323, %v5548, %v5552
        %v5554 = vshrl.u32 %v5301, 16
        %v5556 = vrot.slane %v5554, 4
        %v5557 = vor.u32 %v5556, %v5552
        %v5558 = vrot.slane %v5557, 4
        %v5560 = vshll.u32 %v5302, 16
        %v5562 = vrot.slane %v5560, 5
        %v5563 = vsel %vm5323, %v5558, %v5562
        %v5565 = vshrl.u32 %v5303, 16
        %v5567 = vrot.slane %v5565, 4
        %v5568 = vshll.u32 %v5303, 16
        %v5570 = vrot.slane %v5568, 5
        %v5571 = vor.u32 %v5567, %v5570
        %v5572 = vrot.slane %v5571, 4
        %v5574 = vshll.u32 %v5304, 16
        %v5576 = vrot.slane %v5574, 5
        %v5577 = vsel %vm5323, %v5572, %v5576
        %v5578 = vshrl.u32 %v5304, 16
        %v5580 = vrot.slane %v5578, 4
        %v5581 = vor.u32 %v5580, %v5576
        %v5582 = vrot.slane %v5581, 4
        %v5584 = vshll.u32 %v5305, 16
        %v5586 = vrot.slane %v5584, 5
        %v5587 = vsel %vm5323, %v5582, %v5586
        %v5589 = vshrl.u32 %v5306, 16
        %v5591 = vrot.slane %v5589, 4
        %v5592 = vshll.u32 %v5306, 16
        %v5594 = vrot.slane %v5592, 5
        %v5595 = vor.u32 %v5591, %v5594
        %v5596 = vrot.slane %v5595, 4
        %v5598 = vshll.u32 %v5307, 16
        %v5600 = vrot.slane %v5598, 5
        %v5601 = vsel %vm5323, %v5596, %v5600
        %v5602 = vshrl.u32 %v5307, 16
        %v5604 = vrot.slane %v5602, 4
        %v5605 = vor.u32 %v5604, %v5600
        %v5606 = vrot.slane %v5605, 4
        %v5608 = vshll.u32 %v5308, 16
        %v5610 = vrot.slane %v5608, 5
        %v5611 = vsel %vm5323, %v5606, %v5610
        %v5613 = vshrl.u32 %v5309, 16
        %v5615 = vrot.slane %v5613, 4
        %v5616 = vshll.u32 %v5309, 16
        %v5618 = vrot.slane %v5616, 5
        %v5619 = vor.u32 %v5615, %v5618
        %v5620 = vrot.slane %v5619, 4
        %v5622 = vshll.u32 %v5310, 16
        %v5624 = vrot.slane %v5622, 5
        %v5625 = vsel %vm5323, %v5620, %v5624
        %v5626 = vshrl.u32 %v5310, 16
        %v5628 = vrot.slane %v5626, 4
        %v5629 = vor.u32 %v5628, %v5624
        %v5630 = vrot.slane %v5629, 4
        %v5632 = vshll.u32 %v5311, 16
        %v5634 = vrot.slane %v5632, 5
        %v5635 = vsel %vm5323, %v5630, %v5634
        %v5637 = vshrl.u32 %v5312, 16
        %v5639 = vrot.slane %v5637, 4
        %v5640 = vshll.u32 %v5312, 16
        %v5642 = vrot.slane %v5640, 5
        %v5643 = vor.u32 %v5639, %v5642
        %v5644 = vrot.slane %v5643, 4
        %v5646 = vshll.u32 %v5313, 16
        %v5648 = vrot.slane %v5646, 5
        %v5649 = vsel %vm5323, %v5644, %v5648
        %v5650 = vshrl.u32 %v5313, 16
        %v5652 = vrot.slane %v5650, 4
        %v5653 = vor.u32 %v5652, %v5648
        %v5654 = vrot.slane %v5653, 4
        %v5656 = vshll.u32 %v5314, 16
        %v5658 = vrot.slane %v5656, 5
        %v5659 = vsel %vm5323, %v5654, %v5658
        %v5661 = vshrl.u32 %v5315, 16
        %v5663 = vrot.slane %v5661, 4
        %v5664 = vshll.u32 %v5315, 16
        %v5666 = vrot.slane %v5664, 5
        %v5667 = vor.u32 %v5663, %v5666
        %v5668 = vrot.slane %v5667, 4
        %v5670 = vshll.u32 %v5316, 16
        %v5672 = vrot.slane %v5670, 5
        %v5673 = vsel %vm5323, %v5668, %v5672
        %v5674 = vshrl.u32 %v5316, 16
        %v5676 = vrot.slane %v5674, 4
        %v5677 = vor.u32 %v5676, %v5672
        %v5678 = vrot.slane %v5677, 4
        %v5680 = vshll.u32 %v5317, 16
        %v5682 = vrot.slane %v5680, 5
        %v5683 = vsel %vm5323, %v5678, %v5682
        %v5685 = vshrl.u32 %v5318, 16
        %v5687 = vrot.slane %v5685, 4
        %v5688 = vshll.u32 %v5318, 16
        %v5690 = vrot.slane %v5688, 5
        %v5691 = vor.u32 %v5687, %v5690
        %v5692 = vrot.slane %v5691, 4
        %v5694 = vshll.u32 %v5319, 16
        %v5696 = vrot.slane %v5694, 5
        %v5697 = vsel %vm5323, %v5692, %v5696
        %v5698 = vshrl.u32 %v5319, 16
        %v5700 = vrot.slane %v5698, 4
        %v5701 = vor.u32 %v5700, %v5696
        %v5702 = vrot.slane %v5701, 4
        %v5704 = vshll.u32 %v5320, 16
        %v5706 = vrot.slane %v5704, 5
        %v5707 = vsel %vm5323, %v5702, %v5706
        %v5740 = vunpack.c.l.bf16 %v5337
        %v5741 = vunpack.c.l.bf16 %v5347
        %v5742 = vunpack.c.l.bf16 %v5361
        %v5743 = vunpack.c.l.bf16 %v5371
        %v5744 = vunpack.c.l.bf16 %v5385
        %v5745 = vunpack.c.l.bf16 %v5395
        %v5746 = vunpack.c.l.bf16 %v5409
        %v5747 = vunpack.c.l.bf16 %v5419
        %v5748 = vunpack.c.l.bf16 %v5433
        %v5749 = vunpack.c.l.bf16 %v5443
        %v5750 = vunpack.c.l.bf16 %v5457
        %v5751 = vunpack.c.l.bf16 %v5467
        %v5752 = vunpack.c.l.bf16 %v5481
        %v5753 = vunpack.c.l.bf16 %v5491
        %v5754 = vunpack.c.l.bf16 %v5505
        %v5755 = vunpack.c.l.bf16 %v5515
        %v5756 = vunpack.c.l.bf16 %v5529
        %v5757 = vunpack.c.l.bf16 %v5539
        %v5758 = vunpack.c.l.bf16 %v5553
        %v5759 = vunpack.c.l.bf16 %v5563
        %v5760 = vunpack.c.l.bf16 %v5577
        %v5761 = vunpack.c.l.bf16 %v5587
        %v5762 = vunpack.c.l.bf16 %v5601
        %v5763 = vunpack.c.l.bf16 %v5611
        %v5764 = vunpack.c.l.bf16 %v5625
        %v5765 = vunpack.c.l.bf16 %v5635
        %v5766 = vunpack.c.l.bf16 %v5649
        %v5767 = vunpack.c.l.bf16 %v5659
        %v5768 = vunpack.c.l.bf16 %v5673
        %v5769 = vunpack.c.l.bf16 %v5683
        %v5770 = vunpack.c.l.bf16 %v5697
        %v5771 = vunpack.c.l.bf16 %v5707
        %vm5772 = vcmask 31744
        %v5773 = vsel %vm5772, %v5740, 0.0
        %v5774 = vsel %vm5772, %v5741, 0.0
        %v5775 = vadd.f32 %v5773, %v5774
        %v5776 = vsel %vm5772, %v5742, 0.0
        %v5777 = vadd.f32 %v5775, %v5776
        %v5778 = vsel %vm5772, %v5743, 0.0
        %v5779 = vadd.f32 %v5777, %v5778
        %v5780 = vsel %vm5772, %v5744, 0.0
        %v5781 = vadd.f32 %v5779, %v5780
        %v5782 = vsel %vm5772, %v5745, 0.0
        %v5783 = vadd.f32 %v5781, %v5782
        %v5784 = vsel %vm5772, %v5746, 0.0
        %v5785 = vadd.f32 %v5783, %v5784
        %v5786 = vsel %vm5772, %v5747, 0.0
        %v5787 = vadd.f32 %v5785, %v5786
        %v5788 = vsel %vm5772, %v5748, 0.0
        %v5789 = vadd.f32 %v5787, %v5788
        %v5790 = vsel %vm5772, %v5749, 0.0
        %v5791 = vadd.f32 %v5789, %v5790
        %v5792 = vsel %vm5772, %v5750, 0.0
        %v5793 = vadd.f32 %v5791, %v5792
        %v5794 = vsel %vm5772, %v5751, 0.0
        %v5795 = vadd.f32 %v5793, %v5794
        %v5796 = vsel %vm5772, %v5752, 0.0
        %v5797 = vadd.f32 %v5795, %v5796
        %v5798 = vsel %vm5772, %v5753, 0.0
        %v5799 = vadd.f32 %v5797, %v5798
        %v5800 = vsel %vm5772, %v5754, 0.0
        %v5801 = vadd.f32 %v5799, %v5800
        %v5802 = vsel %vm5772, %v5755, 0.0
        %v5803 = vadd.f32 %v5801, %v5802
        %v5804 = vsel %vm5772, %v5756, 0.0
        %v5805 = vadd.f32 %v5803, %v5804
        %v5806 = vsel %vm5772, %v5757, 0.0
        %v5807 = vadd.f32 %v5805, %v5806
        %v5808 = vsel %vm5772, %v5758, 0.0
        %v5809 = vadd.f32 %v5807, %v5808
        %v5810 = vsel %vm5772, %v5759, 0.0
        %v5811 = vadd.f32 %v5809, %v5810
        %v5812 = vsel %vm5772, %v5760, 0.0
        %v5813 = vadd.f32 %v5811, %v5812
        %v5814 = vsel %vm5772, %v5761, 0.0
        %v5815 = vadd.f32 %v5813, %v5814
        %v5816 = vsel %vm5772, %v5762, 0.0
        %v5817 = vadd.f32 %v5815, %v5816
        %v5818 = vsel %vm5772, %v5763, 0.0
        %v5819 = vadd.f32 %v5817, %v5818
        %v5820 = vsel %vm5772, %v5764, 0.0
        %v5821 = vadd.f32 %v5819, %v5820
        %v5822 = vsel %vm5772, %v5765, 0.0
        %v5823 = vadd.f32 %v5821, %v5822
        %v5824 = vsel %vm5772, %v5766, 0.0
        %v5825 = vadd.f32 %v5823, %v5824
        %v5826 = vsel %vm5772, %v5767, 0.0
        %v5827 = vadd.f32 %v5825, %v5826
        %v5828 = vsel %vm5772, %v5768, 0.0
        %v5829 = vadd.f32 %v5827, %v5828
        %v5830 = vsel %vm5772, %v5769, 0.0
        %v5831 = vadd.f32 %v5829, %v5830
        %v5832 = vsel %vm5772, %v5770, 0.0
        %v5833 = vadd.f32 %v5831, %v5832
        %v5834 = vsel %vm5772, %v5771, 0.0
        %v5835 = vadd.f32 %v5833, %v5834
        %v5836 = vrot.slane %v5835, 4
        %v5837 = vadd.f32 %v5835, %v5836
        %v5838 = vrot.slane %v5837, 2
        %v5839 = vadd.f32 %v5837, %v5838
        %v5840 = vrot.slane %v5839, 1
        %v5841 = vadd.f32 %v5839, %v5840
        %v5842 = vrcp.pop 256.0
        %v5843 = vmul.f32 256.0, %v5842
        %v5844 = vsub.f32 1.0, %v5843
        %v5845 = vmul.f32 %v5842, %v5844
        %v5846 = vadd.f32 %v5842, %v5845
        %vm5847 = vweird.f32 %v5842
        %v5848 = vsel %vm5847, %v5842, %v5846
        %v5849 = vmul.f32 %v5841, %v5848
        %v5850 = vld [vmem:[%s3] sm:$0xf]
        %v5851 = vld [vmem:[%s4] sm:$0x1]
        %v5853 = vsel %vm5772, %v5849, 0
        %vm5855 = vcmask 1043456
        %v5857 = vsel %vm5855, %v5850, 0
        %5859 = vmatpush.msra.mxu0 0.0
        %5860 = vmatpush.msra.mxu0 0.0
        %5861 = vmatpush.msra.mxu0 0.0
        %5862 = vmatpush.msra.mxu0 0.0
        %5863 = vmatpush.msra.mxu0 0.0
        %5864 = vmatpush.msra.mxu0 0.0
        %5865 = vmatpush.msra.mxu0 0.0
        %5866 = vmatpush.msra.mxu0 0.0
        %5867 = vmatpush.msra.mxu0 0.0
        %5868 = vmatpush.msra.mxu0 0.0
        %5869 = vmatpush.msra.mxu0 0.0
        %5870 = vmatpush.msra.mxu0 0.0
        %5871 = vmatpush.msra.mxu0 0.0
        %5872 = vmatpush.msra.mxu0 0.0
        %5873 = vmatpush.msra.mxu0 0.0
        %5874 = vmatpush.msra.mxu0 %v5857
        %5875 = vmatmul.f32.gmra.mxu0 %v5853
        %v5876 = vpop.f32.mrf.mxu0
        %v5877 = vadd.f32 %v5851, %v5876
        %5878 = vdwg.mxu0
        %5879 = vst [vmem:[%s216] sm:$0x1] %v5877
        %s5880 = sand.u32 %s137, 1
        %s5881 = scalar_lea.sflag [#allocation4], %s5880
        %s5882 = sand.u32 %s137, 1
        %s5883 = scalar_lea.vmem [#allocation3], %s5882
        // Predicated region
        $region48: #{inductive_neck_forward.1} parent=39 // pred_check
          %p5884 = pneg %p147
        $region49: #{inductive_neck_forward.1} parent=39 // pred_check_branch
          %5886 = sbr.rel (%p5884) target = $region51
        $region50: #{inductive_neck_forward.1} parent=39 // pred_region
          %5888 = vsyncadd %s5881, 0
          %s5889 = scalar_lea.hbm %s5, %s19
          %s5891 = sshll.u32 %s5883, 4
          %s5892 = int_to_ptr.vmem [resolvable:$true] %s5891
          %s5893 = sshll.u32 %s5889, 4
          %s5894 = int_to_ptr.hbm [resolvable:$true] %s5893
          %5896 = dma.vmem_to_hbm [thread:$0]  %s5892, 16, %s5894, %s5881
        $region51: #{inductive_neck_forward.1} parent=39 // pred_fallthru
          _
      $region40: #{inductive_neck_forward.1} parent=5 // pred_fallthru
        _
      %p5897 = scmp.le.s32.totalorder 2, %s14
      // Predicated region
      $region52: #{inductive_neck_forward.1} parent=5 // pred_check
        %p5898 = pneg %p5897
      $region53: #{inductive_neck_forward.1} parent=5 // pred_check_branch
        %5900 = sbr.rel (%p5898) target = $region55
      $region54: #{inductive_neck_forward.1} parent=5 // pred_region
        %s5901 = ssub.s32 %s14, 2
        // Predicated region
        $region56: #{inductive_neck_forward.1} parent=54 // pred_check
          %p5902 = pneg %p153
        $region57: #{inductive_neck_forward.1} parent=54 // pred_check_branch
          %5904 = sbr.rel (%p5902) target = $region59
        $region58: #{inductive_neck_forward.1} parent=54 // pred_region
          %s5905 = sand.u32 %s138, 1
          %s5906 = scalar_lea.sflag [#allocation4], %s5905
          %s5907 = sand.u32 %s138, 1
          %s5908 = scalar_lea.vmem [#allocation3], %s5907
          %5910 = dma.done %s5906, 16
        $region59: #{inductive_neck_forward.1} parent=54 // pred_fallthru
          _
      $region55: #{inductive_neck_forward.1} parent=5 // pred_fallthru
        _
    $region6: #{inductive_neck_forward.1} parent=1 // loop_footer
      %s18 = sadd.s32 1, %s14
    $region7: #{inductive_neck_forward.1} parent=1 // loop_footer_branch
      %13 = sbr.rel target = $region3
    $region8: #{inductive_neck_forward.1} parent=1 // loop_exit
      _
    %5911 = vsyncpa [#allocation4], 1
    %s5912 = scalar_lea.sflag [#allocation4], 1
    %5913 = vsyncpa %s5912, 1

</llo_original>
